<compile_context>
chip_gen: v6e
topology: v6e:2x2x1
jax: 0.10.0
libtpu: 0.0.40
codegen_flags: <defaults>
</compile_context>

<pallas_src>
import jax
import jax.numpy as jnp
from jax import lax
from jax.experimental import pallas as pl
from jax.experimental.pallas import tpu as pltpu


# ----------------------------------------------------------------------------
# Fused single-shot matmul kernel:
#   out = relu_mask ? relu((A @ B) * scale + bias [+ residual])
#                   :      (A @ B) * scale + bias [+ residual]
# A, B are bf16; accumulation and epilogue are f32.  No grid: the whole
# problem lives in VMEM, so there is no per-step overhead and no scratch.
# ----------------------------------------------------------------------------
def _make_fused_matmul_kernel(has_residual: bool):
    def kernel(*refs):
        if has_residual:
            a_ref, b_ref, s_ref, bi_ref, m_ref, r_ref, o_ref = refs
        else:
            a_ref, b_ref, s_ref, bi_ref, m_ref, o_ref = refs

        acc = jnp.dot(a_ref[...], b_ref[...],
                      preferred_element_type=jnp.float32)
        out = acc * s_ref[...] + bi_ref[...]
        if has_residual:
            out = out + r_ref[...]
        # Per-column ReLU selection as an arithmetic blend (mask is 0/1 f32).
        m = m_ref[...]
        out = m * jnp.maximum(out, 0.0) + (1.0 - m) * out
        o_ref[...] = out.astype(o_ref.dtype)

    return kernel


def matmul_fused(a, b, scale, bias, relu_mask, residual=None):
    """out[M,N] = relu_mask?((a @ b) * scale + bias [+ residual]); f32 out."""
    M, K = a.shape
    K2, N = b.shape
    assert K == K2

    scale2 = scale.reshape(1, N).astype(jnp.float32)
    bias2 = bias.reshape(1, N).astype(jnp.float32)
    mask2 = relu_mask.reshape(1, N).astype(jnp.float32)

    has_res = residual is not None
    args = [a.astype(jnp.bfloat16), b.astype(jnp.bfloat16),
            scale2, bias2, mask2]
    if has_res:
        args.append(residual.astype(jnp.float32))

    vmem = pl.BlockSpec(memory_space=pltpu.MemorySpace.VMEM)
    return pl.pallas_call(
        _make_fused_matmul_kernel(has_res),
        out_shape=jax.ShapeDtypeStruct((M, N), jnp.float32),
        in_specs=[vmem] * len(args),
        out_specs=vmem,
    )(*args)


# ----------------------------------------------------------------------------
# Conv2d (NHWC) = bf16 im2col (glue) + fused Pallas matmul.
# ----------------------------------------------------------------------------
def conv2d_bn_act(x, w, scale, bias, relu_mask, stride=1, pad=1, residual=None):
    """x: (N,H,W,Cin); w: (KH,KW,Cin,Cout).  Returns (N,Ho,Wo,Cout) f32."""
    Nb, H, W, Cin = x.shape
    KH, KW, _, Cout = w.shape

    xb = x.astype(jnp.bfloat16)
    if pad > 0:
        xb = jnp.pad(xb, ((0, 0), (pad, pad), (pad, pad), (0, 0)))
    Ho = (H + 2 * pad - KH) // stride + 1
    Wo = (W + 2 * pad - KW) // stride + 1

    patches = []
    for kh in range(KH):
        for kw in range(KW):
            patches.append(
                xb[:, kh:kh + (Ho - 1) * stride + 1:stride,
                       kw:kw + (Wo - 1) * stride + 1:stride, :])
    A = jnp.concatenate(patches, axis=-1).reshape(Nb * Ho * Wo, KH * KW * Cin)
    B = w.reshape(KH * KW * Cin, Cout).astype(jnp.bfloat16)

    res2 = None
    if residual is not None:
        res2 = residual.reshape(Nb * Ho * Wo, Cout)

    out = matmul_fused(A, B, scale, bias, relu_mask, residual=res2)
    return out.reshape(Nb, Ho, Wo, Cout)


# ----------------------------------------------------------------------------
# Parameter construction (inference BatchNorm folded into scale/bias).
# ----------------------------------------------------------------------------
def _kaiming_conv(key, kh, kw, cin, cout):
    fan_out = cout * kh * kw
    std = (2.0 / fan_out) ** 0.5
    return jax.random.normal(key, (kh, kw, cin, cout), jnp.float32) * std


def _bn_fold(key, c, eps=1e-5):
    """Random (deterministic) BN stats folded to per-channel scale/bias."""
    k1, k2, k3, k4 = jax.random.split(key, 4)
    gamma = 1.0 + 0.1 * jax.random.normal(k1, (c,), jnp.float32)
    beta = 0.1 * jax.random.normal(k2, (c,), jnp.float32)
    mean = 0.1 * jax.random.normal(k3, (c,), jnp.float32)
    var = 1.0 + 0.5 * jax.random.uniform(k4, (c,), jnp.float32)
    scale = gamma / jnp.sqrt(var + eps)
    bias = beta - mean * scale
    return scale, bias


def make_basic_block_params(key, in_planes, planes, op_lst=(0, 0), stride=1):
    del op_lst  # see TODO(synk) at top: MixedOp treated as plain conv.
    k1, k2, k3, kb1, kb2, kb3, kcb = jax.random.split(key, 7)
    p = {"stride": stride, "planes": planes}
    p["w1"] = _kaiming_conv(k1, 3, 3, in_planes, planes)
    p["s1"], p["b1"] = _bn_fold(kb1, planes)
    p["w2"] = _kaiming_conv(k2, 3, 3, planes, planes)
    p["s2"], p["b2"] = _bn_fold(kb2, planes)

    has_sc = (stride != 1) or (in_planes != planes)  # BasicBlock.expansion == 1
    p["has_shortcut"] = has_sc
    if has_sc:
        # conv1x1(bias=True) + BN; conv bias folded into the BN bias.
        p["sc_w"] = _kaiming_conv(k3, 1, 1, in_planes, planes)
        sc_conv_bias = 0.1 * jax.random.normal(kcb, (planes,), jnp.float32)
        sc_s, sc_b = _bn_fold(kb3, planes)
        p["sc_s"] = sc_s
        p["sc_b"] = sc_b + sc_conv_bias * sc_s

        # Shortcut fusion: embed the 1x1 conv at the centre tap of a zero 3x3
        # kernel (pad=1 centre tap samples x[ho*s, wo*s] == 1x1/pad=0 conv) and
        # concatenate along Cout, so conv1 and the shortcut share one im2col
        # read and one matmul.  ReLU applies only to the conv1 half.
        sc_embedded = jnp.zeros((3, 3, in_planes, planes), jnp.float32)
        sc_embedded = sc_embedded.at[1, 1].set(p["sc_w"][0, 0])
        p["w1c"] = jnp.concatenate([p["w1"], sc_embedded], axis=-1)
        p["s1c"] = jnp.concatenate([p["s1"], p["sc_s"]])
        p["b1c"] = jnp.concatenate([p["b1"], p["sc_b"]])
        p["relu1c"] = jnp.concatenate(
            [jnp.ones((planes,), jnp.float32),
             jnp.zeros((planes,), jnp.float32)])
    else:
        p["w1c"], p["s1c"], p["b1c"] = p["w1"], p["s1"], p["b1"]
        p["relu1c"] = jnp.ones((planes,), jnp.float32)
    p["relu2"] = jnp.ones((planes,), jnp.float32)
    return p


# ----------------------------------------------------------------------------
# Forward pass (mirrors BasicBlock.forward, inference semantics).
# ----------------------------------------------------------------------------
def basic_block_forward(p, x):
    """x: (N,H,W,Cin) f32 NHWC -> (N,Ho,Wo,planes) f32 NHWC."""
    planes = p["planes"]
    # conv1 (+ fused shortcut conv) -> bn -> relu(mask), one pallas_call.
    y = conv2d_bn_act(x, p["w1c"], p["s1c"], p["b1c"], p["relu1c"],
                      stride=p["stride"], pad=1)
    if p["has_shortcut"]:
        out1, sc = y[..., :planes], y[..., planes:]
    else:
        out1, sc = y, x
    # conv2 -> bn2 -> (+shortcut) -> relu, fused into one kernel epilogue.
    return conv2d_bn_act(out1, p["w2"], p["s2"], p["b2"], p["relu2"],
                         stride=1, pad=1, residual=sc)


# ----------------------------------------------------------------------------
# Plain-XLA reference (same bf16 matmul inputs, f32 epilogue) for a sanity check.
# ----------------------------------------------------------------------------
def _conv_ref(x, w, stride, pad):
    return lax.conv_general_dilated(
        x.astype(jnp.bfloat16), w.astype(jnp.bfloat16),
        window_strides=(stride, stride),
        padding=((pad, pad), (pad, pad)),
        dimension_numbers=("NHWC", "HWIO", "NHWC"),
        preferred_element_type=jnp.float32)


def basic_block_reference(p, x):
    s = p["stride"]
    if p["has_shortcut"]:
        sc = _conv_ref(x, p["sc_w"], s, 0) * p["sc_s"] + p["sc_b"]
    else:
        sc = x
    out = jnp.maximum(_conv_ref(x, p["w1"], s, 1) * p["s1"] + p["b1"], 0.0)
    out = _conv_ref(out, p["w2"], 1, 1) * p["s2"] + p["b2"] + sc
    return jnp.maximum(out, 0.0)


if __name__ == "__main__":
    root = jax.random.PRNGKey(0)
    kx, kb1, kb2 = jax.random.split(root, 3)

    in_planes, planes = 32, 64
    # NCHW input like the PyTorch module; small CIFAR-ish spatial size.
    x_nchw = jax.random.normal(kx, (2, in_planes, 16, 16), jnp.float32)

    # One downsampling block (stride=2, channel change -> conv1x1+BN shortcut)
    # followed by one identity-shortcut block (stride=1, same planes).
    p1 = make_basic_block_params(kb1, in_planes, planes, op_lst=(0, 0), stride=2)
    p2 = make_basic_block_params(kb2, planes, planes, op_lst=(0, 0), stride=1)

    x = jnp.transpose(x_nchw, (0, 2, 3, 1))  # NCHW -> NHWC

    @jax.jit
    def forward(xin):
        return basic_block_forward(p2, basic_block_forward(p1, xin))

    y = forward(x)
    jax.block_until_ready(y)
    assert y.shape == (2, 8, 8, planes), y.shape

    # Sanity check vs. XLA reference using the same bf16 conv inputs.
    y_ref = basic_block_reference(p2, basic_block_reference(p1, x))
    err = float(jnp.max(jnp.abs(y - y_ref)))
    assert err < 5e-2, f"max abs error {err}"

    print("KERNEL_OK")
</pallas_src>

<mosaic_0001>
module attributes {stable_mosaic.version = 11 : i64} {
  func.func @kernel(%arg0: memref<128x288xbf16, #tpu.memory_space<vmem>>, %arg1: memref<288x128xbf16, #tpu.memory_space<vmem>>, %arg2: memref<1x128xf32, #tpu.memory_space<vmem>>, %arg3: memref<1x128xf32, #tpu.memory_space<vmem>>, %arg4: memref<1x128xf32, #tpu.memory_space<vmem>>, %arg5: memref<128x128xf32, #tpu.memory_space<vmem>>) attributes {dimension_semantics = [], scalar_prefetch = 0 : i64, scratch_operands = 0 : i64, tpu.core_type = #tpu.core_type<tc>} {
    %c0 = arith.constant 0 : index
    %c0_0 = arith.constant 0 : index
    %0 = vector.load %arg0[%c0, %c0_0] : memref<128x288xbf16, #tpu.memory_space<vmem>>, vector<128x288xbf16>
    %c0_1 = arith.constant 0 : index
    %c0_2 = arith.constant 0 : index
    %1 = vector.load %arg1[%c0_1, %c0_2] : memref<288x128xbf16, #tpu.memory_space<vmem>>, vector<288x128xbf16>
    %cst = arith.constant dense<0.000000e+00> : vector<128x128xf32>
    %2 = tpu.matmul %0, %1, %cst {dimension_numbers = #tpu.dot_dimension_numbers<[1], [0], [0], [1], [0, 0, 1, 1], [], []>} : vector<128x288xbf16>, vector<288x128xbf16>, vector<128x128xf32> -> vector<128x128xf32>
    %c0_3 = arith.constant 0 : index
    %c0_4 = arith.constant 0 : index
    %3 = vector.load %arg2[%c0_3, %c0_4] : memref<1x128xf32, #tpu.memory_space<vmem>>, vector<1x128xf32>
    %4 = vector.broadcast %3 : vector<1x128xf32> to vector<128x128xf32>
    %5 = arith.mulf %2, %4 : vector<128x128xf32>
    %c0_5 = arith.constant 0 : index
    %c0_6 = arith.constant 0 : index
    %6 = vector.load %arg3[%c0_5, %c0_6] : memref<1x128xf32, #tpu.memory_space<vmem>>, vector<1x128xf32>
    %7 = vector.broadcast %6 : vector<1x128xf32> to vector<128x128xf32>
    %8 = arith.addf %5, %7 : vector<128x128xf32>
    %c0_7 = arith.constant 0 : index
    %c0_8 = arith.constant 0 : index
    %9 = vector.load %arg4[%c0_7, %c0_8] : memref<1x128xf32, #tpu.memory_space<vmem>>, vector<1x128xf32>
    %cst_9 = arith.constant 0.000000e+00 : f32
    %10 = vector.broadcast %cst_9 : f32 to vector<128x128xf32>
    %11 = arith.maximumf %8, %10 : vector<128x128xf32>
    %12 = vector.broadcast %9 : vector<1x128xf32> to vector<128x128xf32>
    %13 = arith.mulf %12, %11 : vector<128x128xf32>
    %cst_10 = arith.constant 1.000000e+00 : f32
    %14 = vector.broadcast %cst_10 : f32 to vector<1x128xf32>
    %15 = arith.subf %14, %9 : vector<1x128xf32>
    %16 = vector.broadcast %15 : vector<1x128xf32> to vector<128x128xf32>
    %17 = arith.mulf %16, %8 : vector<128x128xf32>
    %18 = arith.addf %13, %17 : vector<128x128xf32>
    %c0_11 = arith.constant 0 : index
    %c0_12 = arith.constant 0 : index
    %19 = vector.load %arg5[%c0_11, %c0_12] : memref<128x128xf32, #tpu.memory_space<vmem>>, vector<128x128xf32>
    tpu.vector_store %arg5[%c0_11, %c0_12], %18 {strides = array<i32>} : memref<128x128xf32, #tpu.memory_space<vmem>>, vector<128x128xf32>,
    return
  }
}

module attributes {stable_mosaic.version = 11 : i64} {
  func.func @kernel(%arg0: memref<128x576xbf16, #tpu.memory_space<vmem>>, %arg1: memref<576x64xbf16, #tpu.memory_space<vmem>>, %arg2: memref<1x64xf32, #tpu.memory_space<vmem>>, %arg3: memref<1x64xf32, #tpu.memory_space<vmem>>, %arg4: memref<1x64xf32, #tpu.memory_space<vmem>>, %arg5: memref<128x64xf32, #tpu.memory_space<vmem>>, %arg6: memref<128x64xf32, #tpu.memory_space<vmem>>) attributes {dimension_semantics = [], scalar_prefetch = 0 : i64, scratch_operands = 0 : i64, tpu.core_type = #tpu.core_type<tc>} {
    %c0 = arith.constant 0 : index
    %c0_0 = arith.constant 0 : index
    %0 = vector.load %arg0[%c0, %c0_0] : memref<128x576xbf16, #tpu.memory_space<vmem>>, vector<128x576xbf16>
    %c0_1 = arith.constant 0 : index
    %c0_2 = arith.constant 0 : index
    %1 = vector.load %arg1[%c0_1, %c0_2] : memref<576x64xbf16, #tpu.memory_space<vmem>>, vector<576x64xbf16>
    %cst = arith.constant dense<0.000000e+00> : vector<128x64xf32>
    %2 = tpu.matmul %0, %1, %cst {dimension_numbers = #tpu.dot_dimension_numbers<[1], [0], [0], [1], [0, 0, 1, 1], [], []>} : vector<128x576xbf16>, vector<576x64xbf16>, vector<128x64xf32> -> vector<128x64xf32>
    %c0_3 = arith.constant 0 : index
    %c0_4 = arith.constant 0 : index
    %3 = vector.load %arg2[%c0_3, %c0_4] : memref<1x64xf32, #tpu.memory_space<vmem>>, vector<1x64xf32>
    %4 = vector.broadcast %3 : vector<1x64xf32> to vector<128x64xf32>
    %5 = arith.mulf %2, %4 : vector<128x64xf32>
    %c0_5 = arith.constant 0 : index
    %c0_6 = arith.constant 0 : index
    %6 = vector.load %arg3[%c0_5, %c0_6] : memref<1x64xf32, #tpu.memory_space<vmem>>, vector<1x64xf32>
    %7 = vector.broadcast %6 : vector<1x64xf32> to vector<128x64xf32>
    %8 = arith.addf %5, %7 : vector<128x64xf32>
    %c0_7 = arith.constant 0 : index
    %c0_8 = arith.constant 0 : index
    %9 = vector.load %arg5[%c0_7, %c0_8] : memref<128x64xf32, #tpu.memory_space<vmem>>, vector<128x64xf32>
    %10 = arith.addf %8, %9 : vector<128x64xf32>
    %c0_9 = arith.constant 0 : index
    %c0_10 = arith.constant 0 : index
    %11 = vector.load %arg4[%c0_9, %c0_10] : memref<1x64xf32, #tpu.memory_space<vmem>>, vector<1x64xf32>
    %cst_11 = arith.constant 0.000000e+00 : f32
    %12 = vector.broadcast %cst_11 : f32 to vector<128x64xf32>
    %13 = arith.maximumf %10, %12 : vector<128x64xf32>
    %14 = vector.broadcast %11 : vector<1x64xf32> to vector<128x64xf32>
    %15 = arith.mulf %14, %13 : vector<128x64xf32>
    %cst_12 = arith.constant 1.000000e+00 : f32
    %16 = vector.broadcast %cst_12 : f32 to vector<1x64xf32>
    %17 = arith.subf %16, %11 : vector<1x64xf32>
    %18 = vector.broadcast %17 : vector<1x64xf32> to vector<128x64xf32>
    %19 = arith.mulf %18, %10 : vector<128x64xf32>
    %20 = arith.addf %15, %19 : vector<128x64xf32>
    %c0_13 = arith.constant 0 : index
    %c0_14 = arith.constant 0 : index
    %21 = vector.load %arg6[%c0_13, %c0_14] : memref<128x64xf32, #tpu.memory_space<vmem>>, vector<128x64xf32>
    tpu.vector_store %arg6[%c0_13, %c0_14], %20 {strides = array<i32>} : memref<128x64xf32, #tpu.memory_space<vmem>>, vector<128x64xf32>,
    return
  }
}

module attributes {stable_mosaic.version = 11 : i64} {
  func.func @kernel(%arg0: memref<128x576xbf16, #tpu.memory_space<vmem>>, %arg1: memref<576x64xbf16, #tpu.memory_space<vmem>>, %arg2: memref<1x64xf32, #tpu.memory_space<vmem>>, %arg3: memref<1x64xf32, #tpu.memory_space<vmem>>, %arg4: memref<1x64xf32, #tpu.memory_space<vmem>>, %arg5: memref<128x64xf32, #tpu.memory_space<vmem>>) attributes {dimension_semantics = [], scalar_prefetch = 0 : i64, scratch_operands = 0 : i64, tpu.core_type = #tpu.core_type<tc>} {
    %c0 = arith.constant 0 : index
    %c0_0 = arith.constant 0 : index
    %0 = vector.load %arg0[%c0, %c0_0] : memref<128x576xbf16, #tpu.memory_space<vmem>>, vector<128x576xbf16>
    %c0_1 = arith.constant 0 : index
    %c0_2 = arith.constant 0 : index
    %1 = vector.load %arg1[%c0_1, %c0_2] : memref<576x64xbf16, #tpu.memory_space<vmem>>, vector<576x64xbf16>
    %cst = arith.constant dense<0.000000e+00> : vector<128x64xf32>
    %2 = tpu.matmul %0, %1, %cst {dimension_numbers = #tpu.dot_dimension_numbers<[1], [0], [0], [1], [0, 0, 1, 1], [], []>} : vector<128x576xbf16>, vector<576x64xbf16>, vector<128x64xf32> -> vector<128x64xf32>
    %c0_3 = arith.constant 0 : index
    %c0_4 = arith.constant 0 : index
    %3 = vector.load %arg2[%c0_3, %c0_4] : memref<1x64xf32, #tpu.memory_space<vmem>>, vector<1x64xf32>
    %4 = vector.broadcast %3 : vector<1x64xf32> to vector<128x64xf32>
    %5 = arith.mulf %2, %4 : vector<128x64xf32>
    %c0_5 = arith.constant 0 : index
    %c0_6 = arith.constant 0 : index
    %6 = vector.load %arg3[%c0_5, %c0_6] : memref<1x64xf32, #tpu.memory_space<vmem>>, vector<1x64xf32>
    %7 = vector.broadcast %6 : vector<1x64xf32> to vector<128x64xf32>
    %8 = arith.addf %5, %7 : vector<128x64xf32>
    %c0_7 = arith.constant 0 : index
    %c0_8 = arith.constant 0 : index
    %9 = vector.load %arg4[%c0_7, %c0_8] : memref<1x64xf32, #tpu.memory_space<vmem>>, vector<1x64xf32>
    %cst_9 = arith.constant 0.000000e+00 : f32
    %10 = vector.broadcast %cst_9 : f32 to vector<128x64xf32>
    %11 = arith.maximumf %8, %10 : vector<128x64xf32>
    %12 = vector.broadcast %9 : vector<1x64xf32> to vector<128x64xf32>
    %13 = arith.mulf %12, %11 : vector<128x64xf32>
    %cst_10 = arith.constant 1.000000e+00 : f32
    %14 = vector.broadcast %cst_10 : f32 to vector<1x64xf32>
    %15 = arith.subf %14, %9 : vector<1x64xf32>
    %16 = vector.broadcast %15 : vector<1x64xf32> to vector<128x64xf32>
    %17 = arith.mulf %16, %8 : vector<128x64xf32>
    %18 = arith.addf %13, %17 : vector<128x64xf32>
    %c0_11 = arith.constant 0 : index
    %c0_12 = arith.constant 0 : index
    %19 = vector.load %arg5[%c0_11, %c0_12] : memref<128x64xf32, #tpu.memory_space<vmem>>, vector<128x64xf32>
    tpu.vector_store %arg5[%c0_11, %c0_12], %18 {strides = array<i32>} : memref<128x64xf32, #tpu.memory_space<vmem>>, vector<128x64xf32>,
    return
  }
}

module attributes {stable_mosaic.version = 11 : i64} {
  func.func @kernel(%arg0: memref<128x576xbf16, #tpu.memory_space<vmem>>, %arg1: memref<576x64xbf16, #tpu.memory_space<vmem>>, %arg2: memref<1x64xf32, #tpu.memory_space<vmem>>, %arg3: memref<1x64xf32, #tpu.memory_space<vmem>>, %arg4: memref<1x64xf32, #tpu.memory_space<vmem>>, %arg5: memref<128x64xf32, #tpu.memory_space<vmem>>, %arg6: memref<128x64xf32, #tpu.memory_space<vmem>>) attributes {dimension_semantics = [], scalar_prefetch = 0 : i64, scratch_operands = 0 : i64, tpu.core_type = #tpu.core_type<tc>} {
    %c0 = arith.constant 0 : index
    %c0_0 = arith.constant 0 : index
    %0 = vector.load %arg0[%c0, %c0_0] : memref<128x576xbf16, #tpu.memory_space<vmem>>, vector<128x576xbf16>
    %c0_1 = arith.constant 0 : index
    %c0_2 = arith.constant 0 : index
    %1 = vector.load %arg1[%c0_1, %c0_2] : memref<576x64xbf16, #tpu.memory_space<vmem>>, vector<576x64xbf16>
    %cst = arith.constant dense<0.000000e+00> : vector<128x64xf32>
    %2 = tpu.matmul %0, %1, %cst {dimension_numbers = #tpu.dot_dimension_numbers<[1], [0], [0], [1], [0, 0, 1, 1], [], []>} : vector<128x576xbf16>, vector<576x64xbf16>, vector<128x64xf32> -> vector<128x64xf32>
    %c0_3 = arith.constant 0 : index
    %c0_4 = arith.constant 0 : index
    %3 = vector.load %arg2[%c0_3, %c0_4] : memref<1x64xf32, #tpu.memory_space<vmem>>, vector<1x64xf32>
    %4 = vector.broadcast %3 : vector<1x64xf32> to vector<128x64xf32>
    %5 = arith.mulf %2, %4 : vector<128x64xf32>
    %c0_5 = arith.constant 0 : index
    %c0_6 = arith.constant 0 : index
    %6 = vector.load %arg3[%c0_5, %c0_6] : memref<1x64xf32, #tpu.memory_space<vmem>>, vector<1x64xf32>
    %7 = vector.broadcast %6 : vector<1x64xf32> to vector<128x64xf32>
    %8 = arith.addf %5, %7 : vector<128x64xf32>
    %c0_7 = arith.constant 0 : index
    %c0_8 = arith.constant 0 : index
    %9 = vector.load %arg5[%c0_7, %c0_8] : memref<128x64xf32, #tpu.memory_space<vmem>>, vector<128x64xf32>
    %10 = arith.addf %8, %9 : vector<128x64xf32>
    %c0_9 = arith.constant 0 : index
    %c0_10 = arith.constant 0 : index
    %11 = vector.load %arg4[%c0_9, %c0_10] : memref<1x64xf32, #tpu.memory_space<vmem>>, vector<1x64xf32>
    %cst_11 = arith.constant 0.000000e+00 : f32
    %12 = vector.broadcast %cst_11 : f32 to vector<128x64xf32>
    %13 = arith.maximumf %10, %12 : vector<128x64xf32>
    %14 = vector.broadcast %11 : vector<1x64xf32> to vector<128x64xf32>
    %15 = arith.mulf %14, %13 : vector<128x64xf32>
    %cst_12 = arith.constant 1.000000e+00 : f32
    %16 = vector.broadcast %cst_12 : f32 to vector<1x64xf32>
    %17 = arith.subf %16, %11 : vector<1x64xf32>
    %18 = vector.broadcast %17 : vector<1x64xf32> to vector<128x64xf32>
    %19 = arith.mulf %18, %10 : vector<128x64xf32>
    %20 = arith.addf %15, %19 : vector<128x64xf32>
    %c0_13 = arith.constant 0 : index
    %c0_14 = arith.constant 0 : index
    %21 = vector.load %arg6[%c0_13, %c0_14] : memref<128x64xf32, #tpu.memory_space<vmem>>, vector<128x64xf32>
    tpu.vector_store %arg6[%c0_13, %c0_14], %20 {strides = array<i32>} : memref<128x64xf32, #tpu.memory_space<vmem>>, vector<128x64xf32>,
    return
  }
}

</mosaic_0001>

<llo_original>
// kernel: forward.4
$region0: #{forward.4}
  #allocation0 [shape = 'u32[]', space=smem, size = 0x4, offset = 0x4, fixed_abs, tag = 'smem constant byte address 0x4 - core index']
  #allocation1 [shape = 'u32[144,128]{1,0:T(1,128)}', space=vmem, size = 0x12000, scoped, tag = 'internal scratch']
  %s0 = inlined_call_operand.vmem [shape: bf16[128,288], index: 0, kind: input, shape index: {}]
  %s1 = inlined_call_operand.vmem [shape: bf16[288,128], index: 1, kind: input, shape index: {}]
  %s2 = inlined_call_operand.vmem [shape: f32[1,128], index: 2, kind: input, shape index: {}]
  %s3 = inlined_call_operand.vmem [shape: f32[1,128], index: 3, kind: input, shape index: {}]
  %s4 = inlined_call_operand.vmem [shape: f32[1,128], index: 4, kind: input, shape index: {}]
  %s5 = inlined_call_operand.vmem [shape: f32[128,128], index: 5, kind: output, shape index: {}]
  %s6 = sld [smem:[#allocation0]]
  $region30: #{forward.4} parent=0
    _
  %s8 = ssub.s32 1, %s6
  %s9 = scalar_select 0, %s8, %s6
  // Predicated region
  $region2: #{forward.4} parent=0 // pred_check
    _
  $region3: #{forward.4} parent=0 // pred_check_branch
    %11 = sbr.rel (0) target = $region5
  $region4: #{forward.4} parent=0 // pred_region
    _
  $region5: #{forward.4} parent=0 // pred_fallthru
    _
  // Predicated region
  $region6: #{forward.4} parent=0 // pred_check
    _
  $region7: #{forward.4} parent=0 // pred_check_branch
    %13 = sbr.rel (0) target = $region9
  $region8: #{forward.4} parent=0 // pred_region
    _
  $region9: #{forward.4} parent=0 // pred_fallthru
    _
  // Predicated region
  $region10: #{forward.4} parent=0 // pred_check
    _
  $region11: #{forward.4} parent=0 // pred_check_branch
    %15 = sbr.rel (0) target = $region13
  $region12: #{forward.4} parent=0 // pred_region
    _
  $region13: #{forward.4} parent=0 // pred_fallthru
    _
  // Predicated region
  $region14: #{forward.4} parent=0 // pred_check
    _
  $region15: #{forward.4} parent=0 // pred_check_branch
    %17 = sbr.rel (0) target = $region17
  $region16: #{forward.4} parent=0 // pred_region
    _
  $region17: #{forward.4} parent=0 // pred_fallthru
    _
  // Predicated region
  $region18: #{forward.4} parent=0 // pred_check
    _
  $region19: #{forward.4} parent=0 // pred_check_branch
    %19 = sbr.rel (0) target = $region21
  $region20: #{forward.4} parent=0 // pred_region
    _
  $region21: #{forward.4} parent=0 // pred_fallthru
    _
  %v21 = vld [vmem:[%s0] sm:$0xff]
  %v22 = vld [vmem:[%s0 + $0x8] sm:$0xf]
  %v23 = vld [vmem:[%s0 + $0xc] sm:$0xff]
  %v24 = vld [vmem:[%s0 + $0x14] sm:$0xf]
  %v25 = vld [vmem:[%s0 + $0x18] sm:$0xff]
  %v26 = vld [vmem:[%s0 + $0x20] sm:$0xf]
  %v27 = vld [vmem:[%s0 + $0x24] sm:$0xff]
  %v28 = vld [vmem:[%s0 + $0x2c] sm:$0xf]
  %v29 = vld [vmem:[%s0 + $0x30] sm:$0xff]
  %v30 = vld [vmem:[%s0 + $0x38] sm:$0xf]
  %v31 = vld [vmem:[%s0 + $0x3c] sm:$0xff]
  %v32 = vld [vmem:[%s0 + $0x44] sm:$0xf]
  %v33 = vld [vmem:[%s0 + $0x48] sm:$0xff]
  %v34 = vld [vmem:[%s0 + $0x50] sm:$0xf]
  %v35 = vld [vmem:[%s0 + $0x54] sm:$0xff]
  %v36 = vld [vmem:[%s0 + $0x5c] sm:$0xf]
  %v37 = vld [vmem:[%s0 + $0x60] sm:$0xff]
  %v38 = vld [vmem:[%s0 + $0x68] sm:$0xf]
  %v39 = vld [vmem:[%s0 + $0x6c] sm:$0xff]
  %v40 = vld [vmem:[%s0 + $0x74] sm:$0xf]
  %v41 = vld [vmem:[%s0 + $0x78] sm:$0xff]
  %v42 = vld [vmem:[%s0 + $0x80] sm:$0xf]
  %v43 = vld [vmem:[%s0 + $0x84] sm:$0xff]
  %v44 = vld [vmem:[%s0 + $0x8c] sm:$0xf]
  %v45 = vld [vmem:[%s0 + $0x90] sm:$0xff]
  %v46 = vld [vmem:[%s0 + $0x98] sm:$0xf]
  %v47 = vld [vmem:[%s0 + $0x9c] sm:$0xff]
  %v48 = vld [vmem:[%s0 + $0xa4] sm:$0xf]
  %v49 = vld [vmem:[%s0 + $0xa8] sm:$0xff]
  %v50 = vld [vmem:[%s0 + $0xb0] sm:$0xf]
  %v51 = vld [vmem:[%s0 + $0xb4] sm:$0xff]
  %v52 = vld [vmem:[%s0 + $0xbc] sm:$0xf]
  %v53 = vld [vmem:[%s1] sm:$0xf]
  %v54 = vld [vmem:[%s1 + $0x4] sm:$0xf]
  %v55 = vld [vmem:[%s1 + $0x8] sm:$0xf]
  %v56 = vld [vmem:[%s1 + $0xc] sm:$0xf]
  %v57 = vld [vmem:[%s1 + $0x10] sm:$0xf]
  %v58 = vld [vmem:[%s1 + $0x14] sm:$0xf]
  %v59 = vld [vmem:[%s1 + $0x18] sm:$0xf]
  %v60 = vld [vmem:[%s1 + $0x1c] sm:$0xf]
  %v61 = vld [vmem:[%s1 + $0x20] sm:$0xf]
  %v62 = vld [vmem:[%s1 + $0x24] sm:$0xf]
  %v63 = vld [vmem:[%s1 + $0x28] sm:$0xf]
  %v64 = vld [vmem:[%s1 + $0x2c] sm:$0xf]
  %v65 = vld [vmem:[%s1 + $0x30] sm:$0xf]
  %v66 = vld [vmem:[%s1 + $0x34] sm:$0xf]
  %v67 = vld [vmem:[%s1 + $0x38] sm:$0xf]
  %v68 = vld [vmem:[%s1 + $0x3c] sm:$0xf]
  %v69 = vld [vmem:[%s1 + $0x40] sm:$0xf]
  %v70 = vld [vmem:[%s1 + $0x44] sm:$0xf]
  %v71 = vld [vmem:[%s1 + $0x48] sm:$0xf]
  %v72 = vld [vmem:[%s1 + $0x4c] sm:$0xf]
  %v73 = vld [vmem:[%s1 + $0x50] sm:$0xf]
  %v74 = vld [vmem:[%s1 + $0x54] sm:$0xf]
  %v75 = vld [vmem:[%s1 + $0x58] sm:$0xf]
  %v76 = vld [vmem:[%s1 + $0x5c] sm:$0xf]
  %v77 = vld [vmem:[%s1 + $0x60] sm:$0xf]
  %v78 = vld [vmem:[%s1 + $0x64] sm:$0xf]
  %v79 = vld [vmem:[%s1 + $0x68] sm:$0xf]
  %v80 = vld [vmem:[%s1 + $0x6c] sm:$0xf]
  %v81 = vld [vmem:[%s1 + $0x70] sm:$0xf]
  %v82 = vld [vmem:[%s1 + $0x74] sm:$0xf]
  %v83 = vld [vmem:[%s1 + $0x78] sm:$0xf]
  %v84 = vld [vmem:[%s1 + $0x7c] sm:$0xf]
  %v85 = vld [vmem:[%s1 + $0x80] sm:$0xf]
  %v86 = vld [vmem:[%s1 + $0x84] sm:$0xf]
  %v87 = vld [vmem:[%s1 + $0x88] sm:$0xf]
  %v88 = vld [vmem:[%s1 + $0x8c] sm:$0xf]
  %v121 = vunpack.c.l.b16 %v21
  %v122 = vunpack.c.h.b16 %v21
  %v123 = vunpack.c.l.b16 %v22
  %v124 = vunpack.c.l.b16 %v23
  %v125 = vunpack.c.h.b16 %v23
  %v126 = vunpack.c.l.b16 %v24
  %v127 = vunpack.c.l.b16 %v25
  %v128 = vunpack.c.h.b16 %v25
  %v129 = vunpack.c.l.b16 %v26
  %v130 = vunpack.c.l.b16 %v27
  %v131 = vunpack.c.h.b16 %v27
  %v132 = vunpack.c.l.b16 %v28
  %v133 = vunpack.c.l.b16 %v29
  %v134 = vunpack.c.h.b16 %v29
  %v135 = vunpack.c.l.b16 %v30
  %v136 = vunpack.c.l.b16 %v31
  %v137 = vunpack.c.h.b16 %v31
  %v138 = vunpack.c.l.b16 %v32
  %v139 = vunpack.c.l.b16 %v33
  %v140 = vunpack.c.h.b16 %v33
  %v141 = vunpack.c.l.b16 %v34
  %v142 = vunpack.c.l.b16 %v35
  %v143 = vunpack.c.h.b16 %v35
  %v144 = vunpack.c.l.b16 %v36
  %v145 = vunpack.c.l.b16 %v37
  %v146 = vunpack.c.h.b16 %v37
  %v147 = vunpack.c.l.b16 %v38
  %v148 = vunpack.c.l.b16 %v39
  %v149 = vunpack.c.h.b16 %v39
  %v150 = vunpack.c.l.b16 %v40
  %v151 = vunpack.c.l.b16 %v41
  %v152 = vunpack.c.h.b16 %v41
  %v153 = vunpack.c.l.b16 %v42
  %v154 = vunpack.c.l.b16 %v43
  %v155 = vunpack.c.h.b16 %v43
  %v156 = vunpack.c.l.b16 %v44
  %v157 = vunpack.c.l.b16 %v45
  %v158 = vunpack.c.h.b16 %v45
  %v159 = vunpack.c.l.b16 %v46
  %v160 = vunpack.c.l.b16 %v47
  %v161 = vunpack.c.h.b16 %v47
  %v162 = vunpack.c.l.b16 %v48
  %v163 = vunpack.c.l.b16 %v49
  %v164 = vunpack.c.h.b16 %v49
  %v165 = vunpack.c.l.b16 %v50
  %v166 = vunpack.c.l.b16 %v51
  %v167 = vunpack.c.h.b16 %v51
  %v168 = vunpack.c.l.b16 %v52
  %v169 = vpack.c.b16 %v124, %v121
  %v170 = vpack.c.b16 %v125, %v122
  %v171 = vpack.c.b16 %v126, %v123
  %v172 = vpack.c.b16 %v130, %v127
  %v173 = vpack.c.b16 %v131, %v128
  %v174 = vpack.c.b16 %v132, %v129
  %v175 = vpack.c.b16 %v136, %v133
  %v176 = vpack.c.b16 %v137, %v134
  %v177 = vpack.c.b16 %v138, %v135
  %v178 = vpack.c.b16 %v142, %v139
  %v179 = vpack.c.b16 %v143, %v140
  %v180 = vpack.c.b16 %v144, %v141
  %v181 = vpack.c.b16 %v148, %v145
  %v182 = vpack.c.b16 %v149, %v146
  %v183 = vpack.c.b16 %v150, %v147
  %v184 = vpack.c.b16 %v154, %v151
  %v185 = vpack.c.b16 %v155, %v152
  %v186 = vpack.c.b16 %v156, %v153
  %v187 = vpack.c.b16 %v160, %v157
  %v188 = vpack.c.b16 %v161, %v158
  %v189 = vpack.c.b16 %v162, %v159
  %v190 = vpack.c.b16 %v166, %v163
  %v191 = vpack.c.b16 %v167, %v164
  %v192 = vpack.c.b16 %v168, %v165
  %v245 = vunpack.c.l.b16 %v53
  %v246 = vunpack.c.l.b16 %v54
  %v247 = vunpack.c.l.b16 %v55
  %v248 = vunpack.c.l.b16 %v56
  %v249 = vunpack.c.l.b16 %v57
  %v250 = vunpack.c.l.b16 %v58
  %v251 = vunpack.c.l.b16 %v59
  %v252 = vunpack.c.l.b16 %v60
  %v253 = vunpack.c.l.b16 %v61
  %v254 = vunpack.c.l.b16 %v62
  %v255 = vunpack.c.l.b16 %v63
  %v256 = vunpack.c.l.b16 %v64
  %v257 = vunpack.c.l.b16 %v65
  %v258 = vunpack.c.l.b16 %v66
  %v259 = vunpack.c.l.b16 %v67
  %v260 = vunpack.c.l.b16 %v68
  %v261 = vunpack.c.l.b16 %v69
  %v262 = vunpack.c.l.b16 %v70
  %v263 = vunpack.c.l.b16 %v71
  %v264 = vunpack.c.l.b16 %v72
  %v265 = vunpack.c.l.b16 %v73
  %v266 = vunpack.c.l.b16 %v74
  %v267 = vunpack.c.l.b16 %v75
  %v268 = vunpack.c.l.b16 %v76
  %v269 = vunpack.c.l.b16 %v77
  %v270 = vunpack.c.l.b16 %v78
  %v271 = vunpack.c.l.b16 %v79
  %v272 = vunpack.c.l.b16 %v80
  %v273 = vunpack.c.l.b16 %v81
  %v274 = vunpack.c.l.b16 %v82
  %v275 = vunpack.c.l.b16 %v83
  %v276 = vunpack.c.l.b16 %v84
  %v277 = vunpack.c.l.b16 %v85
  %v278 = vunpack.c.l.b16 %v86
  %v279 = vunpack.c.l.b16 %v87
  %v280 = vunpack.c.l.b16 %v88
  %v281 = vpack.c.b16 %v246, %v245
  %v282 = vpack.c.b16 %v248, %v247
  %v283 = vpack.c.b16 %v250, %v249
  %v284 = vpack.c.b16 %v252, %v251
  %v285 = vpack.c.b16 %v254, %v253
  %v286 = vpack.c.b16 %v256, %v255
  %v287 = vpack.c.b16 %v258, %v257
  %v288 = vpack.c.b16 %v260, %v259
  %v289 = vpack.c.b16 %v262, %v261
  %v290 = vpack.c.b16 %v264, %v263
  %v291 = vpack.c.b16 %v266, %v265
  %v292 = vpack.c.b16 %v268, %v267
  %v293 = vpack.c.b16 %v270, %v269
  %v294 = vpack.c.b16 %v272, %v271
  %v295 = vpack.c.b16 %v274, %v273
  %v296 = vpack.c.b16 %v276, %v275
  %v297 = vpack.c.b16 %v278, %v277
  %v298 = vpack.c.b16 %v280, %v279
  %vm317 = vcmask 261120
  %v319 = vsel %vm317, %v171, 0
  %v322 = vsel %vm317, %v174, 0
  %v325 = vsel %vm317, %v177, 0
  %v328 = vsel %vm317, %v180, 0
  %v331 = vsel %vm317, %v183, 0
  %v334 = vsel %vm317, %v186, 0
  %v337 = vsel %vm317, %v189, 0
  %v340 = vsel %vm317, %v192, 0
  %342 = vmatprep.subr.bf16.mxu0 0
  %343 = vmatpush1.bf16.msra.mxu0 %v288
  %344 = vmatprep.subr.bf16.mxu0 0
  %345 = vmatpush1.bf16.msra.mxu0 %v287
  %346 = vmatprep.subr.bf16.mxu0 0
  %347 = vmatpush1.bf16.msra.mxu0 %v286
  %348 = vmatprep.subr.bf16.mxu0 0
  %349 = vmatpush1.bf16.msra.mxu0 %v285
  %350 = vmatprep.subr.bf16.mxu0 0
  %351 = vmatpush1.bf16.msra.mxu0 %v284
  %352 = vmatprep.subr.bf16.mxu0 0
  %353 = vmatpush1.bf16.msra.mxu0 %v283
  %354 = vmatprep.subr.bf16.mxu0 0
  %355 = vmatpush1.bf16.msra.mxu0 %v282
  %356 = vmatprep.subr.bf16.mxu0 0
  %357 = vmatpush1.bf16.msra.mxu0 %v281
  %358 = vmatprep.subr.bf16.mxu0 0
  %359 = vmatpush2.bf16.msra.mxu0 %v296
  %360 = vmatprep.subr.bf16.mxu0 0
  %361 = vmatpush2.bf16.msra.mxu0 %v295
  %362 = vmatprep.subr.bf16.mxu0 0
  %363 = vmatpush2.bf16.msra.mxu0 %v294
  %364 = vmatprep.subr.bf16.mxu0 0
  %365 = vmatpush2.bf16.msra.mxu0 %v293
  %366 = vmatprep.subr.bf16.mxu0 0
  %367 = vmatpush2.bf16.msra.mxu0 %v292
  %368 = vmatprep.subr.bf16.mxu0 0
  %369 = vmatpush2.bf16.msra.mxu0 %v291
  %370 = vmatprep.subr.bf16.mxu0 0
  %371 = vmatpush2.bf16.msra.mxu0 %v290
  %372 = vmatprep.subr.bf16.mxu0 0
  %373 = vmatpush2.bf16.msra.mxu0 %v289
  %374 = vmatprep.mubr.bf16.mxu0 %v170
  %375 = vmatmul.mubr.bf16.gmra.mxu0 %v169
  %v376 = vpop.f32.mrf.mxu0
  %v377 = vadd.f32 0.0, %v376
  %v378 = vpop.f32.mrf.mxu0
  %v379 = vpop.f32.mrf.mxu0
  %v380 = vadd.f32 0.0, %v379
  %v381 = vpop.f32.mrf.mxu0
  %382 = vmatprep.mubr.bf16.mxu0 %v173
  %383 = vmatmul.mubr.bf16.gmra.mxu0 %v172
  %v384 = vpop.f32.mrf.mxu0
  %v385 = vadd.f32 0.0, %v384
  %v386 = vpop.f32.mrf.mxu0
  %v387 = vpop.f32.mrf.mxu0
  %v388 = vadd.f32 0.0, %v387
  %v389 = vpop.f32.mrf.mxu0
  %390 = vmatprep.mubr.bf16.mxu0 %v176
  %391 = vmatmul.mubr.bf16.gmra.mxu0 %v175
  %v392 = vpop.f32.mrf.mxu0
  %v393 = vadd.f32 0.0, %v392
  %v394 = vpop.f32.mrf.mxu0
  %v395 = vpop.f32.mrf.mxu0
  %v396 = vadd.f32 0.0, %v395
  %v397 = vpop.f32.mrf.mxu0
  %398 = vmatprep.mubr.bf16.mxu0 %v179
  %399 = vmatmul.mubr.bf16.gmra.mxu0 %v178
  %v400 = vpop.f32.mrf.mxu0
  %v401 = vadd.f32 0.0, %v400
  %v402 = vpop.f32.mrf.mxu0
  %v403 = vpop.f32.mrf.mxu0
  %v404 = vadd.f32 0.0, %v403
  %v405 = vpop.f32.mrf.mxu0
  %406 = vmatprep.mubr.bf16.mxu0 %v182
  %407 = vmatmul.mubr.bf16.gmra.mxu0 %v181
  %v408 = vpop.f32.mrf.mxu0
  %v409 = vadd.f32 0.0, %v408
  %v410 = vpop.f32.mrf.mxu0
  %v411 = vpop.f32.mrf.mxu0
  %v412 = vadd.f32 0.0, %v411
  %v413 = vpop.f32.mrf.mxu0
  %414 = vmatprep.mubr.bf16.mxu0 %v185
  %415 = vmatmul.mubr.bf16.gmra.mxu0 %v184
  %v416 = vpop.f32.mrf.mxu0
  %v417 = vadd.f32 0.0, %v416
  %v418 = vpop.f32.mrf.mxu0
  %v419 = vpop.f32.mrf.mxu0
  %v420 = vadd.f32 0.0, %v419
  %v421 = vpop.f32.mrf.mxu0
  %422 = vmatprep.mubr.bf16.mxu0 %v188
  %423 = vmatmul.mubr.bf16.gmra.mxu0 %v187
  %v424 = vpop.f32.mrf.mxu0
  %v425 = vadd.f32 0.0, %v424
  %v426 = vpop.f32.mrf.mxu0
  %v427 = vpop.f32.mrf.mxu0
  %v428 = vadd.f32 0.0, %v427
  %v429 = vpop.f32.mrf.mxu0
  %430 = vmatprep.mubr.bf16.mxu0 %v191
  %431 = vmatmul.mubr.bf16.gmra.mxu0 %v190
  %v432 = vpop.f32.mrf.mxu0
  %v433 = vadd.f32 0.0, %v432
  %v434 = vpop.f32.mrf.mxu0
  %v435 = vpop.f32.mrf.mxu0
  %v436 = vadd.f32 0.0, %v435
  %v437 = vpop.f32.mrf.mxu0
  %438 = vdwg.mxu0
  %439 = vmatprep.subr.bf16.mxu0 0
  %440 = vmatpush1.bf16.msra.mxu0 0
  %441 = vmatprep.subr.bf16.mxu0 0
  %442 = vmatpush1.bf16.msra.mxu0 0
  %443 = vmatprep.subr.bf16.mxu0 0
  %444 = vmatpush1.bf16.msra.mxu0 0
  %445 = vmatprep.subr.bf16.mxu0 0
  %446 = vmatpush1.bf16.msra.mxu0 0
  %447 = vmatprep.subr.bf16.mxu0 0
  %448 = vmatpush1.bf16.msra.mxu0 0
  %449 = vmatprep.subr.bf16.mxu0 0
  %450 = vmatpush1.bf16.msra.mxu0 0
  %451 = vmatprep.subr.bf16.mxu0 0
  %452 = vmatpush1.bf16.msra.mxu0 %v298
  %453 = vmatprep.subr.bf16.mxu0 0
  %454 = vmatpush1.bf16.msra.mxu0 %v297
  %455 = vmatprep.subr.bf16.mxu0 0
  %456 = vmatpush2.bf16.msra.mxu0 0
  %457 = vmatprep.subr.bf16.mxu0 0
  %458 = vmatpush2.bf16.msra.mxu0 0
  %459 = vmatprep.subr.bf16.mxu0 0
  %460 = vmatpush2.bf16.msra.mxu0 0
  %461 = vmatprep.subr.bf16.mxu0 0
  %462 = vmatpush2.bf16.msra.mxu0 0
  %463 = vmatprep.subr.bf16.mxu0 0
  %464 = vmatpush2.bf16.msra.mxu0 0
  %465 = vmatprep.subr.bf16.mxu0 0
  %466 = vmatpush2.bf16.msra.mxu0 0
  %467 = vmatprep.subr.bf16.mxu0 0
  %468 = vmatpush2.bf16.msra.mxu0 0
  %469 = vmatprep.subr.bf16.mxu0 0
  %470 = vmatpush2.bf16.msra.mxu0 0
  %471 = vmatprep.mubr.bf16.mxu0 0
  %472 = vmatmul.mubr.bf16.gmra.mxu0 %v319
  %v473 = vpop.f32.mrf.mxu0
  %v474 = vadd.f32 %v377, %v473
  %v475 = vpop.f32.mrf.mxu0
  %v476 = vpop.f32.mrf.mxu0
  %v477 = vadd.f32 %v380, %v476
  %v478 = vpop.f32.mrf.mxu0
  %479 = vmatprep.mubr.bf16.mxu0 0
  %480 = vmatmul.mubr.bf16.gmra.mxu0 %v322
  %v481 = vpop.f32.mrf.mxu0
  %v482 = vadd.f32 %v385, %v481
  %v483 = vpop.f32.mrf.mxu0
  %v484 = vpop.f32.mrf.mxu0
  %v485 = vadd.f32 %v388, %v484
  %v486 = vpop.f32.mrf.mxu0
  %487 = vmatprep.mubr.bf16.mxu0 0
  %488 = vmatmul.mubr.bf16.gmra.mxu0 %v325
  %v489 = vpop.f32.mrf.mxu0
  %v490 = vadd.f32 %v393, %v489
  %v491 = vpop.f32.mrf.mxu0
  %v492 = vpop.f32.mrf.mxu0
  %v493 = vadd.f32 %v396, %v492
  %v494 = vpop.f32.mrf.mxu0
  %495 = vmatprep.mubr.bf16.mxu0 0
  %496 = vmatmul.mubr.bf16.gmra.mxu0 %v328
  %v497 = vpop.f32.mrf.mxu0
  %v498 = vadd.f32 %v401, %v497
  %v499 = vpop.f32.mrf.mxu0
  %v500 = vpop.f32.mrf.mxu0
  %v501 = vadd.f32 %v404, %v500
  %v502 = vpop.f32.mrf.mxu0
  %503 = vmatprep.mubr.bf16.mxu0 0
  %504 = vmatmul.mubr.bf16.gmra.mxu0 %v331
  %v505 = vpop.f32.mrf.mxu0
  %v506 = vadd.f32 %v409, %v505
  %v507 = vpop.f32.mrf.mxu0
  %v508 = vpop.f32.mrf.mxu0
  %v509 = vadd.f32 %v412, %v508
  %v510 = vpop.f32.mrf.mxu0
  %511 = vmatprep.mubr.bf16.mxu0 0
  %512 = vmatmul.mubr.bf16.gmra.mxu0 %v334
  %v513 = vpop.f32.mrf.mxu0
  %v514 = vadd.f32 %v417, %v513
  %v515 = vpop.f32.mrf.mxu0
  %v516 = vpop.f32.mrf.mxu0
  %v517 = vadd.f32 %v420, %v516
  %v518 = vpop.f32.mrf.mxu0
  %519 = vmatprep.mubr.bf16.mxu0 0
  %520 = vmatmul.mubr.bf16.gmra.mxu0 %v337
  %v521 = vpop.f32.mrf.mxu0
  %v522 = vadd.f32 %v425, %v521
  %v523 = vpop.f32.mrf.mxu0
  %v524 = vpop.f32.mrf.mxu0
  %v525 = vadd.f32 %v428, %v524
  %v526 = vpop.f32.mrf.mxu0
  %527 = vmatprep.mubr.bf16.mxu0 0
  %528 = vmatmul.mubr.bf16.gmra.mxu0 %v340
  %v529 = vpop.f32.mrf.mxu0
  %v530 = vadd.f32 %v433, %v529
  %v531 = vpop.f32.mrf.mxu0
  %v532 = vpop.f32.mrf.mxu0
  %v533 = vadd.f32 %v436, %v532
  %v534 = vpop.f32.mrf.mxu0
  %535 = vdwg.mxu0
  %v536 = vld [vmem:[%s2] sm:$0x1]
  %v538 = vlaneseq
  %v539 = vshrl.u32 %v538, 7
  %v540 = vsub.s32 0, %v539
  %v541 = vrot.slane %v536, %v540
  %v543 = vmul.f32 %v474, %v541
  %v544 = vmul.f32 %v477, %v541
  %v545 = vmul.f32 %v482, %v541
  %v546 = vmul.f32 %v485, %v541
  %v547 = vmul.f32 %v490, %v541
  %v548 = vmul.f32 %v493, %v541
  %v549 = vmul.f32 %v498, %v541
  %v550 = vmul.f32 %v501, %v541
  %v551 = vmul.f32 %v506, %v541
  %v552 = vmul.f32 %v509, %v541
  %v553 = vmul.f32 %v514, %v541
  %v554 = vmul.f32 %v517, %v541
  %v555 = vmul.f32 %v522, %v541
  %v556 = vmul.f32 %v525, %v541
  %v557 = vmul.f32 %v530, %v541
  %v558 = vmul.f32 %v533, %v541
  %v559 = vld [vmem:[%s3] sm:$0x1]
  %v561 = vlaneseq
  %v562 = vshrl.u32 %v561, 7
  %v563 = vsub.s32 0, %v562
  %v564 = vrot.slane %v559, %v563
  %v566 = vadd.f32 %v543, %v564
  %v567 = vadd.f32 %v544, %v564
  %v568 = vadd.f32 %v545, %v564
  %v569 = vadd.f32 %v546, %v564
  %v570 = vadd.f32 %v547, %v564
  %v571 = vadd.f32 %v548, %v564
  %v572 = vadd.f32 %v549, %v564
  %v573 = vadd.f32 %v550, %v564
  %v574 = vadd.f32 %v551, %v564
  %v575 = vadd.f32 %v552, %v564
  %v576 = vadd.f32 %v553, %v564
  %v577 = vadd.f32 %v554, %v564
  %v578 = vadd.f32 %v555, %v564
  %v579 = vadd.f32 %v556, %v564
  %v580 = vadd.f32 %v557, %v564
  %v581 = vadd.f32 %v558, %v564
  %v582 = vld [vmem:[%s4] sm:$0x1]
  %v583 = vmax.f32 %v566, 0.0
  %v584 = vmax.f32 %v567, 0.0
  %v585 = vmax.f32 %v568, 0.0
  %v586 = vmax.f32 %v569, 0.0
  %v587 = vmax.f32 %v570, 0.0
  %v588 = vmax.f32 %v571, 0.0
  %v589 = vmax.f32 %v572, 0.0
  %v590 = vmax.f32 %v573, 0.0
  %v591 = vmax.f32 %v574, 0.0
  %v592 = vmax.f32 %v575, 0.0
  %v593 = vmax.f32 %v576, 0.0
  %v594 = vmax.f32 %v577, 0.0
  %v595 = vmax.f32 %v578, 0.0
  %v596 = vmax.f32 %v579, 0.0
  %v597 = vmax.f32 %v580, 0.0
  %v598 = vmax.f32 %v581, 0.0
  %v600 = vlaneseq
  %v601 = vshrl.u32 %v600, 7
  %v602 = vsub.s32 0, %v601
  %v603 = vrot.slane %v582, %v602
  %v605 = vmul.f32 %v603, %v583
  %v606 = vmul.f32 %v603, %v584
  %v607 = vmul.f32 %v603, %v585
  %v608 = vmul.f32 %v603, %v586
  %v609 = vmul.f32 %v603, %v587
  %v610 = vmul.f32 %v603, %v588
  %v611 = vmul.f32 %v603, %v589
  %v612 = vmul.f32 %v603, %v590
  %v613 = vmul.f32 %v603, %v591
  %v614 = vmul.f32 %v603, %v592
  %v615 = vmul.f32 %v603, %v593
  %v616 = vmul.f32 %v603, %v594
  %v617 = vmul.f32 %v603, %v595
  %v618 = vmul.f32 %v603, %v596
  %v619 = vmul.f32 %v603, %v597
  %v620 = vmul.f32 %v603, %v598
  %v621 = vsub.f32 1.0, %v582
  %v623 = vlaneseq
  %v624 = vshrl.u32 %v623, 7
  %v625 = vsub.s32 0, %v624
  %v626 = vrot.slane %v621, %v625
  %v628 = vmul.f32 %v626, %v566
  %v629 = vmul.f32 %v626, %v567
  %v630 = vmul.f32 %v626, %v568
  %v631 = vmul.f32 %v626, %v569
  %v632 = vmul.f32 %v626, %v570
  %v633 = vmul.f32 %v626, %v571
  %v634 = vmul.f32 %v626, %v572
  %v635 = vmul.f32 %v626, %v573
  %v636 = vmul.f32 %v626, %v574
  %v637 = vmul.f32 %v626, %v575
  %v638 = vmul.f32 %v626, %v576
  %v639 = vmul.f32 %v626, %v577
  %v640 = vmul.f32 %v626, %v578
  %v641 = vmul.f32 %v626, %v579
  %v642 = vmul.f32 %v626, %v580
  %v643 = vmul.f32 %v626, %v581
  %v644 = vadd.f32 %v605, %v628
  %v645 = vadd.f32 %v606, %v629
  %v646 = vadd.f32 %v607, %v630
  %v647 = vadd.f32 %v608, %v631
  %v648 = vadd.f32 %v609, %v632
  %v649 = vadd.f32 %v610, %v633
  %v650 = vadd.f32 %v611, %v634
  %v651 = vadd.f32 %v612, %v635
  %v652 = vadd.f32 %v613, %v636
  %v653 = vadd.f32 %v614, %v637
  %v654 = vadd.f32 %v615, %v638
  %v655 = vadd.f32 %v616, %v639
  %v656 = vadd.f32 %v617, %v640
  %v657 = vadd.f32 %v618, %v641
  %v658 = vadd.f32 %v619, %v642
  %v659 = vadd.f32 %v620, %v643
  %660 = vst [vmem:[%s5] sm:$0xff] %v644
  %661 = vst [vmem:[%s5 + $0x8] sm:$0xff] %v645
  %662 = vst [vmem:[%s5 + $0x10] sm:$0xff] %v646
  %663 = vst [vmem:[%s5 + $0x18] sm:$0xff] %v647
  %664 = vst [vmem:[%s5 + $0x20] sm:$0xff] %v648
  %665 = vst [vmem:[%s5 + $0x28] sm:$0xff] %v649
  %666 = vst [vmem:[%s5 + $0x30] sm:$0xff] %v650
  %667 = vst [vmem:[%s5 + $0x38] sm:$0xff] %v651
  %668 = vst [vmem:[%s5 + $0x40] sm:$0xff] %v652
  %669 = vst [vmem:[%s5 + $0x48] sm:$0xff] %v653
  %670 = vst [vmem:[%s5 + $0x50] sm:$0xff] %v654
  %671 = vst [vmem:[%s5 + $0x58] sm:$0xff] %v655
  %672 = vst [vmem:[%s5 + $0x60] sm:$0xff] %v656
  %673 = vst [vmem:[%s5 + $0x68] sm:$0xff] %v657
  %674 = vst [vmem:[%s5 + $0x70] sm:$0xff] %v658
  %675 = vst [vmem:[%s5 + $0x78] sm:$0xff] %v659
  // Predicated region
  $region22: #{forward.4} parent=0 // pred_check
    _
  $region23: #{forward.4} parent=0 // pred_check_branch
    %677 = sbr.rel (0) target = $region25
  $region24: #{forward.4} parent=0 // pred_region
    _
  $region25: #{forward.4} parent=0 // pred_fallthru
    _
  // Predicated region
  $region26: #{forward.4} parent=0 // pred_check
    _
  $region27: #{forward.4} parent=0 // pred_check_branch
    %679 = sbr.rel (0) target = $region29
  $region28: #{forward.4} parent=0 // pred_region
    _
  $region29: #{forward.4} parent=0 // pred_fallthru
    _

// kernel: forward.5
$region0: #{forward.5}
  #allocation0 [shape = 'u32[]', space=smem, size = 0x4, offset = 0x4, fixed_abs, tag = 'smem constant byte address 0x4 - core index']
  #allocation1 [shape = 'u32[144,128]{1,0:T(1,128)}', space=vmem, size = 0x12000, scoped, tag = 'internal scratch']
  %s0 = inlined_call_operand.vmem [shape: bf16[128,576], index: 0, kind: input, shape index: {}]
  %s1 = inlined_call_operand.vmem [shape: bf16[576,64], index: 1, kind: input, shape index: {}]
  %s2 = inlined_call_operand.vmem [shape: f32[1,64], index: 2, kind: input, shape index: {}]
  %s3 = inlined_call_operand.vmem [shape: f32[1,64], index: 3, kind: input, shape index: {}]
  %s4 = inlined_call_operand.vmem [shape: f32[1,64], index: 4, kind: input, shape index: {}]
  %s5 = inlined_call_operand.vmem [shape: f32[128,64], index: 5, kind: input, shape index: {}]
  %s6 = inlined_call_operand.vmem [shape: f32[128,64], index: 6, kind: output, shape index: {}]
  %s7 = sld [smem:[#allocation0]]
  $region34: #{forward.5} parent=0
    _
  %s9 = ssub.s32 1, %s7
  %s10 = scalar_select 0, %s9, %s7
  // Predicated region
  $region2: #{forward.5} parent=0 // pred_check
    _
  $region3: #{forward.5} parent=0 // pred_check_branch
    %12 = sbr.rel (0) target = $region5
  $region4: #{forward.5} parent=0 // pred_region
    _
  $region5: #{forward.5} parent=0 // pred_fallthru
    _
  // Predicated region
  $region6: #{forward.5} parent=0 // pred_check
    _
  $region7: #{forward.5} parent=0 // pred_check_branch
    %14 = sbr.rel (0) target = $region9
  $region8: #{forward.5} parent=0 // pred_region
    _
  $region9: #{forward.5} parent=0 // pred_fallthru
    _
  // Predicated region
  $region10: #{forward.5} parent=0 // pred_check
    _
  $region11: #{forward.5} parent=0 // pred_check_branch
    %16 = sbr.rel (0) target = $region13
  $region12: #{forward.5} parent=0 // pred_region
    _
  $region13: #{forward.5} parent=0 // pred_fallthru
    _
  // Predicated region
  $region14: #{forward.5} parent=0 // pred_check
    _
  $region15: #{forward.5} parent=0 // pred_check_branch
    %18 = sbr.rel (0) target = $region17
  $region16: #{forward.5} parent=0 // pred_region
    _
  $region17: #{forward.5} parent=0 // pred_fallthru
    _
  // Predicated region
  $region18: #{forward.5} parent=0 // pred_check
    _
  $region19: #{forward.5} parent=0 // pred_check_branch
    %20 = sbr.rel (0) target = $region21
  $region20: #{forward.5} parent=0 // pred_region
    _
  $region21: #{forward.5} parent=0 // pred_fallthru
    _
  // Predicated region
  $region22: #{forward.5} parent=0 // pred_check
    _
  $region23: #{forward.5} parent=0 // pred_check_branch
    %22 = sbr.rel (0) target = $region25
  $region24: #{forward.5} parent=0 // pred_region
    _
  $region25: #{forward.5} parent=0 // pred_fallthru
    _
  %v24 = vld [vmem:[%s0] sm:$0xff]
  %v25 = vld [vmem:[%s0 + $0x8] sm:$0xff]
  %v26 = vld [vmem:[%s0 + $0x10] sm:$0xf]
  %v27 = vld [vmem:[%s0 + $0x14] sm:$0xff]
  %v28 = vld [vmem:[%s0 + $0x1c] sm:$0xff]
  %v29 = vld [vmem:[%s0 + $0x24] sm:$0xf]
  %v30 = vld [vmem:[%s0 + $0x28] sm:$0xff]
  %v31 = vld [vmem:[%s0 + $0x30] sm:$0xff]
  %v32 = vld [vmem:[%s0 + $0x38] sm:$0xf]
  %v33 = vld [vmem:[%s0 + $0x3c] sm:$0xff]
  %v34 = vld [vmem:[%s0 + $0x44] sm:$0xff]
  %v35 = vld [vmem:[%s0 + $0x4c] sm:$0xf]
  %v36 = vld [vmem:[%s0 + $0x50] sm:$0xff]
  %v37 = vld [vmem:[%s0 + $0x58] sm:$0xff]
  %v38 = vld [vmem:[%s0 + $0x60] sm:$0xf]
  %v39 = vld [vmem:[%s0 + $0x64] sm:$0xff]
  %v40 = vld [vmem:[%s0 + $0x6c] sm:$0xff]
  %v41 = vld [vmem:[%s0 + $0x74] sm:$0xf]
  %v42 = vld [vmem:[%s0 + $0x78] sm:$0xff]
  %v43 = vld [vmem:[%s0 + $0x80] sm:$0xff]
  %v44 = vld [vmem:[%s0 + $0x88] sm:$0xf]
  %v45 = vld [vmem:[%s0 + $0x8c] sm:$0xff]
  %v46 = vld [vmem:[%s0 + $0x94] sm:$0xff]
  %v47 = vld [vmem:[%s0 + $0x9c] sm:$0xf]
  %v48 = vld [vmem:[%s0 + $0xa0] sm:$0xff]
  %v49 = vld [vmem:[%s0 + $0xa8] sm:$0xff]
  %v50 = vld [vmem:[%s0 + $0xb0] sm:$0xf]
  %v51 = vld [vmem:[%s0 + $0xb4] sm:$0xff]
  %v52 = vld [vmem:[%s0 + $0xbc] sm:$0xff]
  %v53 = vld [vmem:[%s0 + $0xc4] sm:$0xf]
  %v54 = vld [vmem:[%s0 + $0xc8] sm:$0xff]
  %v55 = vld [vmem:[%s0 + $0xd0] sm:$0xff]
  %v56 = vld [vmem:[%s0 + $0xd8] sm:$0xf]
  %v57 = vld [vmem:[%s0 + $0xdc] sm:$0xff]
  %v58 = vld [vmem:[%s0 + $0xe4] sm:$0xff]
  %v59 = vld [vmem:[%s0 + $0xec] sm:$0xf]
  %v60 = vld [vmem:[%s0 + $0xf0] sm:$0xff]
  %v61 = vld [vmem:[%s0 + $0xf8] sm:$0xff]
  %v62 = vld [vmem:[%s0 + $0x100] sm:$0xf]
  %v63 = vld [vmem:[%s0 + $0x104] sm:$0xff]
  %v64 = vld [vmem:[%s0 + $0x10c] sm:$0xff]
  %v65 = vld [vmem:[%s0 + $0x114] sm:$0xf]
  %v66 = vld [vmem:[%s0 + $0x118] sm:$0xff]
  %v67 = vld [vmem:[%s0 + $0x120] sm:$0xff]
  %v68 = vld [vmem:[%s0 + $0x128] sm:$0xf]
  %v69 = vld [vmem:[%s0 + $0x12c] sm:$0xff]
  %v70 = vld [vmem:[%s0 + $0x134] sm:$0xff]
  %v71 = vld [vmem:[%s0 + $0x13c] sm:$0xf]
  %v72 = vld [vmem:[%s1] sm:$0xf]
  %v73 = vld [vmem:[%s1 + $0x4] sm:$0xf]
  %v74 = vld [vmem:[%s1 + $0x8] sm:$0xf]
  %v75 = vld [vmem:[%s1 + $0xc] sm:$0xf]
  %v76 = vld [vmem:[%s1 + $0x10] sm:$0xf]
  %v77 = vld [vmem:[%s1 + $0x14] sm:$0xf]
  %v78 = vld [vmem:[%s1 + $0x18] sm:$0xf]
  %v79 = vld [vmem:[%s1 + $0x1c] sm:$0xf]
  %v80 = vld [vmem:[%s1 + $0x20] sm:$0xf]
  %v81 = vld [vmem:[%s1 + $0x24] sm:$0xf]
  %v82 = vld [vmem:[%s1 + $0x28] sm:$0xf]
  %v83 = vld [vmem:[%s1 + $0x2c] sm:$0xf]
  %v84 = vld [vmem:[%s1 + $0x30] sm:$0xf]
  %v85 = vld [vmem:[%s1 + $0x34] sm:$0xf]
  %v86 = vld [vmem:[%s1 + $0x38] sm:$0xf]
  %v87 = vld [vmem:[%s1 + $0x3c] sm:$0xf]
  %v88 = vld [vmem:[%s1 + $0x40] sm:$0xf]
  %v89 = vld [vmem:[%s1 + $0x44] sm:$0xf]
  %v90 = vld [vmem:[%s1 + $0x48] sm:$0xf]
  %v91 = vld [vmem:[%s1 + $0x4c] sm:$0xf]
  %v92 = vld [vmem:[%s1 + $0x50] sm:$0xf]
  %v93 = vld [vmem:[%s1 + $0x54] sm:$0xf]
  %v94 = vld [vmem:[%s1 + $0x58] sm:$0xf]
  %v95 = vld [vmem:[%s1 + $0x5c] sm:$0xf]
  %v96 = vld [vmem:[%s1 + $0x60] sm:$0xf]
  %v97 = vld [vmem:[%s1 + $0x64] sm:$0xf]
  %v98 = vld [vmem:[%s1 + $0x68] sm:$0xf]
  %v99 = vld [vmem:[%s1 + $0x6c] sm:$0xf]
  %v100 = vld [vmem:[%s1 + $0x70] sm:$0xf]
  %v101 = vld [vmem:[%s1 + $0x74] sm:$0xf]
  %v102 = vld [vmem:[%s1 + $0x78] sm:$0xf]
  %v103 = vld [vmem:[%s1 + $0x7c] sm:$0xf]
  %v104 = vld [vmem:[%s1 + $0x80] sm:$0xf]
  %v105 = vld [vmem:[%s1 + $0x84] sm:$0xf]
  %v106 = vld [vmem:[%s1 + $0x88] sm:$0xf]
  %v107 = vld [vmem:[%s1 + $0x8c] sm:$0xf]
  %v108 = vld [vmem:[%s1 + $0x90] sm:$0xf]
  %v109 = vld [vmem:[%s1 + $0x94] sm:$0xf]
  %v110 = vld [vmem:[%s1 + $0x98] sm:$0xf]
  %v111 = vld [vmem:[%s1 + $0x9c] sm:$0xf]
  %v112 = vld [vmem:[%s1 + $0xa0] sm:$0xf]
  %v113 = vld [vmem:[%s1 + $0xa4] sm:$0xf]
  %v114 = vld [vmem:[%s1 + $0xa8] sm:$0xf]
  %v115 = vld [vmem:[%s1 + $0xac] sm:$0xf]
  %v116 = vld [vmem:[%s1 + $0xb0] sm:$0xf]
  %v117 = vld [vmem:[%s1 + $0xb4] sm:$0xf]
  %v118 = vld [vmem:[%s1 + $0xb8] sm:$0xf]
  %v119 = vld [vmem:[%s1 + $0xbc] sm:$0xf]
  %v120 = vld [vmem:[%s1 + $0xc0] sm:$0xf]
  %v121 = vld [vmem:[%s1 + $0xc4] sm:$0xf]
  %v122 = vld [vmem:[%s1 + $0xc8] sm:$0xf]
  %v123 = vld [vmem:[%s1 + $0xcc] sm:$0xf]
  %v124 = vld [vmem:[%s1 + $0xd0] sm:$0xf]
  %v125 = vld [vmem:[%s1 + $0xd4] sm:$0xf]
  %v126 = vld [vmem:[%s1 + $0xd8] sm:$0xf]
  %v127 = vld [vmem:[%s1 + $0xdc] sm:$0xf]
  %v128 = vld [vmem:[%s1 + $0xe0] sm:$0xf]
  %v129 = vld [vmem:[%s1 + $0xe4] sm:$0xf]
  %v130 = vld [vmem:[%s1 + $0xe8] sm:$0xf]
  %v131 = vld [vmem:[%s1 + $0xec] sm:$0xf]
  %v132 = vld [vmem:[%s1 + $0xf0] sm:$0xf]
  %v133 = vld [vmem:[%s1 + $0xf4] sm:$0xf]
  %v134 = vld [vmem:[%s1 + $0xf8] sm:$0xf]
  %v135 = vld [vmem:[%s1 + $0xfc] sm:$0xf]
  %v136 = vld [vmem:[%s1 + $0x100] sm:$0xf]
  %v137 = vld [vmem:[%s1 + $0x104] sm:$0xf]
  %v138 = vld [vmem:[%s1 + $0x108] sm:$0xf]
  %v139 = vld [vmem:[%s1 + $0x10c] sm:$0xf]
  %v140 = vld [vmem:[%s1 + $0x110] sm:$0xf]
  %v141 = vld [vmem:[%s1 + $0x114] sm:$0xf]
  %v142 = vld [vmem:[%s1 + $0x118] sm:$0xf]
  %v143 = vld [vmem:[%s1 + $0x11c] sm:$0xf]
  %v192 = vunpack.c.l.b16 %v24
  %v193 = vunpack.c.h.b16 %v24
  %v194 = vunpack.c.l.b16 %v25
  %v195 = vunpack.c.h.b16 %v25
  %v196 = vunpack.c.l.b16 %v26
  %v197 = vunpack.c.l.b16 %v27
  %v198 = vunpack.c.h.b16 %v27
  %v199 = vunpack.c.l.b16 %v28
  %v200 = vunpack.c.h.b16 %v28
  %v201 = vunpack.c.l.b16 %v29
  %v202 = vunpack.c.l.b16 %v30
  %v203 = vunpack.c.h.b16 %v30
  %v204 = vunpack.c.l.b16 %v31
  %v205 = vunpack.c.h.b16 %v31
  %v206 = vunpack.c.l.b16 %v32
  %v207 = vunpack.c.l.b16 %v33
  %v208 = vunpack.c.h.b16 %v33
  %v209 = vunpack.c.l.b16 %v34
  %v210 = vunpack.c.h.b16 %v34
  %v211 = vunpack.c.l.b16 %v35
  %v212 = vunpack.c.l.b16 %v36
  %v213 = vunpack.c.h.b16 %v36
  %v214 = vunpack.c.l.b16 %v37
  %v215 = vunpack.c.h.b16 %v37
  %v216 = vunpack.c.l.b16 %v38
  %v217 = vunpack.c.l.b16 %v39
  %v218 = vunpack.c.h.b16 %v39
  %v219 = vunpack.c.l.b16 %v40
  %v220 = vunpack.c.h.b16 %v40
  %v221 = vunpack.c.l.b16 %v41
  %v222 = vunpack.c.l.b16 %v42
  %v223 = vunpack.c.h.b16 %v42
  %v224 = vunpack.c.l.b16 %v43
  %v225 = vunpack.c.h.b16 %v43
  %v226 = vunpack.c.l.b16 %v44
  %v227 = vunpack.c.l.b16 %v45
  %v228 = vunpack.c.h.b16 %v45
  %v229 = vunpack.c.l.b16 %v46
  %v230 = vunpack.c.h.b16 %v46
  %v231 = vunpack.c.l.b16 %v47
  %v232 = vunpack.c.l.b16 %v48
  %v233 = vunpack.c.h.b16 %v48
  %v234 = vunpack.c.l.b16 %v49
  %v235 = vunpack.c.h.b16 %v49
  %v236 = vunpack.c.l.b16 %v50
  %v237 = vunpack.c.l.b16 %v51
  %v238 = vunpack.c.h.b16 %v51
  %v239 = vunpack.c.l.b16 %v52
  %v240 = vunpack.c.h.b16 %v52
  %v241 = vunpack.c.l.b16 %v53
  %v242 = vunpack.c.l.b16 %v54
  %v243 = vunpack.c.h.b16 %v54
  %v244 = vunpack.c.l.b16 %v55
  %v245 = vunpack.c.h.b16 %v55
  %v246 = vunpack.c.l.b16 %v56
  %v247 = vunpack.c.l.b16 %v57
  %v248 = vunpack.c.h.b16 %v57
  %v249 = vunpack.c.l.b16 %v58
  %v250 = vunpack.c.h.b16 %v58
  %v251 = vunpack.c.l.b16 %v59
  %v252 = vunpack.c.l.b16 %v60
  %v253 = vunpack.c.h.b16 %v60
  %v254 = vunpack.c.l.b16 %v61
  %v255 = vunpack.c.h.b16 %v61
  %v256 = vunpack.c.l.b16 %v62
  %v257 = vunpack.c.l.b16 %v63
  %v258 = vunpack.c.h.b16 %v63
  %v259 = vunpack.c.l.b16 %v64
  %v260 = vunpack.c.h.b16 %v64
  %v261 = vunpack.c.l.b16 %v65
  %v262 = vunpack.c.l.b16 %v66
  %v263 = vunpack.c.h.b16 %v66
  %v264 = vunpack.c.l.b16 %v67
  %v265 = vunpack.c.h.b16 %v67
  %v266 = vunpack.c.l.b16 %v68
  %v267 = vunpack.c.l.b16 %v69
  %v268 = vunpack.c.h.b16 %v69
  %v269 = vunpack.c.l.b16 %v70
  %v270 = vunpack.c.h.b16 %v70
  %v271 = vunpack.c.l.b16 %v71
  %v272 = vpack.c.b16 %v197, %v192
  %v273 = vpack.c.b16 %v198, %v193
  %v274 = vpack.c.b16 %v199, %v194
  %v275 = vpack.c.b16 %v200, %v195
  %v276 = vpack.c.b16 %v201, %v196
  %v277 = vpack.c.b16 %v207, %v202
  %v278 = vpack.c.b16 %v208, %v203
  %v279 = vpack.c.b16 %v209, %v204
  %v280 = vpack.c.b16 %v210, %v205
  %v281 = vpack.c.b16 %v211, %v206
  %v282 = vpack.c.b16 %v217, %v212
  %v283 = vpack.c.b16 %v218, %v213
  %v284 = vpack.c.b16 %v219, %v214
  %v285 = vpack.c.b16 %v220, %v215
  %v286 = vpack.c.b16 %v221, %v216
  %v287 = vpack.c.b16 %v227, %v222
  %v288 = vpack.c.b16 %v228, %v223
  %v289 = vpack.c.b16 %v229, %v224
  %v290 = vpack.c.b16 %v230, %v225
  %v291 = vpack.c.b16 %v231, %v226
  %v292 = vpack.c.b16 %v237, %v232
  %v293 = vpack.c.b16 %v238, %v233
  %v294 = vpack.c.b16 %v239, %v234
  %v295 = vpack.c.b16 %v240, %v235
  %v296 = vpack.c.b16 %v241, %v236
  %v297 = vpack.c.b16 %v247, %v242
  %v298 = vpack.c.b16 %v248, %v243
  %v299 = vpack.c.b16 %v249, %v244
  %v300 = vpack.c.b16 %v250, %v245
  %v301 = vpack.c.b16 %v251, %v246
  %v302 = vpack.c.b16 %v257, %v252
  %v303 = vpack.c.b16 %v258, %v253
  %v304 = vpack.c.b16 %v259, %v254
  %v305 = vpack.c.b16 %v260, %v255
  %v306 = vpack.c.b16 %v261, %v256
  %v307 = vpack.c.b16 %v267, %v262
  %v308 = vpack.c.b16 %v268, %v263
  %v309 = vpack.c.b16 %v269, %v264
  %v310 = vpack.c.b16 %v270, %v265
  %v311 = vpack.c.b16 %v271, %v266
  %v416 = vunpack.c.l.b16 %v72
  %v417 = vunpack.c.l.b16 %v73
  %v418 = vunpack.c.l.b16 %v74
  %v419 = vunpack.c.l.b16 %v75
  %v420 = vunpack.c.l.b16 %v76
  %v421 = vunpack.c.l.b16 %v77
  %v422 = vunpack.c.l.b16 %v78
  %v423 = vunpack.c.l.b16 %v79
  %v424 = vunpack.c.l.b16 %v80
  %v425 = vunpack.c.l.b16 %v81
  %v426 = vunpack.c.l.b16 %v82
  %v427 = vunpack.c.l.b16 %v83
  %v428 = vunpack.c.l.b16 %v84
  %v429 = vunpack.c.l.b16 %v85
  %v430 = vunpack.c.l.b16 %v86
  %v431 = vunpack.c.l.b16 %v87
  %v432 = vunpack.c.l.b16 %v88
  %v433 = vunpack.c.l.b16 %v89
  %v434 = vunpack.c.l.b16 %v90
  %v435 = vunpack.c.l.b16 %v91
  %v436 = vunpack.c.l.b16 %v92
  %v437 = vunpack.c.l.b16 %v93
  %v438 = vunpack.c.l.b16 %v94
  %v439 = vunpack.c.l.b16 %v95
  %v440 = vunpack.c.l.b16 %v96
  %v441 = vunpack.c.l.b16 %v97
  %v442 = vunpack.c.l.b16 %v98
  %v443 = vunpack.c.l.b16 %v99
  %v444 = vunpack.c.l.b16 %v100
  %v445 = vunpack.c.l.b16 %v101
  %v446 = vunpack.c.l.b16 %v102
  %v447 = vunpack.c.l.b16 %v103
  %v448 = vunpack.c.l.b16 %v104
  %v449 = vunpack.c.l.b16 %v105
  %v450 = vunpack.c.l.b16 %v106
  %v451 = vunpack.c.l.b16 %v107
  %v452 = vunpack.c.l.b16 %v108
  %v453 = vunpack.c.l.b16 %v109
  %v454 = vunpack.c.l.b16 %v110
  %v455 = vunpack.c.l.b16 %v111
  %v456 = vunpack.c.l.b16 %v112
  %v457 = vunpack.c.l.b16 %v113
  %v458 = vunpack.c.l.b16 %v114
  %v459 = vunpack.c.l.b16 %v115
  %v460 = vunpack.c.l.b16 %v116
  %v461 = vunpack.c.l.b16 %v117
  %v462 = vunpack.c.l.b16 %v118
  %v463 = vunpack.c.l.b16 %v119
  %v464 = vunpack.c.l.b16 %v120
  %v465 = vunpack.c.l.b16 %v121
  %v466 = vunpack.c.l.b16 %v122
  %v467 = vunpack.c.l.b16 %v123
  %v468 = vunpack.c.l.b16 %v124
  %v469 = vunpack.c.l.b16 %v125
  %v470 = vunpack.c.l.b16 %v126
  %v471 = vunpack.c.l.b16 %v127
  %v472 = vunpack.c.l.b16 %v128
  %v473 = vunpack.c.l.b16 %v129
  %v474 = vunpack.c.l.b16 %v130
  %v475 = vunpack.c.l.b16 %v131
  %v476 = vunpack.c.l.b16 %v132
  %v477 = vunpack.c.l.b16 %v133
  %v478 = vunpack.c.l.b16 %v134
  %v479 = vunpack.c.l.b16 %v135
  %v480 = vunpack.c.l.b16 %v136
  %v481 = vunpack.c.l.b16 %v137
  %v482 = vunpack.c.l.b16 %v138
  %v483 = vunpack.c.l.b16 %v139
  %v484 = vunpack.c.l.b16 %v140
  %v485 = vunpack.c.l.b16 %v141
  %v486 = vunpack.c.l.b16 %v142
  %v487 = vunpack.c.l.b16 %v143
  %v488 = vpack.c.b16 %v417, %v416
  %v489 = vpack.c.b16 %v419, %v418
  %v490 = vpack.c.b16 %v421, %v420
  %v491 = vpack.c.b16 %v423, %v422
  %v492 = vpack.c.b16 %v425, %v424
  %v493 = vpack.c.b16 %v427, %v426
  %v494 = vpack.c.b16 %v429, %v428
  %v495 = vpack.c.b16 %v431, %v430
  %v496 = vpack.c.b16 %v433, %v432
  %v497 = vpack.c.b16 %v435, %v434
  %v498 = vpack.c.b16 %v437, %v436
  %v499 = vpack.c.b16 %v439, %v438
  %v500 = vpack.c.b16 %v441, %v440
  %v501 = vpack.c.b16 %v443, %v442
  %v502 = vpack.c.b16 %v445, %v444
  %v503 = vpack.c.b16 %v447, %v446
  %v504 = vpack.c.b16 %v449, %v448
  %v505 = vpack.c.b16 %v451, %v450
  %v506 = vpack.c.b16 %v453, %v452
  %v507 = vpack.c.b16 %v455, %v454
  %v508 = vpack.c.b16 %v457, %v456
  %v509 = vpack.c.b16 %v459, %v458
  %v510 = vpack.c.b16 %v461, %v460
  %v511 = vpack.c.b16 %v463, %v462
  %v512 = vpack.c.b16 %v465, %v464
  %v513 = vpack.c.b16 %v467, %v466
  %v514 = vpack.c.b16 %v469, %v468
  %v515 = vpack.c.b16 %v471, %v470
  %v516 = vpack.c.b16 %v473, %v472
  %v517 = vpack.c.b16 %v475, %v474
  %v518 = vpack.c.b16 %v477, %v476
  %v519 = vpack.c.b16 %v479, %v478
  %v520 = vpack.c.b16 %v481, %v480
  %v521 = vpack.c.b16 %v483, %v482
  %v522 = vpack.c.b16 %v485, %v484
  %v523 = vpack.c.b16 %v487, %v486
  %vm560 = vcmask 523264
  %v562 = vsel %vm560, %v276, 0
  %v565 = vsel %vm560, %v281, 0
  %v568 = vsel %vm560, %v286, 0
  %v571 = vsel %vm560, %v291, 0
  %v574 = vsel %vm560, %v296, 0
  %v577 = vsel %vm560, %v301, 0
  %v580 = vsel %vm560, %v306, 0
  %v583 = vsel %vm560, %v311, 0
  %585 = vmatprep.subr.bf16.mxu0 0
  %586 = vmatpush1.bf16.msra.mxu0 %v495
  %587 = vmatprep.subr.bf16.mxu0 0
  %588 = vmatpush1.bf16.msra.mxu0 %v494
  %589 = vmatprep.subr.bf16.mxu0 0
  %590 = vmatpush1.bf16.msra.mxu0 %v493
  %591 = vmatprep.subr.bf16.mxu0 0
  %592 = vmatpush1.bf16.msra.mxu0 %v492
  %593 = vmatprep.subr.bf16.mxu0 0
  %594 = vmatpush1.bf16.msra.mxu0 %v491
  %595 = vmatprep.subr.bf16.mxu0 0
  %596 = vmatpush1.bf16.msra.mxu0 %v490
  %597 = vmatprep.subr.bf16.mxu0 0
  %598 = vmatpush1.bf16.msra.mxu0 %v489
  %599 = vmatprep.subr.bf16.mxu0 0
  %600 = vmatpush1.bf16.msra.mxu0 %v488
  %601 = vmatprep.subr.bf16.mxu0 0
  %602 = vmatpush2.bf16.msra.mxu0 %v503
  %603 = vmatprep.subr.bf16.mxu0 0
  %604 = vmatpush2.bf16.msra.mxu0 %v502
  %605 = vmatprep.subr.bf16.mxu0 0
  %606 = vmatpush2.bf16.msra.mxu0 %v501
  %607 = vmatprep.subr.bf16.mxu0 0
  %608 = vmatpush2.bf16.msra.mxu0 %v500
  %609 = vmatprep.subr.bf16.mxu0 0
  %610 = vmatpush2.bf16.msra.mxu0 %v499
  %611 = vmatprep.subr.bf16.mxu0 0
  %612 = vmatpush2.bf16.msra.mxu0 %v498
  %613 = vmatprep.subr.bf16.mxu0 0
  %614 = vmatpush2.bf16.msra.mxu0 %v497
  %615 = vmatprep.subr.bf16.mxu0 0
  %616 = vmatpush2.bf16.msra.mxu0 %v496
  %617 = vmatprep.mubr.bf16.mxu0 %v273
  %618 = vmatmul.mubr.bf16.gmra.mxu0 %v272
  %v619 = vpop.f32.mrf.mxu0
  %v620 = vadd.f32 0.0, %v619
  %v621 = vpop.f32.mrf.mxu0
  %v622 = vpop.f32.mrf.mxu0
  %v623 = vadd.f32 0.0, %v622
  %v624 = vpop.f32.mrf.mxu0
  %625 = vmatprep.mubr.bf16.mxu0 %v278
  %626 = vmatmul.mubr.bf16.gmra.mxu0 %v277
  %v627 = vpop.f32.mrf.mxu0
  %v628 = vadd.f32 0.0, %v627
  %v629 = vpop.f32.mrf.mxu0
  %v630 = vpop.f32.mrf.mxu0
  %v631 = vadd.f32 0.0, %v630
  %v632 = vpop.f32.mrf.mxu0
  %633 = vmatprep.mubr.bf16.mxu0 %v283
  %634 = vmatmul.mubr.bf16.gmra.mxu0 %v282
  %v635 = vpop.f32.mrf.mxu0
  %v636 = vadd.f32 0.0, %v635
  %v637 = vpop.f32.mrf.mxu0
  %v638 = vpop.f32.mrf.mxu0
  %v639 = vadd.f32 0.0, %v638
  %v640 = vpop.f32.mrf.mxu0
  %641 = vmatprep.mubr.bf16.mxu0 %v288
  %642 = vmatmul.mubr.bf16.gmra.mxu0 %v287
  %v643 = vpop.f32.mrf.mxu0
  %v644 = vadd.f32 0.0, %v643
  %v645 = vpop.f32.mrf.mxu0
  %v646 = vpop.f32.mrf.mxu0
  %v647 = vadd.f32 0.0, %v646
  %v648 = vpop.f32.mrf.mxu0
  %649 = vmatprep.mubr.bf16.mxu0 %v293
  %650 = vmatmul.mubr.bf16.gmra.mxu0 %v292
  %v651 = vpop.f32.mrf.mxu0
  %v652 = vadd.f32 0.0, %v651
  %v653 = vpop.f32.mrf.mxu0
  %v654 = vpop.f32.mrf.mxu0
  %v655 = vadd.f32 0.0, %v654
  %v656 = vpop.f32.mrf.mxu0
  %657 = vmatprep.mubr.bf16.mxu0 %v298
  %658 = vmatmul.mubr.bf16.gmra.mxu0 %v297
  %v659 = vpop.f32.mrf.mxu0
  %v660 = vadd.f32 0.0, %v659
  %v661 = vpop.f32.mrf.mxu0
  %v662 = vpop.f32.mrf.mxu0
  %v663 = vadd.f32 0.0, %v662
  %v664 = vpop.f32.mrf.mxu0
  %665 = vmatprep.mubr.bf16.mxu0 %v303
  %666 = vmatmul.mubr.bf16.gmra.mxu0 %v302
  %v667 = vpop.f32.mrf.mxu0
  %v668 = vadd.f32 0.0, %v667
  %v669 = vpop.f32.mrf.mxu0
  %v670 = vpop.f32.mrf.mxu0
  %v671 = vadd.f32 0.0, %v670
  %v672 = vpop.f32.mrf.mxu0
  %673 = vmatprep.mubr.bf16.mxu0 %v308
  %674 = vmatmul.mubr.bf16.gmra.mxu0 %v307
  %v675 = vpop.f32.mrf.mxu0
  %v676 = vadd.f32 0.0, %v675
  %v677 = vpop.f32.mrf.mxu0
  %v678 = vpop.f32.mrf.mxu0
  %v679 = vadd.f32 0.0, %v678
  %v680 = vpop.f32.mrf.mxu0
  %681 = vdwg.mxu0
  %682 = vmatprep.subr.bf16.mxu0 0
  %683 = vmatpush1.bf16.msra.mxu0 %v511
  %684 = vmatprep.subr.bf16.mxu0 0
  %685 = vmatpush1.bf16.msra.mxu0 %v510
  %686 = vmatprep.subr.bf16.mxu0 0
  %687 = vmatpush1.bf16.msra.mxu0 %v509
  %688 = vmatprep.subr.bf16.mxu0 0
  %689 = vmatpush1.bf16.msra.mxu0 %v508
  %690 = vmatprep.subr.bf16.mxu0 0
  %691 = vmatpush1.bf16.msra.mxu0 %v507
  %692 = vmatprep.subr.bf16.mxu0 0
  %693 = vmatpush1.bf16.msra.mxu0 %v506
  %694 = vmatprep.subr.bf16.mxu0 0
  %695 = vmatpush1.bf16.msra.mxu0 %v505
  %696 = vmatprep.subr.bf16.mxu0 0
  %697 = vmatpush1.bf16.msra.mxu0 %v504
  %698 = vmatprep.subr.bf16.mxu0 0
  %699 = vmatpush2.bf16.msra.mxu0 %v519
  %700 = vmatprep.subr.bf16.mxu0 0
  %701 = vmatpush2.bf16.msra.mxu0 %v518
  %702 = vmatprep.subr.bf16.mxu0 0
  %703 = vmatpush2.bf16.msra.mxu0 %v517
  %704 = vmatprep.subr.bf16.mxu0 0
  %705 = vmatpush2.bf16.msra.mxu0 %v516
  %706 = vmatprep.subr.bf16.mxu0 0
  %707 = vmatpush2.bf16.msra.mxu0 %v515
  %708 = vmatprep.subr.bf16.mxu0 0
  %709 = vmatpush2.bf16.msra.mxu0 %v514
  %710 = vmatprep.subr.bf16.mxu0 0
  %711 = vmatpush2.bf16.msra.mxu0 %v513
  %712 = vmatprep.subr.bf16.mxu0 0
  %713 = vmatpush2.bf16.msra.mxu0 %v512
  %714 = vmatprep.mubr.bf16.mxu0 %v275
  %715 = vmatmul.mubr.bf16.gmra.mxu0 %v274
  %v716 = vpop.f32.mrf.mxu0
  %v717 = vadd.f32 %v620, %v716
  %v718 = vpop.f32.mrf.mxu0
  %v719 = vpop.f32.mrf.mxu0
  %v720 = vadd.f32 %v623, %v719
  %v721 = vpop.f32.mrf.mxu0
  %722 = vmatprep.mubr.bf16.mxu0 %v280
  %723 = vmatmul.mubr.bf16.gmra.mxu0 %v279
  %v724 = vpop.f32.mrf.mxu0
  %v725 = vadd.f32 %v628, %v724
  %v726 = vpop.f32.mrf.mxu0
  %v727 = vpop.f32.mrf.mxu0
  %v728 = vadd.f32 %v631, %v727
  %v729 = vpop.f32.mrf.mxu0
  %730 = vmatprep.mubr.bf16.mxu0 %v285
  %731 = vmatmul.mubr.bf16.gmra.mxu0 %v284
  %v732 = vpop.f32.mrf.mxu0
  %v733 = vadd.f32 %v636, %v732
  %v734 = vpop.f32.mrf.mxu0
  %v735 = vpop.f32.mrf.mxu0
  %v736 = vadd.f32 %v639, %v735
  %v737 = vpop.f32.mrf.mxu0
  %738 = vmatprep.mubr.bf16.mxu0 %v290
  %739 = vmatmul.mubr.bf16.gmra.mxu0 %v289
  %v740 = vpop.f32.mrf.mxu0
  %v741 = vadd.f32 %v644, %v740
  %v742 = vpop.f32.mrf.mxu0
  %v743 = vpop.f32.mrf.mxu0
  %v744 = vadd.f32 %v647, %v743
  %v745 = vpop.f32.mrf.mxu0
  %746 = vmatprep.mubr.bf16.mxu0 %v295
  %747 = vmatmul.mubr.bf16.gmra.mxu0 %v294
  %v748 = vpop.f32.mrf.mxu0
  %v749 = vadd.f32 %v652, %v748
  %v750 = vpop.f32.mrf.mxu0
  %v751 = vpop.f32.mrf.mxu0
  %v752 = vadd.f32 %v655, %v751
  %v753 = vpop.f32.mrf.mxu0
  %754 = vmatprep.mubr.bf16.mxu0 %v300
  %755 = vmatmul.mubr.bf16.gmra.mxu0 %v299
  %v756 = vpop.f32.mrf.mxu0
  %v757 = vadd.f32 %v660, %v756
  %v758 = vpop.f32.mrf.mxu0
  %v759 = vpop.f32.mrf.mxu0
  %v760 = vadd.f32 %v663, %v759
  %v761 = vpop.f32.mrf.mxu0
  %762 = vmatprep.mubr.bf16.mxu0 %v305
  %763 = vmatmul.mubr.bf16.gmra.mxu0 %v304
  %v764 = vpop.f32.mrf.mxu0
  %v765 = vadd.f32 %v668, %v764
  %v766 = vpop.f32.mrf.mxu0
  %v767 = vpop.f32.mrf.mxu0
  %v768 = vadd.f32 %v671, %v767
  %v769 = vpop.f32.mrf.mxu0
  %770 = vmatprep.mubr.bf16.mxu0 %v310
  %771 = vmatmul.mubr.bf16.gmra.mxu0 %v309
  %v772 = vpop.f32.mrf.mxu0
  %v773 = vadd.f32 %v676, %v772
  %v774 = vpop.f32.mrf.mxu0
  %v775 = vpop.f32.mrf.mxu0
  %v776 = vadd.f32 %v679, %v775
  %v777 = vpop.f32.mrf.mxu0
  %778 = vdwg.mxu0
  %779 = vmatprep.subr.bf16.mxu0 0
  %780 = vmatpush1.bf16.msra.mxu0 0
  %781 = vmatprep.subr.bf16.mxu0 0
  %782 = vmatpush1.bf16.msra.mxu0 0
  %783 = vmatprep.subr.bf16.mxu0 0
  %784 = vmatpush1.bf16.msra.mxu0 0
  %785 = vmatprep.subr.bf16.mxu0 0
  %786 = vmatpush1.bf16.msra.mxu0 0
  %787 = vmatprep.subr.bf16.mxu0 0
  %788 = vmatpush1.bf16.msra.mxu0 %v523
  %789 = vmatprep.subr.bf16.mxu0 0
  %790 = vmatpush1.bf16.msra.mxu0 %v522
  %791 = vmatprep.subr.bf16.mxu0 0
  %792 = vmatpush1.bf16.msra.mxu0 %v521
  %793 = vmatprep.subr.bf16.mxu0 0
  %794 = vmatpush1.bf16.msra.mxu0 %v520
  %795 = vmatprep.subr.bf16.mxu0 0
  %796 = vmatpush2.bf16.msra.mxu0 0
  %797 = vmatprep.subr.bf16.mxu0 0
  %798 = vmatpush2.bf16.msra.mxu0 0
  %799 = vmatprep.subr.bf16.mxu0 0
  %800 = vmatpush2.bf16.msra.mxu0 0
  %801 = vmatprep.subr.bf16.mxu0 0
  %802 = vmatpush2.bf16.msra.mxu0 0
  %803 = vmatprep.subr.bf16.mxu0 0
  %804 = vmatpush2.bf16.msra.mxu0 0
  %805 = vmatprep.subr.bf16.mxu0 0
  %806 = vmatpush2.bf16.msra.mxu0 0
  %807 = vmatprep.subr.bf16.mxu0 0
  %808 = vmatpush2.bf16.msra.mxu0 0
  %809 = vmatprep.subr.bf16.mxu0 0
  %810 = vmatpush2.bf16.msra.mxu0 0
  %811 = vmatprep.mubr.bf16.mxu0 0
  %812 = vmatmul.mubr.bf16.gmra.mxu0 %v562
  %v813 = vpop.f32.mrf.mxu0
  %v814 = vadd.f32 %v717, %v813
  %v815 = vpop.f32.mrf.mxu0
  %v816 = vpop.f32.mrf.mxu0
  %v817 = vadd.f32 %v720, %v816
  %v818 = vpop.f32.mrf.mxu0
  %819 = vmatprep.mubr.bf16.mxu0 0
  %820 = vmatmul.mubr.bf16.gmra.mxu0 %v565
  %v821 = vpop.f32.mrf.mxu0
  %v822 = vadd.f32 %v725, %v821
  %v823 = vpop.f32.mrf.mxu0
  %v824 = vpop.f32.mrf.mxu0
  %v825 = vadd.f32 %v728, %v824
  %v826 = vpop.f32.mrf.mxu0
  %827 = vmatprep.mubr.bf16.mxu0 0
  %828 = vmatmul.mubr.bf16.gmra.mxu0 %v568
  %v829 = vpop.f32.mrf.mxu0
  %v830 = vadd.f32 %v733, %v829
  %v831 = vpop.f32.mrf.mxu0
  %v832 = vpop.f32.mrf.mxu0
  %v833 = vadd.f32 %v736, %v832
  %v834 = vpop.f32.mrf.mxu0
  %835 = vmatprep.mubr.bf16.mxu0 0
  %836 = vmatmul.mubr.bf16.gmra.mxu0 %v571
  %v837 = vpop.f32.mrf.mxu0
  %v838 = vadd.f32 %v741, %v837
  %v839 = vpop.f32.mrf.mxu0
  %v840 = vpop.f32.mrf.mxu0
  %v841 = vadd.f32 %v744, %v840
  %v842 = vpop.f32.mrf.mxu0
  %843 = vmatprep.mubr.bf16.mxu0 0
  %844 = vmatmul.mubr.bf16.gmra.mxu0 %v574
  %v845 = vpop.f32.mrf.mxu0
  %v846 = vadd.f32 %v749, %v845
  %v847 = vpop.f32.mrf.mxu0
  %v848 = vpop.f32.mrf.mxu0
  %v849 = vadd.f32 %v752, %v848
  %v850 = vpop.f32.mrf.mxu0
  %851 = vmatprep.mubr.bf16.mxu0 0
  %852 = vmatmul.mubr.bf16.gmra.mxu0 %v577
  %v853 = vpop.f32.mrf.mxu0
  %v854 = vadd.f32 %v757, %v853
  %v855 = vpop.f32.mrf.mxu0
  %v856 = vpop.f32.mrf.mxu0
  %v857 = vadd.f32 %v760, %v856
  %v858 = vpop.f32.mrf.mxu0
  %859 = vmatprep.mubr.bf16.mxu0 0
  %860 = vmatmul.mubr.bf16.gmra.mxu0 %v580
  %v861 = vpop.f32.mrf.mxu0
  %v862 = vadd.f32 %v765, %v861
  %v863 = vpop.f32.mrf.mxu0
  %v864 = vpop.f32.mrf.mxu0
  %v865 = vadd.f32 %v768, %v864
  %v866 = vpop.f32.mrf.mxu0
  %867 = vmatprep.mubr.bf16.mxu0 0
  %868 = vmatmul.mubr.bf16.gmra.mxu0 %v583
  %v869 = vpop.f32.mrf.mxu0
  %v870 = vadd.f32 %v773, %v869
  %v871 = vpop.f32.mrf.mxu0
  %v872 = vpop.f32.mrf.mxu0
  %v873 = vadd.f32 %v776, %v872
  %v874 = vpop.f32.mrf.mxu0
  %875 = vdwg.mxu0
  %v876 = vld [vmem:[%s2] sm:$0x1]
  %v878 = vlaneseq
  %v879 = vshrl.u32 %v878, 7
  %v880 = vsub.s32 0, %v879
  %v881 = vrot.slane %v876, %v880
  %v883 = vmul.f32 %v814, %v881
  %v884 = vmul.f32 %v817, %v881
  %v885 = vmul.f32 %v822, %v881
  %v886 = vmul.f32 %v825, %v881
  %v887 = vmul.f32 %v830, %v881
  %v888 = vmul.f32 %v833, %v881
  %v889 = vmul.f32 %v838, %v881
  %v890 = vmul.f32 %v841, %v881
  %v891 = vmul.f32 %v846, %v881
  %v892 = vmul.f32 %v849, %v881
  %v893 = vmul.f32 %v854, %v881
  %v894 = vmul.f32 %v857, %v881
  %v895 = vmul.f32 %v862, %v881
  %v896 = vmul.f32 %v865, %v881
  %v897 = vmul.f32 %v870, %v881
  %v898 = vmul.f32 %v873, %v881
  %v899 = vld [vmem:[%s3] sm:$0x1]
  %v901 = vlaneseq
  %v902 = vshrl.u32 %v901, 7
  %v903 = vsub.s32 0, %v902
  %v904 = vrot.slane %v899, %v903
  %v906 = vadd.f32 %v883, %v904
  %v907 = vadd.f32 %v884, %v904
  %v908 = vadd.f32 %v885, %v904
  %v909 = vadd.f32 %v886, %v904
  %v910 = vadd.f32 %v887, %v904
  %v911 = vadd.f32 %v888, %v904
  %v912 = vadd.f32 %v889, %v904
  %v913 = vadd.f32 %v890, %v904
  %v914 = vadd.f32 %v891, %v904
  %v915 = vadd.f32 %v892, %v904
  %v916 = vadd.f32 %v893, %v904
  %v917 = vadd.f32 %v894, %v904
  %v918 = vadd.f32 %v895, %v904
  %v919 = vadd.f32 %v896, %v904
  %v920 = vadd.f32 %v897, %v904
  %v921 = vadd.f32 %v898, %v904
  %v922 = vld [vmem:[%s5] sm:$0xff]
  %v923 = vld [vmem:[%s5 + $0x8] sm:$0xff]
  %v924 = vld [vmem:[%s5 + $0x10] sm:$0xff]
  %v925 = vld [vmem:[%s5 + $0x18] sm:$0xff]
  %v926 = vld [vmem:[%s5 + $0x20] sm:$0xff]
  %v927 = vld [vmem:[%s5 + $0x28] sm:$0xff]
  %v928 = vld [vmem:[%s5 + $0x30] sm:$0xff]
  %v929 = vld [vmem:[%s5 + $0x38] sm:$0xff]
  %v930 = vld [vmem:[%s5 + $0x40] sm:$0xff]
  %v931 = vld [vmem:[%s5 + $0x48] sm:$0xff]
  %v932 = vld [vmem:[%s5 + $0x50] sm:$0xff]
  %v933 = vld [vmem:[%s5 + $0x58] sm:$0xff]
  %v934 = vld [vmem:[%s5 + $0x60] sm:$0xff]
  %v935 = vld [vmem:[%s5 + $0x68] sm:$0xff]
  %v936 = vld [vmem:[%s5 + $0x70] sm:$0xff]
  %v937 = vld [vmem:[%s5 + $0x78] sm:$0xff]
  %v938 = vadd.f32 %v906, %v922
  %v939 = vadd.f32 %v907, %v923
  %v940 = vadd.f32 %v908, %v924
  %v941 = vadd.f32 %v909, %v925
  %v942 = vadd.f32 %v910, %v926
  %v943 = vadd.f32 %v911, %v927
  %v944 = vadd.f32 %v912, %v928
  %v945 = vadd.f32 %v913, %v929
  %v946 = vadd.f32 %v914, %v930
  %v947 = vadd.f32 %v915, %v931
  %v948 = vadd.f32 %v916, %v932
  %v949 = vadd.f32 %v917, %v933
  %v950 = vadd.f32 %v918, %v934
  %v951 = vadd.f32 %v919, %v935
  %v952 = vadd.f32 %v920, %v936
  %v953 = vadd.f32 %v921, %v937
  %v954 = vld [vmem:[%s4] sm:$0x1]
  %v955 = vmax.f32 %v938, 0.0
  %v956 = vmax.f32 %v939, 0.0
  %v957 = vmax.f32 %v940, 0.0
  %v958 = vmax.f32 %v941, 0.0
  %v959 = vmax.f32 %v942, 0.0
  %v960 = vmax.f32 %v943, 0.0
  %v961 = vmax.f32 %v944, 0.0
  %v962 = vmax.f32 %v945, 0.0
  %v963 = vmax.f32 %v946, 0.0
  %v964 = vmax.f32 %v947, 0.0
  %v965 = vmax.f32 %v948, 0.0
  %v966 = vmax.f32 %v949, 0.0
  %v967 = vmax.f32 %v950, 0.0
  %v968 = vmax.f32 %v951, 0.0
  %v969 = vmax.f32 %v952, 0.0
  %v970 = vmax.f32 %v953, 0.0
  %v972 = vlaneseq
  %v973 = vshrl.u32 %v972, 7
  %v974 = vsub.s32 0, %v973
  %v975 = vrot.slane %v954, %v974
  %v977 = vmul.f32 %v975, %v955
  %v978 = vmul.f32 %v975, %v956
  %v979 = vmul.f32 %v975, %v957
  %v980 = vmul.f32 %v975, %v958
  %v981 = vmul.f32 %v975, %v959
  %v982 = vmul.f32 %v975, %v960
  %v983 = vmul.f32 %v975, %v961
  %v984 = vmul.f32 %v975, %v962
  %v985 = vmul.f32 %v975, %v963
  %v986 = vmul.f32 %v975, %v964
  %v987 = vmul.f32 %v975, %v965
  %v988 = vmul.f32 %v975, %v966
  %v989 = vmul.f32 %v975, %v967
  %v990 = vmul.f32 %v975, %v968
  %v991 = vmul.f32 %v975, %v969
  %v992 = vmul.f32 %v975, %v970
  %v993 = vsub.f32 1.0, %v954
  %v995 = vlaneseq
  %v996 = vshrl.u32 %v995, 7
  %v997 = vsub.s32 0, %v996
  %v998 = vrot.slane %v993, %v997
  %v1000 = vmul.f32 %v998, %v938
  %v1001 = vmul.f32 %v998, %v939
  %v1002 = vmul.f32 %v998, %v940
  %v1003 = vmul.f32 %v998, %v941
  %v1004 = vmul.f32 %v998, %v942
  %v1005 = vmul.f32 %v998, %v943
  %v1006 = vmul.f32 %v998, %v944
  %v1007 = vmul.f32 %v998, %v945
  %v1008 = vmul.f32 %v998, %v946
  %v1009 = vmul.f32 %v998, %v947
  %v1010 = vmul.f32 %v998, %v948
  %v1011 = vmul.f32 %v998, %v949
  %v1012 = vmul.f32 %v998, %v950
  %v1013 = vmul.f32 %v998, %v951
  %v1014 = vmul.f32 %v998, %v952
  %v1015 = vmul.f32 %v998, %v953
  %v1016 = vadd.f32 %v977, %v1000
  %v1017 = vadd.f32 %v978, %v1001
  %v1018 = vadd.f32 %v979, %v1002
  %v1019 = vadd.f32 %v980, %v1003
  %v1020 = vadd.f32 %v981, %v1004
  %v1021 = vadd.f32 %v982, %v1005
  %v1022 = vadd.f32 %v983, %v1006
  %v1023 = vadd.f32 %v984, %v1007
  %v1024 = vadd.f32 %v985, %v1008
  %v1025 = vadd.f32 %v986, %v1009
  %v1026 = vadd.f32 %v987, %v1010
  %v1027 = vadd.f32 %v988, %v1011
  %v1028 = vadd.f32 %v989, %v1012
  %v1029 = vadd.f32 %v990, %v1013
  %v1030 = vadd.f32 %v991, %v1014
  %v1031 = vadd.f32 %v992, %v1015
  %1032 = vst.msk [vmem:[%s6] sm:$0xff] %vm560, %v1016
  %1033 = vst.msk [vmem:[%s6 + $0x8] sm:$0xff] %vm560, %v1017
  %1034 = vst.msk [vmem:[%s6 + $0x10] sm:$0xff] %vm560, %v1018
  %1035 = vst.msk [vmem:[%s6 + $0x18] sm:$0xff] %vm560, %v1019
  %1036 = vst.msk [vmem:[%s6 + $0x20] sm:$0xff] %vm560, %v1020
  %1037 = vst.msk [vmem:[%s6 + $0x28] sm:$0xff] %vm560, %v1021
  %1038 = vst.msk [vmem:[%s6 + $0x30] sm:$0xff] %vm560, %v1022
  %1039 = vst.msk [vmem:[%s6 + $0x38] sm:$0xff] %vm560, %v1023
  %1040 = vst.msk [vmem:[%s6 + $0x40] sm:$0xff] %vm560, %v1024
  %1041 = vst.msk [vmem:[%s6 + $0x48] sm:$0xff] %vm560, %v1025
  %1042 = vst.msk [vmem:[%s6 + $0x50] sm:$0xff] %vm560, %v1026
  %1043 = vst.msk [vmem:[%s6 + $0x58] sm:$0xff] %vm560, %v1027
  %1044 = vst.msk [vmem:[%s6 + $0x60] sm:$0xff] %vm560, %v1028
  %1045 = vst.msk [vmem:[%s6 + $0x68] sm:$0xff] %vm560, %v1029
  %1046 = vst.msk [vmem:[%s6 + $0x70] sm:$0xff] %vm560, %v1030
  %1047 = vst.msk [vmem:[%s6 + $0x78] sm:$0xff] %vm560, %v1031
  // Predicated region
  $region26: #{forward.5} parent=0 // pred_check
    _
  $region27: #{forward.5} parent=0 // pred_check_branch
    %1049 = sbr.rel (0) target = $region29
  $region28: #{forward.5} parent=0 // pred_region
    _
  $region29: #{forward.5} parent=0 // pred_fallthru
    _
  // Predicated region
  $region30: #{forward.5} parent=0 // pred_check
    _
  $region31: #{forward.5} parent=0 // pred_check_branch
    %1051 = sbr.rel (0) target = $region33
  $region32: #{forward.5} parent=0 // pred_region
    _
  $region33: #{forward.5} parent=0 // pred_fallthru
    _

// kernel: forward.6
$region0: #{forward.6}
  #allocation0 [shape = 'u32[]', space=smem, size = 0x4, offset = 0x4, fixed_abs, tag = 'smem constant byte address 0x4 - core index']
  #allocation1 [shape = 'u32[144,128]{1,0:T(1,128)}', space=vmem, size = 0x12000, scoped, tag = 'internal scratch']
  %s0 = inlined_call_operand.vmem [shape: bf16[128,576], index: 0, kind: input, shape index: {}]
  %s1 = inlined_call_operand.vmem [shape: bf16[576,64], index: 1, kind: input, shape index: {}]
  %s2 = inlined_call_operand.vmem [shape: f32[1,64], index: 2, kind: input, shape index: {}]
  %s3 = inlined_call_operand.vmem [shape: f32[1,64], index: 3, kind: input, shape index: {}]
  %s4 = inlined_call_operand.vmem [shape: f32[1,64], index: 4, kind: input, shape index: {}]
  %s5 = inlined_call_operand.vmem [shape: f32[128,64], index: 5, kind: output, shape index: {}]
  %s6 = sld [smem:[#allocation0]]
  $region30: #{forward.6} parent=0
    _
  %s8 = ssub.s32 1, %s6
  %s9 = scalar_select 0, %s8, %s6
  // Predicated region
  $region2: #{forward.6} parent=0 // pred_check
    _
  $region3: #{forward.6} parent=0 // pred_check_branch
    %11 = sbr.rel (0) target = $region5
  $region4: #{forward.6} parent=0 // pred_region
    _
  $region5: #{forward.6} parent=0 // pred_fallthru
    _
  // Predicated region
  $region6: #{forward.6} parent=0 // pred_check
    _
  $region7: #{forward.6} parent=0 // pred_check_branch
    %13 = sbr.rel (0) target = $region9
  $region8: #{forward.6} parent=0 // pred_region
    _
  $region9: #{forward.6} parent=0 // pred_fallthru
    _
  // Predicated region
  $region10: #{forward.6} parent=0 // pred_check
    _
  $region11: #{forward.6} parent=0 // pred_check_branch
    %15 = sbr.rel (0) target = $region13
  $region12: #{forward.6} parent=0 // pred_region
    _
  $region13: #{forward.6} parent=0 // pred_fallthru
    _
  // Predicated region
  $region14: #{forward.6} parent=0 // pred_check
    _
  $region15: #{forward.6} parent=0 // pred_check_branch
    %17 = sbr.rel (0) target = $region17
  $region16: #{forward.6} parent=0 // pred_region
    _
  $region17: #{forward.6} parent=0 // pred_fallthru
    _
  // Predicated region
  $region18: #{forward.6} parent=0 // pred_check
    _
  $region19: #{forward.6} parent=0 // pred_check_branch
    %19 = sbr.rel (0) target = $region21
  $region20: #{forward.6} parent=0 // pred_region
    _
  $region21: #{forward.6} parent=0 // pred_fallthru
    _
  %v21 = vld [vmem:[%s0] sm:$0xff]
  %v22 = vld [vmem:[%s0 + $0x8] sm:$0xff]
  %v23 = vld [vmem:[%s0 + $0x10] sm:$0xf]
  %v24 = vld [vmem:[%s0 + $0x14] sm:$0xff]
  %v25 = vld [vmem:[%s0 + $0x1c] sm:$0xff]
  %v26 = vld [vmem:[%s0 + $0x24] sm:$0xf]
  %v27 = vld [vmem:[%s0 + $0x28] sm:$0xff]
  %v28 = vld [vmem:[%s0 + $0x30] sm:$0xff]
  %v29 = vld [vmem:[%s0 + $0x38] sm:$0xf]
  %v30 = vld [vmem:[%s0 + $0x3c] sm:$0xff]
  %v31 = vld [vmem:[%s0 + $0x44] sm:$0xff]
  %v32 = vld [vmem:[%s0 + $0x4c] sm:$0xf]
  %v33 = vld [vmem:[%s0 + $0x50] sm:$0xff]
  %v34 = vld [vmem:[%s0 + $0x58] sm:$0xff]
  %v35 = vld [vmem:[%s0 + $0x60] sm:$0xf]
  %v36 = vld [vmem:[%s0 + $0x64] sm:$0xff]
  %v37 = vld [vmem:[%s0 + $0x6c] sm:$0xff]
  %v38 = vld [vmem:[%s0 + $0x74] sm:$0xf]
  %v39 = vld [vmem:[%s0 + $0x78] sm:$0xff]
  %v40 = vld [vmem:[%s0 + $0x80] sm:$0xff]
  %v41 = vld [vmem:[%s0 + $0x88] sm:$0xf]
  %v42 = vld [vmem:[%s0 + $0x8c] sm:$0xff]
  %v43 = vld [vmem:[%s0 + $0x94] sm:$0xff]
  %v44 = vld [vmem:[%s0 + $0x9c] sm:$0xf]
  %v45 = vld [vmem:[%s0 + $0xa0] sm:$0xff]
  %v46 = vld [vmem:[%s0 + $0xa8] sm:$0xff]
  %v47 = vld [vmem:[%s0 + $0xb0] sm:$0xf]
  %v48 = vld [vmem:[%s0 + $0xb4] sm:$0xff]
  %v49 = vld [vmem:[%s0 + $0xbc] sm:$0xff]
  %v50 = vld [vmem:[%s0 + $0xc4] sm:$0xf]
  %v51 = vld [vmem:[%s0 + $0xc8] sm:$0xff]
  %v52 = vld [vmem:[%s0 + $0xd0] sm:$0xff]
  %v53 = vld [vmem:[%s0 + $0xd8] sm:$0xf]
  %v54 = vld [vmem:[%s0 + $0xdc] sm:$0xff]
  %v55 = vld [vmem:[%s0 + $0xe4] sm:$0xff]
  %v56 = vld [vmem:[%s0 + $0xec] sm:$0xf]
  %v57 = vld [vmem:[%s0 + $0xf0] sm:$0xff]
  %v58 = vld [vmem:[%s0 + $0xf8] sm:$0xff]
  %v59 = vld [vmem:[%s0 + $0x100] sm:$0xf]
  %v60 = vld [vmem:[%s0 + $0x104] sm:$0xff]
  %v61 = vld [vmem:[%s0 + $0x10c] sm:$0xff]
  %v62 = vld [vmem:[%s0 + $0x114] sm:$0xf]
  %v63 = vld [vmem:[%s0 + $0x118] sm:$0xff]
  %v64 = vld [vmem:[%s0 + $0x120] sm:$0xff]
  %v65 = vld [vmem:[%s0 + $0x128] sm:$0xf]
  %v66 = vld [vmem:[%s0 + $0x12c] sm:$0xff]
  %v67 = vld [vmem:[%s0 + $0x134] sm:$0xff]
  %v68 = vld [vmem:[%s0 + $0x13c] sm:$0xf]
  %v69 = vld [vmem:[%s1] sm:$0xf]
  %v70 = vld [vmem:[%s1 + $0x4] sm:$0xf]
  %v71 = vld [vmem:[%s1 + $0x8] sm:$0xf]
  %v72 = vld [vmem:[%s1 + $0xc] sm:$0xf]
  %v73 = vld [vmem:[%s1 + $0x10] sm:$0xf]
  %v74 = vld [vmem:[%s1 + $0x14] sm:$0xf]
  %v75 = vld [vmem:[%s1 + $0x18] sm:$0xf]
  %v76 = vld [vmem:[%s1 + $0x1c] sm:$0xf]
  %v77 = vld [vmem:[%s1 + $0x20] sm:$0xf]
  %v78 = vld [vmem:[%s1 + $0x24] sm:$0xf]
  %v79 = vld [vmem:[%s1 + $0x28] sm:$0xf]
  %v80 = vld [vmem:[%s1 + $0x2c] sm:$0xf]
  %v81 = vld [vmem:[%s1 + $0x30] sm:$0xf]
  %v82 = vld [vmem:[%s1 + $0x34] sm:$0xf]
  %v83 = vld [vmem:[%s1 + $0x38] sm:$0xf]
  %v84 = vld [vmem:[%s1 + $0x3c] sm:$0xf]
  %v85 = vld [vmem:[%s1 + $0x40] sm:$0xf]
  %v86 = vld [vmem:[%s1 + $0x44] sm:$0xf]
  %v87 = vld [vmem:[%s1 + $0x48] sm:$0xf]
  %v88 = vld [vmem:[%s1 + $0x4c] sm:$0xf]
  %v89 = vld [vmem:[%s1 + $0x50] sm:$0xf]
  %v90 = vld [vmem:[%s1 + $0x54] sm:$0xf]
  %v91 = vld [vmem:[%s1 + $0x58] sm:$0xf]
  %v92 = vld [vmem:[%s1 + $0x5c] sm:$0xf]
  %v93 = vld [vmem:[%s1 + $0x60] sm:$0xf]
  %v94 = vld [vmem:[%s1 + $0x64] sm:$0xf]
  %v95 = vld [vmem:[%s1 + $0x68] sm:$0xf]
  %v96 = vld [vmem:[%s1 + $0x6c] sm:$0xf]
  %v97 = vld [vmem:[%s1 + $0x70] sm:$0xf]
  %v98 = vld [vmem:[%s1 + $0x74] sm:$0xf]
  %v99 = vld [vmem:[%s1 + $0x78] sm:$0xf]
  %v100 = vld [vmem:[%s1 + $0x7c] sm:$0xf]
  %v101 = vld [vmem:[%s1 + $0x80] sm:$0xf]
  %v102 = vld [vmem:[%s1 + $0x84] sm:$0xf]
  %v103 = vld [vmem:[%s1 + $0x88] sm:$0xf]
  %v104 = vld [vmem:[%s1 + $0x8c] sm:$0xf]
  %v105 = vld [vmem:[%s1 + $0x90] sm:$0xf]
  %v106 = vld [vmem:[%s1 + $0x94] sm:$0xf]
  %v107 = vld [vmem:[%s1 + $0x98] sm:$0xf]
  %v108 = vld [vmem:[%s1 + $0x9c] sm:$0xf]
  %v109 = vld [vmem:[%s1 + $0xa0] sm:$0xf]
  %v110 = vld [vmem:[%s1 + $0xa4] sm:$0xf]
  %v111 = vld [vmem:[%s1 + $0xa8] sm:$0xf]
  %v112 = vld [vmem:[%s1 + $0xac] sm:$0xf]
  %v113 = vld [vmem:[%s1 + $0xb0] sm:$0xf]
  %v114 = vld [vmem:[%s1 + $0xb4] sm:$0xf]
  %v115 = vld [vmem:[%s1 + $0xb8] sm:$0xf]
  %v116 = vld [vmem:[%s1 + $0xbc] sm:$0xf]
  %v117 = vld [vmem:[%s1 + $0xc0] sm:$0xf]
  %v118 = vld [vmem:[%s1 + $0xc4] sm:$0xf]
  %v119 = vld [vmem:[%s1 + $0xc8] sm:$0xf]
  %v120 = vld [vmem:[%s1 + $0xcc] sm:$0xf]
  %v121 = vld [vmem:[%s1 + $0xd0] sm:$0xf]
  %v122 = vld [vmem:[%s1 + $0xd4] sm:$0xf]
  %v123 = vld [vmem:[%s1 + $0xd8] sm:$0xf]
  %v124 = vld [vmem:[%s1 + $0xdc] sm:$0xf]
  %v125 = vld [vmem:[%s1 + $0xe0] sm:$0xf]
  %v126 = vld [vmem:[%s1 + $0xe4] sm:$0xf]
  %v127 = vld [vmem:[%s1 + $0xe8] sm:$0xf]
  %v128 = vld [vmem:[%s1 + $0xec] sm:$0xf]
  %v129 = vld [vmem:[%s1 + $0xf0] sm:$0xf]
  %v130 = vld [vmem:[%s1 + $0xf4] sm:$0xf]
  %v131 = vld [vmem:[%s1 + $0xf8] sm:$0xf]
  %v132 = vld [vmem:[%s1 + $0xfc] sm:$0xf]
  %v133 = vld [vmem:[%s1 + $0x100] sm:$0xf]
  %v134 = vld [vmem:[%s1 + $0x104] sm:$0xf]
  %v135 = vld [vmem:[%s1 + $0x108] sm:$0xf]
  %v136 = vld [vmem:[%s1 + $0x10c] sm:$0xf]
  %v137 = vld [vmem:[%s1 + $0x110] sm:$0xf]
  %v138 = vld [vmem:[%s1 + $0x114] sm:$0xf]
  %v139 = vld [vmem:[%s1 + $0x118] sm:$0xf]
  %v140 = vld [vmem:[%s1 + $0x11c] sm:$0xf]
  %v189 = vunpack.c.l.b16 %v21
  %v190 = vunpack.c.h.b16 %v21
  %v191 = vunpack.c.l.b16 %v22
  %v192 = vunpack.c.h.b16 %v22
  %v193 = vunpack.c.l.b16 %v23
  %v194 = vunpack.c.l.b16 %v24
  %v195 = vunpack.c.h.b16 %v24
  %v196 = vunpack.c.l.b16 %v25
  %v197 = vunpack.c.h.b16 %v25
  %v198 = vunpack.c.l.b16 %v26
  %v199 = vunpack.c.l.b16 %v27
  %v200 = vunpack.c.h.b16 %v27
  %v201 = vunpack.c.l.b16 %v28
  %v202 = vunpack.c.h.b16 %v28
  %v203 = vunpack.c.l.b16 %v29
  %v204 = vunpack.c.l.b16 %v30
  %v205 = vunpack.c.h.b16 %v30
  %v206 = vunpack.c.l.b16 %v31
  %v207 = vunpack.c.h.b16 %v31
  %v208 = vunpack.c.l.b16 %v32
  %v209 = vunpack.c.l.b16 %v33
  %v210 = vunpack.c.h.b16 %v33
  %v211 = vunpack.c.l.b16 %v34
  %v212 = vunpack.c.h.b16 %v34
  %v213 = vunpack.c.l.b16 %v35
  %v214 = vunpack.c.l.b16 %v36
  %v215 = vunpack.c.h.b16 %v36
  %v216 = vunpack.c.l.b16 %v37
  %v217 = vunpack.c.h.b16 %v37
  %v218 = vunpack.c.l.b16 %v38
  %v219 = vunpack.c.l.b16 %v39
  %v220 = vunpack.c.h.b16 %v39
  %v221 = vunpack.c.l.b16 %v40
  %v222 = vunpack.c.h.b16 %v40
  %v223 = vunpack.c.l.b16 %v41
  %v224 = vunpack.c.l.b16 %v42
  %v225 = vunpack.c.h.b16 %v42
  %v226 = vunpack.c.l.b16 %v43
  %v227 = vunpack.c.h.b16 %v43
  %v228 = vunpack.c.l.b16 %v44
  %v229 = vunpack.c.l.b16 %v45
  %v230 = vunpack.c.h.b16 %v45
  %v231 = vunpack.c.l.b16 %v46
  %v232 = vunpack.c.h.b16 %v46
  %v233 = vunpack.c.l.b16 %v47
  %v234 = vunpack.c.l.b16 %v48
  %v235 = vunpack.c.h.b16 %v48
  %v236 = vunpack.c.l.b16 %v49
  %v237 = vunpack.c.h.b16 %v49
  %v238 = vunpack.c.l.b16 %v50
  %v239 = vunpack.c.l.b16 %v51
  %v240 = vunpack.c.h.b16 %v51
  %v241 = vunpack.c.l.b16 %v52
  %v242 = vunpack.c.h.b16 %v52
  %v243 = vunpack.c.l.b16 %v53
  %v244 = vunpack.c.l.b16 %v54
  %v245 = vunpack.c.h.b16 %v54
  %v246 = vunpack.c.l.b16 %v55
  %v247 = vunpack.c.h.b16 %v55
  %v248 = vunpack.c.l.b16 %v56
  %v249 = vunpack.c.l.b16 %v57
  %v250 = vunpack.c.h.b16 %v57
  %v251 = vunpack.c.l.b16 %v58
  %v252 = vunpack.c.h.b16 %v58
  %v253 = vunpack.c.l.b16 %v59
  %v254 = vunpack.c.l.b16 %v60
  %v255 = vunpack.c.h.b16 %v60
  %v256 = vunpack.c.l.b16 %v61
  %v257 = vunpack.c.h.b16 %v61
  %v258 = vunpack.c.l.b16 %v62
  %v259 = vunpack.c.l.b16 %v63
  %v260 = vunpack.c.h.b16 %v63
  %v261 = vunpack.c.l.b16 %v64
  %v262 = vunpack.c.h.b16 %v64
  %v263 = vunpack.c.l.b16 %v65
  %v264 = vunpack.c.l.b16 %v66
  %v265 = vunpack.c.h.b16 %v66
  %v266 = vunpack.c.l.b16 %v67
  %v267 = vunpack.c.h.b16 %v67
  %v268 = vunpack.c.l.b16 %v68
  %v269 = vpack.c.b16 %v194, %v189
  %v270 = vpack.c.b16 %v195, %v190
  %v271 = vpack.c.b16 %v196, %v191
  %v272 = vpack.c.b16 %v197, %v192
  %v273 = vpack.c.b16 %v198, %v193
  %v274 = vpack.c.b16 %v204, %v199
  %v275 = vpack.c.b16 %v205, %v200
  %v276 = vpack.c.b16 %v206, %v201
  %v277 = vpack.c.b16 %v207, %v202
  %v278 = vpack.c.b16 %v208, %v203
  %v279 = vpack.c.b16 %v214, %v209
  %v280 = vpack.c.b16 %v215, %v210
  %v281 = vpack.c.b16 %v216, %v211
  %v282 = vpack.c.b16 %v217, %v212
  %v283 = vpack.c.b16 %v218, %v213
  %v284 = vpack.c.b16 %v224, %v219
  %v285 = vpack.c.b16 %v225, %v220
  %v286 = vpack.c.b16 %v226, %v221
  %v287 = vpack.c.b16 %v227, %v222
  %v288 = vpack.c.b16 %v228, %v223
  %v289 = vpack.c.b16 %v234, %v229
  %v290 = vpack.c.b16 %v235, %v230
  %v291 = vpack.c.b16 %v236, %v231
  %v292 = vpack.c.b16 %v237, %v232
  %v293 = vpack.c.b16 %v238, %v233
  %v294 = vpack.c.b16 %v244, %v239
  %v295 = vpack.c.b16 %v245, %v240
  %v296 = vpack.c.b16 %v246, %v241
  %v297 = vpack.c.b16 %v247, %v242
  %v298 = vpack.c.b16 %v248, %v243
  %v299 = vpack.c.b16 %v254, %v249
  %v300 = vpack.c.b16 %v255, %v250
  %v301 = vpack.c.b16 %v256, %v251
  %v302 = vpack.c.b16 %v257, %v252
  %v303 = vpack.c.b16 %v258, %v253
  %v304 = vpack.c.b16 %v264, %v259
  %v305 = vpack.c.b16 %v265, %v260
  %v306 = vpack.c.b16 %v266, %v261
  %v307 = vpack.c.b16 %v267, %v262
  %v308 = vpack.c.b16 %v268, %v263
  %v413 = vunpack.c.l.b16 %v69
  %v414 = vunpack.c.l.b16 %v70
  %v415 = vunpack.c.l.b16 %v71
  %v416 = vunpack.c.l.b16 %v72
  %v417 = vunpack.c.l.b16 %v73
  %v418 = vunpack.c.l.b16 %v74
  %v419 = vunpack.c.l.b16 %v75
  %v420 = vunpack.c.l.b16 %v76
  %v421 = vunpack.c.l.b16 %v77
  %v422 = vunpack.c.l.b16 %v78
  %v423 = vunpack.c.l.b16 %v79
  %v424 = vunpack.c.l.b16 %v80
  %v425 = vunpack.c.l.b16 %v81
  %v426 = vunpack.c.l.b16 %v82
  %v427 = vunpack.c.l.b16 %v83
  %v428 = vunpack.c.l.b16 %v84
  %v429 = vunpack.c.l.b16 %v85
  %v430 = vunpack.c.l.b16 %v86
  %v431 = vunpack.c.l.b16 %v87
  %v432 = vunpack.c.l.b16 %v88
  %v433 = vunpack.c.l.b16 %v89
  %v434 = vunpack.c.l.b16 %v90
  %v435 = vunpack.c.l.b16 %v91
  %v436 = vunpack.c.l.b16 %v92
  %v437 = vunpack.c.l.b16 %v93
  %v438 = vunpack.c.l.b16 %v94
  %v439 = vunpack.c.l.b16 %v95
  %v440 = vunpack.c.l.b16 %v96
  %v441 = vunpack.c.l.b16 %v97
  %v442 = vunpack.c.l.b16 %v98
  %v443 = vunpack.c.l.b16 %v99
  %v444 = vunpack.c.l.b16 %v100
  %v445 = vunpack.c.l.b16 %v101
  %v446 = vunpack.c.l.b16 %v102
  %v447 = vunpack.c.l.b16 %v103
  %v448 = vunpack.c.l.b16 %v104
  %v449 = vunpack.c.l.b16 %v105
  %v450 = vunpack.c.l.b16 %v106
  %v451 = vunpack.c.l.b16 %v107
  %v452 = vunpack.c.l.b16 %v108
  %v453 = vunpack.c.l.b16 %v109
  %v454 = vunpack.c.l.b16 %v110
  %v455 = vunpack.c.l.b16 %v111
  %v456 = vunpack.c.l.b16 %v112
  %v457 = vunpack.c.l.b16 %v113
  %v458 = vunpack.c.l.b16 %v114
  %v459 = vunpack.c.l.b16 %v115
  %v460 = vunpack.c.l.b16 %v116
  %v461 = vunpack.c.l.b16 %v117
  %v462 = vunpack.c.l.b16 %v118
  %v463 = vunpack.c.l.b16 %v119
  %v464 = vunpack.c.l.b16 %v120
  %v465 = vunpack.c.l.b16 %v121
  %v466 = vunpack.c.l.b16 %v122
  %v467 = vunpack.c.l.b16 %v123
  %v468 = vunpack.c.l.b16 %v124
  %v469 = vunpack.c.l.b16 %v125
  %v470 = vunpack.c.l.b16 %v126
  %v471 = vunpack.c.l.b16 %v127
  %v472 = vunpack.c.l.b16 %v128
  %v473 = vunpack.c.l.b16 %v129
  %v474 = vunpack.c.l.b16 %v130
  %v475 = vunpack.c.l.b16 %v131
  %v476 = vunpack.c.l.b16 %v132
  %v477 = vunpack.c.l.b16 %v133
  %v478 = vunpack.c.l.b16 %v134
  %v479 = vunpack.c.l.b16 %v135
  %v480 = vunpack.c.l.b16 %v136
  %v481 = vunpack.c.l.b16 %v137
  %v482 = vunpack.c.l.b16 %v138
  %v483 = vunpack.c.l.b16 %v139
  %v484 = vunpack.c.l.b16 %v140
  %v485 = vpack.c.b16 %v414, %v413
  %v486 = vpack.c.b16 %v416, %v415
  %v487 = vpack.c.b16 %v418, %v417
  %v488 = vpack.c.b16 %v420, %v419
  %v489 = vpack.c.b16 %v422, %v421
  %v490 = vpack.c.b16 %v424, %v423
  %v491 = vpack.c.b16 %v426, %v425
  %v492 = vpack.c.b16 %v428, %v427
  %v493 = vpack.c.b16 %v430, %v429
  %v494 = vpack.c.b16 %v432, %v431
  %v495 = vpack.c.b16 %v434, %v433
  %v496 = vpack.c.b16 %v436, %v435
  %v497 = vpack.c.b16 %v438, %v437
  %v498 = vpack.c.b16 %v440, %v439
  %v499 = vpack.c.b16 %v442, %v441
  %v500 = vpack.c.b16 %v444, %v443
  %v501 = vpack.c.b16 %v446, %v445
  %v502 = vpack.c.b16 %v448, %v447
  %v503 = vpack.c.b16 %v450, %v449
  %v504 = vpack.c.b16 %v452, %v451
  %v505 = vpack.c.b16 %v454, %v453
  %v506 = vpack.c.b16 %v456, %v455
  %v507 = vpack.c.b16 %v458, %v457
  %v508 = vpack.c.b16 %v460, %v459
  %v509 = vpack.c.b16 %v462, %v461
  %v510 = vpack.c.b16 %v464, %v463
  %v511 = vpack.c.b16 %v466, %v465
  %v512 = vpack.c.b16 %v468, %v467
  %v513 = vpack.c.b16 %v470, %v469
  %v514 = vpack.c.b16 %v472, %v471
  %v515 = vpack.c.b16 %v474, %v473
  %v516 = vpack.c.b16 %v476, %v475
  %v517 = vpack.c.b16 %v478, %v477
  %v518 = vpack.c.b16 %v480, %v479
  %v519 = vpack.c.b16 %v482, %v481
  %v520 = vpack.c.b16 %v484, %v483
  %vm557 = vcmask 523264
  %v559 = vsel %vm557, %v273, 0
  %v562 = vsel %vm557, %v278, 0
  %v565 = vsel %vm557, %v283, 0
  %v568 = vsel %vm557, %v288, 0
  %v571 = vsel %vm557, %v293, 0
  %v574 = vsel %vm557, %v298, 0
  %v577 = vsel %vm557, %v303, 0
  %v580 = vsel %vm557, %v308, 0
  %582 = vmatprep.subr.bf16.mxu0 0
  %583 = vmatpush1.bf16.msra.mxu0 %v492
  %584 = vmatprep.subr.bf16.mxu0 0
  %585 = vmatpush1.bf16.msra.mxu0 %v491
  %586 = vmatprep.subr.bf16.mxu0 0
  %587 = vmatpush1.bf16.msra.mxu0 %v490
  %588 = vmatprep.subr.bf16.mxu0 0
  %589 = vmatpush1.bf16.msra.mxu0 %v489
  %590 = vmatprep.subr.bf16.mxu0 0
  %591 = vmatpush1.bf16.msra.mxu0 %v488
  %592 = vmatprep.subr.bf16.mxu0 0
  %593 = vmatpush1.bf16.msra.mxu0 %v487
  %594 = vmatprep.subr.bf16.mxu0 0
  %595 = vmatpush1.bf16.msra.mxu0 %v486
  %596 = vmatprep.subr.bf16.mxu0 0
  %597 = vmatpush1.bf16.msra.mxu0 %v485
  %598 = vmatprep.subr.bf16.mxu0 0
  %599 = vmatpush2.bf16.msra.mxu0 %v500
  %600 = vmatprep.subr.bf16.mxu0 0
  %601 = vmatpush2.bf16.msra.mxu0 %v499
  %602 = vmatprep.subr.bf16.mxu0 0
  %603 = vmatpush2.bf16.msra.mxu0 %v498
  %604 = vmatprep.subr.bf16.mxu0 0
  %605 = vmatpush2.bf16.msra.mxu0 %v497
  %606 = vmatprep.subr.bf16.mxu0 0
  %607 = vmatpush2.bf16.msra.mxu0 %v496
  %608 = vmatprep.subr.bf16.mxu0 0
  %609 = vmatpush2.bf16.msra.mxu0 %v495
  %610 = vmatprep.subr.bf16.mxu0 0
  %611 = vmatpush2.bf16.msra.mxu0 %v494
  %612 = vmatprep.subr.bf16.mxu0 0
  %613 = vmatpush2.bf16.msra.mxu0 %v493
  %614 = vmatprep.mubr.bf16.mxu0 %v270
  %615 = vmatmul.mubr.bf16.gmra.mxu0 %v269
  %v616 = vpop.f32.mrf.mxu0
  %v617 = vadd.f32 0.0, %v616
  %v618 = vpop.f32.mrf.mxu0
  %v619 = vpop.f32.mrf.mxu0
  %v620 = vadd.f32 0.0, %v619
  %v621 = vpop.f32.mrf.mxu0
  %622 = vmatprep.mubr.bf16.mxu0 %v275
  %623 = vmatmul.mubr.bf16.gmra.mxu0 %v274
  %v624 = vpop.f32.mrf.mxu0
  %v625 = vadd.f32 0.0, %v624
  %v626 = vpop.f32.mrf.mxu0
  %v627 = vpop.f32.mrf.mxu0
  %v628 = vadd.f32 0.0, %v627
  %v629 = vpop.f32.mrf.mxu0
  %630 = vmatprep.mubr.bf16.mxu0 %v280
  %631 = vmatmul.mubr.bf16.gmra.mxu0 %v279
  %v632 = vpop.f32.mrf.mxu0
  %v633 = vadd.f32 0.0, %v632
  %v634 = vpop.f32.mrf.mxu0
  %v635 = vpop.f32.mrf.mxu0
  %v636 = vadd.f32 0.0, %v635
  %v637 = vpop.f32.mrf.mxu0
  %638 = vmatprep.mubr.bf16.mxu0 %v285
  %639 = vmatmul.mubr.bf16.gmra.mxu0 %v284
  %v640 = vpop.f32.mrf.mxu0
  %v641 = vadd.f32 0.0, %v640
  %v642 = vpop.f32.mrf.mxu0
  %v643 = vpop.f32.mrf.mxu0
  %v644 = vadd.f32 0.0, %v643
  %v645 = vpop.f32.mrf.mxu0
  %646 = vmatprep.mubr.bf16.mxu0 %v290
  %647 = vmatmul.mubr.bf16.gmra.mxu0 %v289
  %v648 = vpop.f32.mrf.mxu0
  %v649 = vadd.f32 0.0, %v648
  %v650 = vpop.f32.mrf.mxu0
  %v651 = vpop.f32.mrf.mxu0
  %v652 = vadd.f32 0.0, %v651
  %v653 = vpop.f32.mrf.mxu0
  %654 = vmatprep.mubr.bf16.mxu0 %v295
  %655 = vmatmul.mubr.bf16.gmra.mxu0 %v294
  %v656 = vpop.f32.mrf.mxu0
  %v657 = vadd.f32 0.0, %v656
  %v658 = vpop.f32.mrf.mxu0
  %v659 = vpop.f32.mrf.mxu0
  %v660 = vadd.f32 0.0, %v659
  %v661 = vpop.f32.mrf.mxu0
  %662 = vmatprep.mubr.bf16.mxu0 %v300
  %663 = vmatmul.mubr.bf16.gmra.mxu0 %v299
  %v664 = vpop.f32.mrf.mxu0
  %v665 = vadd.f32 0.0, %v664
  %v666 = vpop.f32.mrf.mxu0
  %v667 = vpop.f32.mrf.mxu0
  %v668 = vadd.f32 0.0, %v667
  %v669 = vpop.f32.mrf.mxu0
  %670 = vmatprep.mubr.bf16.mxu0 %v305
  %671 = vmatmul.mubr.bf16.gmra.mxu0 %v304
  %v672 = vpop.f32.mrf.mxu0
  %v673 = vadd.f32 0.0, %v672
  %v674 = vpop.f32.mrf.mxu0
  %v675 = vpop.f32.mrf.mxu0
  %v676 = vadd.f32 0.0, %v675
  %v677 = vpop.f32.mrf.mxu0
  %678 = vdwg.mxu0
  %679 = vmatprep.subr.bf16.mxu0 0
  %680 = vmatpush1.bf16.msra.mxu0 %v508
  %681 = vmatprep.subr.bf16.mxu0 0
  %682 = vmatpush1.bf16.msra.mxu0 %v507
  %683 = vmatprep.subr.bf16.mxu0 0
  %684 = vmatpush1.bf16.msra.mxu0 %v506
  %685 = vmatprep.subr.bf16.mxu0 0
  %686 = vmatpush1.bf16.msra.mxu0 %v505
  %687 = vmatprep.subr.bf16.mxu0 0
  %688 = vmatpush1.bf16.msra.mxu0 %v504
  %689 = vmatprep.subr.bf16.mxu0 0
  %690 = vmatpush1.bf16.msra.mxu0 %v503
  %691 = vmatprep.subr.bf16.mxu0 0
  %692 = vmatpush1.bf16.msra.mxu0 %v502
  %693 = vmatprep.subr.bf16.mxu0 0
  %694 = vmatpush1.bf16.msra.mxu0 %v501
  %695 = vmatprep.subr.bf16.mxu0 0
  %696 = vmatpush2.bf16.msra.mxu0 %v516
  %697 = vmatprep.subr.bf16.mxu0 0
  %698 = vmatpush2.bf16.msra.mxu0 %v515
  %699 = vmatprep.subr.bf16.mxu0 0
  %700 = vmatpush2.bf16.msra.mxu0 %v514
  %701 = vmatprep.subr.bf16.mxu0 0
  %702 = vmatpush2.bf16.msra.mxu0 %v513
  %703 = vmatprep.subr.bf16.mxu0 0
  %704 = vmatpush2.bf16.msra.mxu0 %v512
  %705 = vmatprep.subr.bf16.mxu0 0
  %706 = vmatpush2.bf16.msra.mxu0 %v511
  %707 = vmatprep.subr.bf16.mxu0 0
  %708 = vmatpush2.bf16.msra.mxu0 %v510
  %709 = vmatprep.subr.bf16.mxu0 0
  %710 = vmatpush2.bf16.msra.mxu0 %v509
  %711 = vmatprep.mubr.bf16.mxu0 %v272
  %712 = vmatmul.mubr.bf16.gmra.mxu0 %v271
  %v713 = vpop.f32.mrf.mxu0
  %v714 = vadd.f32 %v617, %v713
  %v715 = vpop.f32.mrf.mxu0
  %v716 = vpop.f32.mrf.mxu0
  %v717 = vadd.f32 %v620, %v716
  %v718 = vpop.f32.mrf.mxu0
  %719 = vmatprep.mubr.bf16.mxu0 %v277
  %720 = vmatmul.mubr.bf16.gmra.mxu0 %v276
  %v721 = vpop.f32.mrf.mxu0
  %v722 = vadd.f32 %v625, %v721
  %v723 = vpop.f32.mrf.mxu0
  %v724 = vpop.f32.mrf.mxu0
  %v725 = vadd.f32 %v628, %v724
  %v726 = vpop.f32.mrf.mxu0
  %727 = vmatprep.mubr.bf16.mxu0 %v282
  %728 = vmatmul.mubr.bf16.gmra.mxu0 %v281
  %v729 = vpop.f32.mrf.mxu0
  %v730 = vadd.f32 %v633, %v729
  %v731 = vpop.f32.mrf.mxu0
  %v732 = vpop.f32.mrf.mxu0
  %v733 = vadd.f32 %v636, %v732
  %v734 = vpop.f32.mrf.mxu0
  %735 = vmatprep.mubr.bf16.mxu0 %v287
  %736 = vmatmul.mubr.bf16.gmra.mxu0 %v286
  %v737 = vpop.f32.mrf.mxu0
  %v738 = vadd.f32 %v641, %v737
  %v739 = vpop.f32.mrf.mxu0
  %v740 = vpop.f32.mrf.mxu0
  %v741 = vadd.f32 %v644, %v740
  %v742 = vpop.f32.mrf.mxu0
  %743 = vmatprep.mubr.bf16.mxu0 %v292
  %744 = vmatmul.mubr.bf16.gmra.mxu0 %v291
  %v745 = vpop.f32.mrf.mxu0
  %v746 = vadd.f32 %v649, %v745
  %v747 = vpop.f32.mrf.mxu0
  %v748 = vpop.f32.mrf.mxu0
  %v749 = vadd.f32 %v652, %v748
  %v750 = vpop.f32.mrf.mxu0
  %751 = vmatprep.mubr.bf16.mxu0 %v297
  %752 = vmatmul.mubr.bf16.gmra.mxu0 %v296
  %v753 = vpop.f32.mrf.mxu0
  %v754 = vadd.f32 %v657, %v753
  %v755 = vpop.f32.mrf.mxu0
  %v756 = vpop.f32.mrf.mxu0
  %v757 = vadd.f32 %v660, %v756
  %v758 = vpop.f32.mrf.mxu0
  %759 = vmatprep.mubr.bf16.mxu0 %v302
  %760 = vmatmul.mubr.bf16.gmra.mxu0 %v301
  %v761 = vpop.f32.mrf.mxu0
  %v762 = vadd.f32 %v665, %v761
  %v763 = vpop.f32.mrf.mxu0
  %v764 = vpop.f32.mrf.mxu0
  %v765 = vadd.f32 %v668, %v764
  %v766 = vpop.f32.mrf.mxu0
  %767 = vmatprep.mubr.bf16.mxu0 %v307
  %768 = vmatmul.mubr.bf16.gmra.mxu0 %v306
  %v769 = vpop.f32.mrf.mxu0
  %v770 = vadd.f32 %v673, %v769
  %v771 = vpop.f32.mrf.mxu0
  %v772 = vpop.f32.mrf.mxu0
  %v773 = vadd.f32 %v676, %v772
  %v774 = vpop.f32.mrf.mxu0
  %775 = vdwg.mxu0
  %776 = vmatprep.subr.bf16.mxu0 0
  %777 = vmatpush1.bf16.msra.mxu0 0
  %778 = vmatprep.subr.bf16.mxu0 0
  %779 = vmatpush1.bf16.msra.mxu0 0
  %780 = vmatprep.subr.bf16.mxu0 0
  %781 = vmatpush1.bf16.msra.mxu0 0
  %782 = vmatprep.subr.bf16.mxu0 0
  %783 = vmatpush1.bf16.msra.mxu0 0
  %784 = vmatprep.subr.bf16.mxu0 0
  %785 = vmatpush1.bf16.msra.mxu0 %v520
  %786 = vmatprep.subr.bf16.mxu0 0
  %787 = vmatpush1.bf16.msra.mxu0 %v519
  %788 = vmatprep.subr.bf16.mxu0 0
  %789 = vmatpush1.bf16.msra.mxu0 %v518
  %790 = vmatprep.subr.bf16.mxu0 0
  %791 = vmatpush1.bf16.msra.mxu0 %v517
  %792 = vmatprep.subr.bf16.mxu0 0
  %793 = vmatpush2.bf16.msra.mxu0 0
  %794 = vmatprep.subr.bf16.mxu0 0
  %795 = vmatpush2.bf16.msra.mxu0 0
  %796 = vmatprep.subr.bf16.mxu0 0
  %797 = vmatpush2.bf16.msra.mxu0 0
  %798 = vmatprep.subr.bf16.mxu0 0
  %799 = vmatpush2.bf16.msra.mxu0 0
  %800 = vmatprep.subr.bf16.mxu0 0
  %801 = vmatpush2.bf16.msra.mxu0 0
  %802 = vmatprep.subr.bf16.mxu0 0
  %803 = vmatpush2.bf16.msra.mxu0 0
  %804 = vmatprep.subr.bf16.mxu0 0
  %805 = vmatpush2.bf16.msra.mxu0 0
  %806 = vmatprep.subr.bf16.mxu0 0
  %807 = vmatpush2.bf16.msra.mxu0 0
  %808 = vmatprep.mubr.bf16.mxu0 0
  %809 = vmatmul.mubr.bf16.gmra.mxu0 %v559
  %v810 = vpop.f32.mrf.mxu0
  %v811 = vadd.f32 %v714, %v810
  %v812 = vpop.f32.mrf.mxu0
  %v813 = vpop.f32.mrf.mxu0
  %v814 = vadd.f32 %v717, %v813
  %v815 = vpop.f32.mrf.mxu0
  %816 = vmatprep.mubr.bf16.mxu0 0
  %817 = vmatmul.mubr.bf16.gmra.mxu0 %v562
  %v818 = vpop.f32.mrf.mxu0
  %v819 = vadd.f32 %v722, %v818
  %v820 = vpop.f32.mrf.mxu0
  %v821 = vpop.f32.mrf.mxu0
  %v822 = vadd.f32 %v725, %v821
  %v823 = vpop.f32.mrf.mxu0
  %824 = vmatprep.mubr.bf16.mxu0 0
  %825 = vmatmul.mubr.bf16.gmra.mxu0 %v565
  %v826 = vpop.f32.mrf.mxu0
  %v827 = vadd.f32 %v730, %v826
  %v828 = vpop.f32.mrf.mxu0
  %v829 = vpop.f32.mrf.mxu0
  %v830 = vadd.f32 %v733, %v829
  %v831 = vpop.f32.mrf.mxu0
  %832 = vmatprep.mubr.bf16.mxu0 0
  %833 = vmatmul.mubr.bf16.gmra.mxu0 %v568
  %v834 = vpop.f32.mrf.mxu0
  %v835 = vadd.f32 %v738, %v834
  %v836 = vpop.f32.mrf.mxu0
  %v837 = vpop.f32.mrf.mxu0
  %v838 = vadd.f32 %v741, %v837
  %v839 = vpop.f32.mrf.mxu0
  %840 = vmatprep.mubr.bf16.mxu0 0
  %841 = vmatmul.mubr.bf16.gmra.mxu0 %v571
  %v842 = vpop.f32.mrf.mxu0
  %v843 = vadd.f32 %v746, %v842
  %v844 = vpop.f32.mrf.mxu0
  %v845 = vpop.f32.mrf.mxu0
  %v846 = vadd.f32 %v749, %v845
  %v847 = vpop.f32.mrf.mxu0
  %848 = vmatprep.mubr.bf16.mxu0 0
  %849 = vmatmul.mubr.bf16.gmra.mxu0 %v574
  %v850 = vpop.f32.mrf.mxu0
  %v851 = vadd.f32 %v754, %v850
  %v852 = vpop.f32.mrf.mxu0
  %v853 = vpop.f32.mrf.mxu0
  %v854 = vadd.f32 %v757, %v853
  %v855 = vpop.f32.mrf.mxu0
  %856 = vmatprep.mubr.bf16.mxu0 0
  %857 = vmatmul.mubr.bf16.gmra.mxu0 %v577
  %v858 = vpop.f32.mrf.mxu0
  %v859 = vadd.f32 %v762, %v858
  %v860 = vpop.f32.mrf.mxu0
  %v861 = vpop.f32.mrf.mxu0
  %v862 = vadd.f32 %v765, %v861
  %v863 = vpop.f32.mrf.mxu0
  %864 = vmatprep.mubr.bf16.mxu0 0
  %865 = vmatmul.mubr.bf16.gmra.mxu0 %v580
  %v866 = vpop.f32.mrf.mxu0
  %v867 = vadd.f32 %v770, %v866
  %v868 = vpop.f32.mrf.mxu0
  %v869 = vpop.f32.mrf.mxu0
  %v870 = vadd.f32 %v773, %v869
  %v871 = vpop.f32.mrf.mxu0
  %872 = vdwg.mxu0
  %v873 = vld [vmem:[%s2] sm:$0x1]
  %v875 = vlaneseq
  %v876 = vshrl.u32 %v875, 7
  %v877 = vsub.s32 0, %v876
  %v878 = vrot.slane %v873, %v877
  %v880 = vmul.f32 %v811, %v878
  %v881 = vmul.f32 %v814, %v878
  %v882 = vmul.f32 %v819, %v878
  %v883 = vmul.f32 %v822, %v878
  %v884 = vmul.f32 %v827, %v878
  %v885 = vmul.f32 %v830, %v878
  %v886 = vmul.f32 %v835, %v878
  %v887 = vmul.f32 %v838, %v878
  %v888 = vmul.f32 %v843, %v878
  %v889 = vmul.f32 %v846, %v878
  %v890 = vmul.f32 %v851, %v878
  %v891 = vmul.f32 %v854, %v878
  %v892 = vmul.f32 %v859, %v878
  %v893 = vmul.f32 %v862, %v878
  %v894 = vmul.f32 %v867, %v878
  %v895 = vmul.f32 %v870, %v878
  %v896 = vld [vmem:[%s3] sm:$0x1]
  %v898 = vlaneseq
  %v899 = vshrl.u32 %v898, 7
  %v900 = vsub.s32 0, %v899
  %v901 = vrot.slane %v896, %v900
  %v903 = vadd.f32 %v880, %v901
  %v904 = vadd.f32 %v881, %v901
  %v905 = vadd.f32 %v882, %v901
  %v906 = vadd.f32 %v883, %v901
  %v907 = vadd.f32 %v884, %v901
  %v908 = vadd.f32 %v885, %v901
  %v909 = vadd.f32 %v886, %v901
  %v910 = vadd.f32 %v887, %v901
  %v911 = vadd.f32 %v888, %v901
  %v912 = vadd.f32 %v889, %v901
  %v913 = vadd.f32 %v890, %v901
  %v914 = vadd.f32 %v891, %v901
  %v915 = vadd.f32 %v892, %v901
  %v916 = vadd.f32 %v893, %v901
  %v917 = vadd.f32 %v894, %v901
  %v918 = vadd.f32 %v895, %v901
  %v919 = vld [vmem:[%s4] sm:$0x1]
  %v920 = vmax.f32 %v903, 0.0
  %v921 = vmax.f32 %v904, 0.0
  %v922 = vmax.f32 %v905, 0.0
  %v923 = vmax.f32 %v906, 0.0
  %v924 = vmax.f32 %v907, 0.0
  %v925 = vmax.f32 %v908, 0.0
  %v926 = vmax.f32 %v909, 0.0
  %v927 = vmax.f32 %v910, 0.0
  %v928 = vmax.f32 %v911, 0.0
  %v929 = vmax.f32 %v912, 0.0
  %v930 = vmax.f32 %v913, 0.0
  %v931 = vmax.f32 %v914, 0.0
  %v932 = vmax.f32 %v915, 0.0
  %v933 = vmax.f32 %v916, 0.0
  %v934 = vmax.f32 %v917, 0.0
  %v935 = vmax.f32 %v918, 0.0
  %v937 = vlaneseq
  %v938 = vshrl.u32 %v937, 7
  %v939 = vsub.s32 0, %v938
  %v940 = vrot.slane %v919, %v939
  %v942 = vmul.f32 %v940, %v920
  %v943 = vmul.f32 %v940, %v921
  %v944 = vmul.f32 %v940, %v922
  %v945 = vmul.f32 %v940, %v923
  %v946 = vmul.f32 %v940, %v924
  %v947 = vmul.f32 %v940, %v925
  %v948 = vmul.f32 %v940, %v926
  %v949 = vmul.f32 %v940, %v927
  %v950 = vmul.f32 %v940, %v928
  %v951 = vmul.f32 %v940, %v929
  %v952 = vmul.f32 %v940, %v930
  %v953 = vmul.f32 %v940, %v931
  %v954 = vmul.f32 %v940, %v932
  %v955 = vmul.f32 %v940, %v933
  %v956 = vmul.f32 %v940, %v934
  %v957 = vmul.f32 %v940, %v935
  %v958 = vsub.f32 1.0, %v919
  %v960 = vlaneseq
  %v961 = vshrl.u32 %v960, 7
  %v962 = vsub.s32 0, %v961
  %v963 = vrot.slane %v958, %v962
  %v965 = vmul.f32 %v963, %v903
  %v966 = vmul.f32 %v963, %v904
  %v967 = vmul.f32 %v963, %v905
  %v968 = vmul.f32 %v963, %v906
  %v969 = vmul.f32 %v963, %v907
  %v970 = vmul.f32 %v963, %v908
  %v971 = vmul.f32 %v963, %v909
  %v972 = vmul.f32 %v963, %v910
  %v973 = vmul.f32 %v963, %v911
  %v974 = vmul.f32 %v963, %v912
  %v975 = vmul.f32 %v963, %v913
  %v976 = vmul.f32 %v963, %v914
  %v977 = vmul.f32 %v963, %v915
  %v978 = vmul.f32 %v963, %v916
  %v979 = vmul.f32 %v963, %v917
  %v980 = vmul.f32 %v963, %v918
  %v981 = vadd.f32 %v942, %v965
  %v982 = vadd.f32 %v943, %v966
  %v983 = vadd.f32 %v944, %v967
  %v984 = vadd.f32 %v945, %v968
  %v985 = vadd.f32 %v946, %v969
  %v986 = vadd.f32 %v947, %v970
  %v987 = vadd.f32 %v948, %v971
  %v988 = vadd.f32 %v949, %v972
  %v989 = vadd.f32 %v950, %v973
  %v990 = vadd.f32 %v951, %v974
  %v991 = vadd.f32 %v952, %v975
  %v992 = vadd.f32 %v953, %v976
  %v993 = vadd.f32 %v954, %v977
  %v994 = vadd.f32 %v955, %v978
  %v995 = vadd.f32 %v956, %v979
  %v996 = vadd.f32 %v957, %v980
  %997 = vst.msk [vmem:[%s5] sm:$0xff] %vm557, %v981
  %998 = vst.msk [vmem:[%s5 + $0x8] sm:$0xff] %vm557, %v982
  %999 = vst.msk [vmem:[%s5 + $0x10] sm:$0xff] %vm557, %v983
  %1000 = vst.msk [vmem:[%s5 + $0x18] sm:$0xff] %vm557, %v984
  %1001 = vst.msk [vmem:[%s5 + $0x20] sm:$0xff] %vm557, %v985
  %1002 = vst.msk [vmem:[%s5 + $0x28] sm:$0xff] %vm557, %v986
  %1003 = vst.msk [vmem:[%s5 + $0x30] sm:$0xff] %vm557, %v987
  %1004 = vst.msk [vmem:[%s5 + $0x38] sm:$0xff] %vm557, %v988
  %1005 = vst.msk [vmem:[%s5 + $0x40] sm:$0xff] %vm557, %v989
  %1006 = vst.msk [vmem:[%s5 + $0x48] sm:$0xff] %vm557, %v990
  %1007 = vst.msk [vmem:[%s5 + $0x50] sm:$0xff] %vm557, %v991
  %1008 = vst.msk [vmem:[%s5 + $0x58] sm:$0xff] %vm557, %v992
  %1009 = vst.msk [vmem:[%s5 + $0x60] sm:$0xff] %vm557, %v993
  %1010 = vst.msk [vmem:[%s5 + $0x68] sm:$0xff] %vm557, %v994
  %1011 = vst.msk [vmem:[%s5 + $0x70] sm:$0xff] %vm557, %v995
  %1012 = vst.msk [vmem:[%s5 + $0x78] sm:$0xff] %vm557, %v996
  // Predicated region
  $region22: #{forward.6} parent=0 // pred_check
    _
  $region23: #{forward.6} parent=0 // pred_check_branch
    %1014 = sbr.rel (0) target = $region25
  $region24: #{forward.6} parent=0 // pred_region
    _
  $region25: #{forward.6} parent=0 // pred_fallthru
    _
  // Predicated region
  $region26: #{forward.6} parent=0 // pred_check
    _
  $region27: #{forward.6} parent=0 // pred_check_branch
    %1016 = sbr.rel (0) target = $region29
  $region28: #{forward.6} parent=0 // pred_region
    _
  $region29: #{forward.6} parent=0 // pred_fallthru
    _

// kernel: forward.7
$region0: #{forward.7}
  #allocation0 [shape = 'u32[]', space=smem, size = 0x4, offset = 0x4, fixed_abs, tag = 'smem constant byte address 0x4 - core index']
  #allocation1 [shape = 'u32[144,128]{1,0:T(1,128)}', space=vmem, size = 0x12000, scoped, tag = 'internal scratch']
  %s0 = inlined_call_operand.vmem [shape: bf16[128,576], index: 0, kind: input, shape index: {}]
  %s1 = inlined_call_operand.vmem [shape: bf16[576,64], index: 1, kind: input, shape index: {}]
  %s2 = inlined_call_operand.vmem [shape: f32[1,64], index: 2, kind: input, shape index: {}]
  %s3 = inlined_call_operand.vmem [shape: f32[1,64], index: 3, kind: input, shape index: {}]
  %s4 = inlined_call_operand.vmem [shape: f32[1,64], index: 4, kind: input, shape index: {}]
  %s5 = inlined_call_operand.vmem [shape: f32[128,64], index: 5, kind: input, shape index: {}]
  %s6 = inlined_call_operand.hbm [shape: f32[128,64], index: 6, kind: output, shape index: {}]
  %s7 = sld [smem:[#allocation0]]
  $region34: #{forward.7} parent=0
    _
  %s9 = ssub.s32 1, %s7
  %s10 = scalar_select 0, %s9, %s7
  $region1: #{forward.7} parent=0
    #allocation2 [shape = 'u8[65536]{0}', space=vmem, size = 0x10000, scoped, tag = 'output window, operand 0, single buffered']
    #allocation3 [shape = 's32[1]{0}', space=sflag, size = 0x4, scoped, tag = 'scoped memory for forward.7']
    %11 = vsyncpa [#allocation3], 0
    // Predicated region
    $region2: #{forward.7} parent=1 // pred_check
      _
    $region3: #{forward.7} parent=1 // pred_check_branch
      %13 = sbr.rel (0) target = $region5
    $region4: #{forward.7} parent=1 // pred_region
      _
    $region5: #{forward.7} parent=1 // pred_fallthru
      _
    // Predicated region
    $region6: #{forward.7} parent=1 // pred_check
      _
    $region7: #{forward.7} parent=1 // pred_check_branch
      %15 = sbr.rel (0) target = $region9
    $region8: #{forward.7} parent=1 // pred_region
      _
    $region9: #{forward.7} parent=1 // pred_fallthru
      _
    // Predicated region
    $region10: #{forward.7} parent=1 // pred_check
      _
    $region11: #{forward.7} parent=1 // pred_check_branch
      %17 = sbr.rel (0) target = $region13
    $region12: #{forward.7} parent=1 // pred_region
      _
    $region13: #{forward.7} parent=1 // pred_fallthru
      _
    // Predicated region
    $region14: #{forward.7} parent=1 // pred_check
      _
    $region15: #{forward.7} parent=1 // pred_check_branch
      %19 = sbr.rel (0) target = $region17
    $region16: #{forward.7} parent=1 // pred_region
      _
    $region17: #{forward.7} parent=1 // pred_fallthru
      _
    // Predicated region
    $region18: #{forward.7} parent=1 // pred_check
      _
    $region19: #{forward.7} parent=1 // pred_check_branch
      %21 = sbr.rel (0) target = $region21
    $region20: #{forward.7} parent=1 // pred_region
      _
    $region21: #{forward.7} parent=1 // pred_fallthru
      _
    // Predicated region
    $region22: #{forward.7} parent=1 // pred_check
      _
    $region23: #{forward.7} parent=1 // pred_check_branch
      %23 = sbr.rel (0) target = $region25
    $region24: #{forward.7} parent=1 // pred_region
      _
    $region25: #{forward.7} parent=1 // pred_fallthru
      _
    %v25 = vld [vmem:[%s0] sm:$0xff]
    %v26 = vld [vmem:[%s0 + $0x8] sm:$0xff]
    %v27 = vld [vmem:[%s0 + $0x10] sm:$0xf]
    %v28 = vld [vmem:[%s0 + $0x14] sm:$0xff]
    %v29 = vld [vmem:[%s0 + $0x1c] sm:$0xff]
    %v30 = vld [vmem:[%s0 + $0x24] sm:$0xf]
    %v31 = vld [vmem:[%s0 + $0x28] sm:$0xff]
    %v32 = vld [vmem:[%s0 + $0x30] sm:$0xff]
    %v33 = vld [vmem:[%s0 + $0x38] sm:$0xf]
    %v34 = vld [vmem:[%s0 + $0x3c] sm:$0xff]
    %v35 = vld [vmem:[%s0 + $0x44] sm:$0xff]
    %v36 = vld [vmem:[%s0 + $0x4c] sm:$0xf]
    %v37 = vld [vmem:[%s0 + $0x50] sm:$0xff]
    %v38 = vld [vmem:[%s0 + $0x58] sm:$0xff]
    %v39 = vld [vmem:[%s0 + $0x60] sm:$0xf]
    %v40 = vld [vmem:[%s0 + $0x64] sm:$0xff]
    %v41 = vld [vmem:[%s0 + $0x6c] sm:$0xff]
    %v42 = vld [vmem:[%s0 + $0x74] sm:$0xf]
    %v43 = vld [vmem:[%s0 + $0x78] sm:$0xff]
    %v44 = vld [vmem:[%s0 + $0x80] sm:$0xff]
    %v45 = vld [vmem:[%s0 + $0x88] sm:$0xf]
    %v46 = vld [vmem:[%s0 + $0x8c] sm:$0xff]
    %v47 = vld [vmem:[%s0 + $0x94] sm:$0xff]
    %v48 = vld [vmem:[%s0 + $0x9c] sm:$0xf]
    %v49 = vld [vmem:[%s0 + $0xa0] sm:$0xff]
    %v50 = vld [vmem:[%s0 + $0xa8] sm:$0xff]
    %v51 = vld [vmem:[%s0 + $0xb0] sm:$0xf]
    %v52 = vld [vmem:[%s0 + $0xb4] sm:$0xff]
    %v53 = vld [vmem:[%s0 + $0xbc] sm:$0xff]
    %v54 = vld [vmem:[%s0 + $0xc4] sm:$0xf]
    %v55 = vld [vmem:[%s0 + $0xc8] sm:$0xff]
    %v56 = vld [vmem:[%s0 + $0xd0] sm:$0xff]
    %v57 = vld [vmem:[%s0 + $0xd8] sm:$0xf]
    %v58 = vld [vmem:[%s0 + $0xdc] sm:$0xff]
    %v59 = vld [vmem:[%s0 + $0xe4] sm:$0xff]
    %v60 = vld [vmem:[%s0 + $0xec] sm:$0xf]
    %v61 = vld [vmem:[%s0 + $0xf0] sm:$0xff]
    %v62 = vld [vmem:[%s0 + $0xf8] sm:$0xff]
    %v63 = vld [vmem:[%s0 + $0x100] sm:$0xf]
    %v64 = vld [vmem:[%s0 + $0x104] sm:$0xff]
    %v65 = vld [vmem:[%s0 + $0x10c] sm:$0xff]
    %v66 = vld [vmem:[%s0 + $0x114] sm:$0xf]
    %v67 = vld [vmem:[%s0 + $0x118] sm:$0xff]
    %v68 = vld [vmem:[%s0 + $0x120] sm:$0xff]
    %v69 = vld [vmem:[%s0 + $0x128] sm:$0xf]
    %v70 = vld [vmem:[%s0 + $0x12c] sm:$0xff]
    %v71 = vld [vmem:[%s0 + $0x134] sm:$0xff]
    %v72 = vld [vmem:[%s0 + $0x13c] sm:$0xf]
    %v73 = vld [vmem:[%s1] sm:$0xf]
    %v74 = vld [vmem:[%s1 + $0x4] sm:$0xf]
    %v75 = vld [vmem:[%s1 + $0x8] sm:$0xf]
    %v76 = vld [vmem:[%s1 + $0xc] sm:$0xf]
    %v77 = vld [vmem:[%s1 + $0x10] sm:$0xf]
    %v78 = vld [vmem:[%s1 + $0x14] sm:$0xf]
    %v79 = vld [vmem:[%s1 + $0x18] sm:$0xf]
    %v80 = vld [vmem:[%s1 + $0x1c] sm:$0xf]
    %v81 = vld [vmem:[%s1 + $0x20] sm:$0xf]
    %v82 = vld [vmem:[%s1 + $0x24] sm:$0xf]
    %v83 = vld [vmem:[%s1 + $0x28] sm:$0xf]
    %v84 = vld [vmem:[%s1 + $0x2c] sm:$0xf]
    %v85 = vld [vmem:[%s1 + $0x30] sm:$0xf]
    %v86 = vld [vmem:[%s1 + $0x34] sm:$0xf]
    %v87 = vld [vmem:[%s1 + $0x38] sm:$0xf]
    %v88 = vld [vmem:[%s1 + $0x3c] sm:$0xf]
    %v89 = vld [vmem:[%s1 + $0x40] sm:$0xf]
    %v90 = vld [vmem:[%s1 + $0x44] sm:$0xf]
    %v91 = vld [vmem:[%s1 + $0x48] sm:$0xf]
    %v92 = vld [vmem:[%s1 + $0x4c] sm:$0xf]
    %v93 = vld [vmem:[%s1 + $0x50] sm:$0xf]
    %v94 = vld [vmem:[%s1 + $0x54] sm:$0xf]
    %v95 = vld [vmem:[%s1 + $0x58] sm:$0xf]
    %v96 = vld [vmem:[%s1 + $0x5c] sm:$0xf]
    %v97 = vld [vmem:[%s1 + $0x60] sm:$0xf]
    %v98 = vld [vmem:[%s1 + $0x64] sm:$0xf]
    %v99 = vld [vmem:[%s1 + $0x68] sm:$0xf]
    %v100 = vld [vmem:[%s1 + $0x6c] sm:$0xf]
    %v101 = vld [vmem:[%s1 + $0x70] sm:$0xf]
    %v102 = vld [vmem:[%s1 + $0x74] sm:$0xf]
    %v103 = vld [vmem:[%s1 + $0x78] sm:$0xf]
    %v104 = vld [vmem:[%s1 + $0x7c] sm:$0xf]
    %v105 = vld [vmem:[%s1 + $0x80] sm:$0xf]
    %v106 = vld [vmem:[%s1 + $0x84] sm:$0xf]
    %v107 = vld [vmem:[%s1 + $0x88] sm:$0xf]
    %v108 = vld [vmem:[%s1 + $0x8c] sm:$0xf]
    %v109 = vld [vmem:[%s1 + $0x90] sm:$0xf]
    %v110 = vld [vmem:[%s1 + $0x94] sm:$0xf]
    %v111 = vld [vmem:[%s1 + $0x98] sm:$0xf]
    %v112 = vld [vmem:[%s1 + $0x9c] sm:$0xf]
    %v113 = vld [vmem:[%s1 + $0xa0] sm:$0xf]
    %v114 = vld [vmem:[%s1 + $0xa4] sm:$0xf]
    %v115 = vld [vmem:[%s1 + $0xa8] sm:$0xf]
    %v116 = vld [vmem:[%s1 + $0xac] sm:$0xf]
    %v117 = vld [vmem:[%s1 + $0xb0] sm:$0xf]
    %v118 = vld [vmem:[%s1 + $0xb4] sm:$0xf]
    %v119 = vld [vmem:[%s1 + $0xb8] sm:$0xf]
    %v120 = vld [vmem:[%s1 + $0xbc] sm:$0xf]
    %v121 = vld [vmem:[%s1 + $0xc0] sm:$0xf]
    %v122 = vld [vmem:[%s1 + $0xc4] sm:$0xf]
    %v123 = vld [vmem:[%s1 + $0xc8] sm:$0xf]
    %v124 = vld [vmem:[%s1 + $0xcc] sm:$0xf]
    %v125 = vld [vmem:[%s1 + $0xd0] sm:$0xf]
    %v126 = vld [vmem:[%s1 + $0xd4] sm:$0xf]
    %v127 = vld [vmem:[%s1 + $0xd8] sm:$0xf]
    %v128 = vld [vmem:[%s1 + $0xdc] sm:$0xf]
    %v129 = vld [vmem:[%s1 + $0xe0] sm:$0xf]
    %v130 = vld [vmem:[%s1 + $0xe4] sm:$0xf]
    %v131 = vld [vmem:[%s1 + $0xe8] sm:$0xf]
    %v132 = vld [vmem:[%s1 + $0xec] sm:$0xf]
    %v133 = vld [vmem:[%s1 + $0xf0] sm:$0xf]
    %v134 = vld [vmem:[%s1 + $0xf4] sm:$0xf]
    %v135 = vld [vmem:[%s1 + $0xf8] sm:$0xf]
    %v136 = vld [vmem:[%s1 + $0xfc] sm:$0xf]
    %v137 = vld [vmem:[%s1 + $0x100] sm:$0xf]
    %v138 = vld [vmem:[%s1 + $0x104] sm:$0xf]
    %v139 = vld [vmem:[%s1 + $0x108] sm:$0xf]
    %v140 = vld [vmem:[%s1 + $0x10c] sm:$0xf]
    %v141 = vld [vmem:[%s1 + $0x110] sm:$0xf]
    %v142 = vld [vmem:[%s1 + $0x114] sm:$0xf]
    %v143 = vld [vmem:[%s1 + $0x118] sm:$0xf]
    %v144 = vld [vmem:[%s1 + $0x11c] sm:$0xf]
    %v193 = vunpack.c.l.b16 %v25
    %v194 = vunpack.c.h.b16 %v25
    %v195 = vunpack.c.l.b16 %v26
    %v196 = vunpack.c.h.b16 %v26
    %v197 = vunpack.c.l.b16 %v27
    %v198 = vunpack.c.l.b16 %v28
    %v199 = vunpack.c.h.b16 %v28
    %v200 = vunpack.c.l.b16 %v29
    %v201 = vunpack.c.h.b16 %v29
    %v202 = vunpack.c.l.b16 %v30
    %v203 = vunpack.c.l.b16 %v31
    %v204 = vunpack.c.h.b16 %v31
    %v205 = vunpack.c.l.b16 %v32
    %v206 = vunpack.c.h.b16 %v32
    %v207 = vunpack.c.l.b16 %v33
    %v208 = vunpack.c.l.b16 %v34
    %v209 = vunpack.c.h.b16 %v34
    %v210 = vunpack.c.l.b16 %v35
    %v211 = vunpack.c.h.b16 %v35
    %v212 = vunpack.c.l.b16 %v36
    %v213 = vunpack.c.l.b16 %v37
    %v214 = vunpack.c.h.b16 %v37
    %v215 = vunpack.c.l.b16 %v38
    %v216 = vunpack.c.h.b16 %v38
    %v217 = vunpack.c.l.b16 %v39
    %v218 = vunpack.c.l.b16 %v40
    %v219 = vunpack.c.h.b16 %v40
    %v220 = vunpack.c.l.b16 %v41
    %v221 = vunpack.c.h.b16 %v41
    %v222 = vunpack.c.l.b16 %v42
    %v223 = vunpack.c.l.b16 %v43
    %v224 = vunpack.c.h.b16 %v43
    %v225 = vunpack.c.l.b16 %v44
    %v226 = vunpack.c.h.b16 %v44
    %v227 = vunpack.c.l.b16 %v45
    %v228 = vunpack.c.l.b16 %v46
    %v229 = vunpack.c.h.b16 %v46
    %v230 = vunpack.c.l.b16 %v47
    %v231 = vunpack.c.h.b16 %v47
    %v232 = vunpack.c.l.b16 %v48
    %v233 = vunpack.c.l.b16 %v49
    %v234 = vunpack.c.h.b16 %v49
    %v235 = vunpack.c.l.b16 %v50
    %v236 = vunpack.c.h.b16 %v50
    %v237 = vunpack.c.l.b16 %v51
    %v238 = vunpack.c.l.b16 %v52
    %v239 = vunpack.c.h.b16 %v52
    %v240 = vunpack.c.l.b16 %v53
    %v241 = vunpack.c.h.b16 %v53
    %v242 = vunpack.c.l.b16 %v54
    %v243 = vunpack.c.l.b16 %v55
    %v244 = vunpack.c.h.b16 %v55
    %v245 = vunpack.c.l.b16 %v56
    %v246 = vunpack.c.h.b16 %v56
    %v247 = vunpack.c.l.b16 %v57
    %v248 = vunpack.c.l.b16 %v58
    %v249 = vunpack.c.h.b16 %v58
    %v250 = vunpack.c.l.b16 %v59
    %v251 = vunpack.c.h.b16 %v59
    %v252 = vunpack.c.l.b16 %v60
    %v253 = vunpack.c.l.b16 %v61
    %v254 = vunpack.c.h.b16 %v61
    %v255 = vunpack.c.l.b16 %v62
    %v256 = vunpack.c.h.b16 %v62
    %v257 = vunpack.c.l.b16 %v63
    %v258 = vunpack.c.l.b16 %v64
    %v259 = vunpack.c.h.b16 %v64
    %v260 = vunpack.c.l.b16 %v65
    %v261 = vunpack.c.h.b16 %v65
    %v262 = vunpack.c.l.b16 %v66
    %v263 = vunpack.c.l.b16 %v67
    %v264 = vunpack.c.h.b16 %v67
    %v265 = vunpack.c.l.b16 %v68
    %v266 = vunpack.c.h.b16 %v68
    %v267 = vunpack.c.l.b16 %v69
    %v268 = vunpack.c.l.b16 %v70
    %v269 = vunpack.c.h.b16 %v70
    %v270 = vunpack.c.l.b16 %v71
    %v271 = vunpack.c.h.b16 %v71
    %v272 = vunpack.c.l.b16 %v72
    %v273 = vpack.c.b16 %v198, %v193
    %v274 = vpack.c.b16 %v199, %v194
    %v275 = vpack.c.b16 %v200, %v195
    %v276 = vpack.c.b16 %v201, %v196
    %v277 = vpack.c.b16 %v202, %v197
    %v278 = vpack.c.b16 %v208, %v203
    %v279 = vpack.c.b16 %v209, %v204
    %v280 = vpack.c.b16 %v210, %v205
    %v281 = vpack.c.b16 %v211, %v206
    %v282 = vpack.c.b16 %v212, %v207
    %v283 = vpack.c.b16 %v218, %v213
    %v284 = vpack.c.b16 %v219, %v214
    %v285 = vpack.c.b16 %v220, %v215
    %v286 = vpack.c.b16 %v221, %v216
    %v287 = vpack.c.b16 %v222, %v217
    %v288 = vpack.c.b16 %v228, %v223
    %v289 = vpack.c.b16 %v229, %v224
    %v290 = vpack.c.b16 %v230, %v225
    %v291 = vpack.c.b16 %v231, %v226
    %v292 = vpack.c.b16 %v232, %v227
    %v293 = vpack.c.b16 %v238, %v233
    %v294 = vpack.c.b16 %v239, %v234
    %v295 = vpack.c.b16 %v240, %v235
    %v296 = vpack.c.b16 %v241, %v236
    %v297 = vpack.c.b16 %v242, %v237
    %v298 = vpack.c.b16 %v248, %v243
    %v299 = vpack.c.b16 %v249, %v244
    %v300 = vpack.c.b16 %v250, %v245
    %v301 = vpack.c.b16 %v251, %v246
    %v302 = vpack.c.b16 %v252, %v247
    %v303 = vpack.c.b16 %v258, %v253
    %v304 = vpack.c.b16 %v259, %v254
    %v305 = vpack.c.b16 %v260, %v255
    %v306 = vpack.c.b16 %v261, %v256
    %v307 = vpack.c.b16 %v262, %v257
    %v308 = vpack.c.b16 %v268, %v263
    %v309 = vpack.c.b16 %v269, %v264
    %v310 = vpack.c.b16 %v270, %v265
    %v311 = vpack.c.b16 %v271, %v266
    %v312 = vpack.c.b16 %v272, %v267
    %v417 = vunpack.c.l.b16 %v73
    %v418 = vunpack.c.l.b16 %v74
    %v419 = vunpack.c.l.b16 %v75
    %v420 = vunpack.c.l.b16 %v76
    %v421 = vunpack.c.l.b16 %v77
    %v422 = vunpack.c.l.b16 %v78
    %v423 = vunpack.c.l.b16 %v79
    %v424 = vunpack.c.l.b16 %v80
    %v425 = vunpack.c.l.b16 %v81
    %v426 = vunpack.c.l.b16 %v82
    %v427 = vunpack.c.l.b16 %v83
    %v428 = vunpack.c.l.b16 %v84
    %v429 = vunpack.c.l.b16 %v85
    %v430 = vunpack.c.l.b16 %v86
    %v431 = vunpack.c.l.b16 %v87
    %v432 = vunpack.c.l.b16 %v88
    %v433 = vunpack.c.l.b16 %v89
    %v434 = vunpack.c.l.b16 %v90
    %v435 = vunpack.c.l.b16 %v91
    %v436 = vunpack.c.l.b16 %v92
    %v437 = vunpack.c.l.b16 %v93
    %v438 = vunpack.c.l.b16 %v94
    %v439 = vunpack.c.l.b16 %v95
    %v440 = vunpack.c.l.b16 %v96
    %v441 = vunpack.c.l.b16 %v97
    %v442 = vunpack.c.l.b16 %v98
    %v443 = vunpack.c.l.b16 %v99
    %v444 = vunpack.c.l.b16 %v100
    %v445 = vunpack.c.l.b16 %v101
    %v446 = vunpack.c.l.b16 %v102
    %v447 = vunpack.c.l.b16 %v103
    %v448 = vunpack.c.l.b16 %v104
    %v449 = vunpack.c.l.b16 %v105
    %v450 = vunpack.c.l.b16 %v106
    %v451 = vunpack.c.l.b16 %v107
    %v452 = vunpack.c.l.b16 %v108
    %v453 = vunpack.c.l.b16 %v109
    %v454 = vunpack.c.l.b16 %v110
    %v455 = vunpack.c.l.b16 %v111
    %v456 = vunpack.c.l.b16 %v112
    %v457 = vunpack.c.l.b16 %v113
    %v458 = vunpack.c.l.b16 %v114
    %v459 = vunpack.c.l.b16 %v115
    %v460 = vunpack.c.l.b16 %v116
    %v461 = vunpack.c.l.b16 %v117
    %v462 = vunpack.c.l.b16 %v118
    %v463 = vunpack.c.l.b16 %v119
    %v464 = vunpack.c.l.b16 %v120
    %v465 = vunpack.c.l.b16 %v121
    %v466 = vunpack.c.l.b16 %v122
    %v467 = vunpack.c.l.b16 %v123
    %v468 = vunpack.c.l.b16 %v124
    %v469 = vunpack.c.l.b16 %v125
    %v470 = vunpack.c.l.b16 %v126
    %v471 = vunpack.c.l.b16 %v127
    %v472 = vunpack.c.l.b16 %v128
    %v473 = vunpack.c.l.b16 %v129
    %v474 = vunpack.c.l.b16 %v130
    %v475 = vunpack.c.l.b16 %v131
    %v476 = vunpack.c.l.b16 %v132
    %v477 = vunpack.c.l.b16 %v133
    %v478 = vunpack.c.l.b16 %v134
    %v479 = vunpack.c.l.b16 %v135
    %v480 = vunpack.c.l.b16 %v136
    %v481 = vunpack.c.l.b16 %v137
    %v482 = vunpack.c.l.b16 %v138
    %v483 = vunpack.c.l.b16 %v139
    %v484 = vunpack.c.l.b16 %v140
    %v485 = vunpack.c.l.b16 %v141
    %v486 = vunpack.c.l.b16 %v142
    %v487 = vunpack.c.l.b16 %v143
    %v488 = vunpack.c.l.b16 %v144
    %v489 = vpack.c.b16 %v418, %v417
    %v490 = vpack.c.b16 %v420, %v419
    %v491 = vpack.c.b16 %v422, %v421
    %v492 = vpack.c.b16 %v424, %v423
    %v493 = vpack.c.b16 %v426, %v425
    %v494 = vpack.c.b16 %v428, %v427
    %v495 = vpack.c.b16 %v430, %v429
    %v496 = vpack.c.b16 %v432, %v431
    %v497 = vpack.c.b16 %v434, %v433
    %v498 = vpack.c.b16 %v436, %v435
    %v499 = vpack.c.b16 %v438, %v437
    %v500 = vpack.c.b16 %v440, %v439
    %v501 = vpack.c.b16 %v442, %v441
    %v502 = vpack.c.b16 %v444, %v443
    %v503 = vpack.c.b16 %v446, %v445
    %v504 = vpack.c.b16 %v448, %v447
    %v505 = vpack.c.b16 %v450, %v449
    %v506 = vpack.c.b16 %v452, %v451
    %v507 = vpack.c.b16 %v454, %v453
    %v508 = vpack.c.b16 %v456, %v455
    %v509 = vpack.c.b16 %v458, %v457
    %v510 = vpack.c.b16 %v460, %v459
    %v511 = vpack.c.b16 %v462, %v461
    %v512 = vpack.c.b16 %v464, %v463
    %v513 = vpack.c.b16 %v466, %v465
    %v514 = vpack.c.b16 %v468, %v467
    %v515 = vpack.c.b16 %v470, %v469
    %v516 = vpack.c.b16 %v472, %v471
    %v517 = vpack.c.b16 %v474, %v473
    %v518 = vpack.c.b16 %v476, %v475
    %v519 = vpack.c.b16 %v478, %v477
    %v520 = vpack.c.b16 %v480, %v479
    %v521 = vpack.c.b16 %v482, %v481
    %v522 = vpack.c.b16 %v484, %v483
    %v523 = vpack.c.b16 %v486, %v485
    %v524 = vpack.c.b16 %v488, %v487
    %vm561 = vcmask 523264
    %v563 = vsel %vm561, %v277, 0
    %v566 = vsel %vm561, %v282, 0
    %v569 = vsel %vm561, %v287, 0
    %v572 = vsel %vm561, %v292, 0
    %v575 = vsel %vm561, %v297, 0
    %v578 = vsel %vm561, %v302, 0
    %v581 = vsel %vm561, %v307, 0
    %v584 = vsel %vm561, %v312, 0
    %586 = vmatprep.subr.bf16.mxu0 0
    %587 = vmatpush1.bf16.msra.mxu0 %v496
    %588 = vmatprep.subr.bf16.mxu0 0
    %589 = vmatpush1.bf16.msra.mxu0 %v495
    %590 = vmatprep.subr.bf16.mxu0 0
    %591 = vmatpush1.bf16.msra.mxu0 %v494
    %592 = vmatprep.subr.bf16.mxu0 0
    %593 = vmatpush1.bf16.msra.mxu0 %v493
    %594 = vmatprep.subr.bf16.mxu0 0
    %595 = vmatpush1.bf16.msra.mxu0 %v492
    %596 = vmatprep.subr.bf16.mxu0 0
    %597 = vmatpush1.bf16.msra.mxu0 %v491
    %598 = vmatprep.subr.bf16.mxu0 0
    %599 = vmatpush1.bf16.msra.mxu0 %v490
    %600 = vmatprep.subr.bf16.mxu0 0
    %601 = vmatpush1.bf16.msra.mxu0 %v489
    %602 = vmatprep.subr.bf16.mxu0 0
    %603 = vmatpush2.bf16.msra.mxu0 %v504
    %604 = vmatprep.subr.bf16.mxu0 0
    %605 = vmatpush2.bf16.msra.mxu0 %v503
    %606 = vmatprep.subr.bf16.mxu0 0
    %607 = vmatpush2.bf16.msra.mxu0 %v502
    %608 = vmatprep.subr.bf16.mxu0 0
    %609 = vmatpush2.bf16.msra.mxu0 %v501
    %610 = vmatprep.subr.bf16.mxu0 0
    %611 = vmatpush2.bf16.msra.mxu0 %v500
    %612 = vmatprep.subr.bf16.mxu0 0
    %613 = vmatpush2.bf16.msra.mxu0 %v499
    %614 = vmatprep.subr.bf16.mxu0 0
    %615 = vmatpush2.bf16.msra.mxu0 %v498
    %616 = vmatprep.subr.bf16.mxu0 0
    %617 = vmatpush2.bf16.msra.mxu0 %v497
    %618 = vmatprep.mubr.bf16.mxu0 %v274
    %619 = vmatmul.mubr.bf16.gmra.mxu0 %v273
    %v620 = vpop.f32.mrf.mxu0
    %v621 = vadd.f32 0.0, %v620
    %v622 = vpop.f32.mrf.mxu0
    %v623 = vpop.f32.mrf.mxu0
    %v624 = vadd.f32 0.0, %v623
    %v625 = vpop.f32.mrf.mxu0
    %626 = vmatprep.mubr.bf16.mxu0 %v279
    %627 = vmatmul.mubr.bf16.gmra.mxu0 %v278
    %v628 = vpop.f32.mrf.mxu0
    %v629 = vadd.f32 0.0, %v628
    %v630 = vpop.f32.mrf.mxu0
    %v631 = vpop.f32.mrf.mxu0
    %v632 = vadd.f32 0.0, %v631
    %v633 = vpop.f32.mrf.mxu0
    %634 = vmatprep.mubr.bf16.mxu0 %v284
    %635 = vmatmul.mubr.bf16.gmra.mxu0 %v283
    %v636 = vpop.f32.mrf.mxu0
    %v637 = vadd.f32 0.0, %v636
    %v638 = vpop.f32.mrf.mxu0
    %v639 = vpop.f32.mrf.mxu0
    %v640 = vadd.f32 0.0, %v639
    %v641 = vpop.f32.mrf.mxu0
    %642 = vmatprep.mubr.bf16.mxu0 %v289
    %643 = vmatmul.mubr.bf16.gmra.mxu0 %v288
    %v644 = vpop.f32.mrf.mxu0
    %v645 = vadd.f32 0.0, %v644
    %v646 = vpop.f32.mrf.mxu0
    %v647 = vpop.f32.mrf.mxu0
    %v648 = vadd.f32 0.0, %v647
    %v649 = vpop.f32.mrf.mxu0
    %650 = vmatprep.mubr.bf16.mxu0 %v294
    %651 = vmatmul.mubr.bf16.gmra.mxu0 %v293
    %v652 = vpop.f32.mrf.mxu0
    %v653 = vadd.f32 0.0, %v652
    %v654 = vpop.f32.mrf.mxu0
    %v655 = vpop.f32.mrf.mxu0
    %v656 = vadd.f32 0.0, %v655
    %v657 = vpop.f32.mrf.mxu0
    %658 = vmatprep.mubr.bf16.mxu0 %v299
    %659 = vmatmul.mubr.bf16.gmra.mxu0 %v298
    %v660 = vpop.f32.mrf.mxu0
    %v661 = vadd.f32 0.0, %v660
    %v662 = vpop.f32.mrf.mxu0
    %v663 = vpop.f32.mrf.mxu0
    %v664 = vadd.f32 0.0, %v663
    %v665 = vpop.f32.mrf.mxu0
    %666 = vmatprep.mubr.bf16.mxu0 %v304
    %667 = vmatmul.mubr.bf16.gmra.mxu0 %v303
    %v668 = vpop.f32.mrf.mxu0
    %v669 = vadd.f32 0.0, %v668
    %v670 = vpop.f32.mrf.mxu0
    %v671 = vpop.f32.mrf.mxu0
    %v672 = vadd.f32 0.0, %v671
    %v673 = vpop.f32.mrf.mxu0
    %674 = vmatprep.mubr.bf16.mxu0 %v309
    %675 = vmatmul.mubr.bf16.gmra.mxu0 %v308
    %v676 = vpop.f32.mrf.mxu0
    %v677 = vadd.f32 0.0, %v676
    %v678 = vpop.f32.mrf.mxu0
    %v679 = vpop.f32.mrf.mxu0
    %v680 = vadd.f32 0.0, %v679
    %v681 = vpop.f32.mrf.mxu0
    %682 = vdwg.mxu0
    %683 = vmatprep.subr.bf16.mxu0 0
    %684 = vmatpush1.bf16.msra.mxu0 %v512
    %685 = vmatprep.subr.bf16.mxu0 0
    %686 = vmatpush1.bf16.msra.mxu0 %v511
    %687 = vmatprep.subr.bf16.mxu0 0
    %688 = vmatpush1.bf16.msra.mxu0 %v510
    %689 = vmatprep.subr.bf16.mxu0 0
    %690 = vmatpush1.bf16.msra.mxu0 %v509
    %691 = vmatprep.subr.bf16.mxu0 0
    %692 = vmatpush1.bf16.msra.mxu0 %v508
    %693 = vmatprep.subr.bf16.mxu0 0
    %694 = vmatpush1.bf16.msra.mxu0 %v507
    %695 = vmatprep.subr.bf16.mxu0 0
    %696 = vmatpush1.bf16.msra.mxu0 %v506
    %697 = vmatprep.subr.bf16.mxu0 0
    %698 = vmatpush1.bf16.msra.mxu0 %v505
    %699 = vmatprep.subr.bf16.mxu0 0
    %700 = vmatpush2.bf16.msra.mxu0 %v520
    %701 = vmatprep.subr.bf16.mxu0 0
    %702 = vmatpush2.bf16.msra.mxu0 %v519
    %703 = vmatprep.subr.bf16.mxu0 0
    %704 = vmatpush2.bf16.msra.mxu0 %v518
    %705 = vmatprep.subr.bf16.mxu0 0
    %706 = vmatpush2.bf16.msra.mxu0 %v517
    %707 = vmatprep.subr.bf16.mxu0 0
    %708 = vmatpush2.bf16.msra.mxu0 %v516
    %709 = vmatprep.subr.bf16.mxu0 0
    %710 = vmatpush2.bf16.msra.mxu0 %v515
    %711 = vmatprep.subr.bf16.mxu0 0
    %712 = vmatpush2.bf16.msra.mxu0 %v514
    %713 = vmatprep.subr.bf16.mxu0 0
    %714 = vmatpush2.bf16.msra.mxu0 %v513
    %715 = vmatprep.mubr.bf16.mxu0 %v276
    %716 = vmatmul.mubr.bf16.gmra.mxu0 %v275
    %v717 = vpop.f32.mrf.mxu0
    %v718 = vadd.f32 %v621, %v717
    %v719 = vpop.f32.mrf.mxu0
    %v720 = vpop.f32.mrf.mxu0
    %v721 = vadd.f32 %v624, %v720
    %v722 = vpop.f32.mrf.mxu0
    %723 = vmatprep.mubr.bf16.mxu0 %v281
    %724 = vmatmul.mubr.bf16.gmra.mxu0 %v280
    %v725 = vpop.f32.mrf.mxu0
    %v726 = vadd.f32 %v629, %v725
    %v727 = vpop.f32.mrf.mxu0
    %v728 = vpop.f32.mrf.mxu0
    %v729 = vadd.f32 %v632, %v728
    %v730 = vpop.f32.mrf.mxu0
    %731 = vmatprep.mubr.bf16.mxu0 %v286
    %732 = vmatmul.mubr.bf16.gmra.mxu0 %v285
    %v733 = vpop.f32.mrf.mxu0
    %v734 = vadd.f32 %v637, %v733
    %v735 = vpop.f32.mrf.mxu0
    %v736 = vpop.f32.mrf.mxu0
    %v737 = vadd.f32 %v640, %v736
    %v738 = vpop.f32.mrf.mxu0
    %739 = vmatprep.mubr.bf16.mxu0 %v291
    %740 = vmatmul.mubr.bf16.gmra.mxu0 %v290
    %v741 = vpop.f32.mrf.mxu0
    %v742 = vadd.f32 %v645, %v741
    %v743 = vpop.f32.mrf.mxu0
    %v744 = vpop.f32.mrf.mxu0
    %v745 = vadd.f32 %v648, %v744
    %v746 = vpop.f32.mrf.mxu0
    %747 = vmatprep.mubr.bf16.mxu0 %v296
    %748 = vmatmul.mubr.bf16.gmra.mxu0 %v295
    %v749 = vpop.f32.mrf.mxu0
    %v750 = vadd.f32 %v653, %v749
    %v751 = vpop.f32.mrf.mxu0
    %v752 = vpop.f32.mrf.mxu0
    %v753 = vadd.f32 %v656, %v752
    %v754 = vpop.f32.mrf.mxu0
    %755 = vmatprep.mubr.bf16.mxu0 %v301
    %756 = vmatmul.mubr.bf16.gmra.mxu0 %v300
    %v757 = vpop.f32.mrf.mxu0
    %v758 = vadd.f32 %v661, %v757
    %v759 = vpop.f32.mrf.mxu0
    %v760 = vpop.f32.mrf.mxu0
    %v761 = vadd.f32 %v664, %v760
    %v762 = vpop.f32.mrf.mxu0
    %763 = vmatprep.mubr.bf16.mxu0 %v306
    %764 = vmatmul.mubr.bf16.gmra.mxu0 %v305
    %v765 = vpop.f32.mrf.mxu0
    %v766 = vadd.f32 %v669, %v765
    %v767 = vpop.f32.mrf.mxu0
    %v768 = vpop.f32.mrf.mxu0
    %v769 = vadd.f32 %v672, %v768
    %v770 = vpop.f32.mrf.mxu0
    %771 = vmatprep.mubr.bf16.mxu0 %v311
    %772 = vmatmul.mubr.bf16.gmra.mxu0 %v310
    %v773 = vpop.f32.mrf.mxu0
    %v774 = vadd.f32 %v677, %v773
    %v775 = vpop.f32.mrf.mxu0
    %v776 = vpop.f32.mrf.mxu0
    %v777 = vadd.f32 %v680, %v776
    %v778 = vpop.f32.mrf.mxu0
    %779 = vdwg.mxu0
    %780 = vmatprep.subr.bf16.mxu0 0
    %781 = vmatpush1.bf16.msra.mxu0 0
    %782 = vmatprep.subr.bf16.mxu0 0
    %783 = vmatpush1.bf16.msra.mxu0 0
    %784 = vmatprep.subr.bf16.mxu0 0
    %785 = vmatpush1.bf16.msra.mxu0 0
    %786 = vmatprep.subr.bf16.mxu0 0
    %787 = vmatpush1.bf16.msra.mxu0 0
    %788 = vmatprep.subr.bf16.mxu0 0
    %789 = vmatpush1.bf16.msra.mxu0 %v524
    %790 = vmatprep.subr.bf16.mxu0 0
    %791 = vmatpush1.bf16.msra.mxu0 %v523
    %792 = vmatprep.subr.bf16.mxu0 0
    %793 = vmatpush1.bf16.msra.mxu0 %v522
    %794 = vmatprep.subr.bf16.mxu0 0
    %795 = vmatpush1.bf16.msra.mxu0 %v521
    %796 = vmatprep.subr.bf16.mxu0 0
    %797 = vmatpush2.bf16.msra.mxu0 0
    %798 = vmatprep.subr.bf16.mxu0 0
    %799 = vmatpush2.bf16.msra.mxu0 0
    %800 = vmatprep.subr.bf16.mxu0 0
    %801 = vmatpush2.bf16.msra.mxu0 0
    %802 = vmatprep.subr.bf16.mxu0 0
    %803 = vmatpush2.bf16.msra.mxu0 0
    %804 = vmatprep.subr.bf16.mxu0 0
    %805 = vmatpush2.bf16.msra.mxu0 0
    %806 = vmatprep.subr.bf16.mxu0 0
    %807 = vmatpush2.bf16.msra.mxu0 0
    %808 = vmatprep.subr.bf16.mxu0 0
    %809 = vmatpush2.bf16.msra.mxu0 0
    %810 = vmatprep.subr.bf16.mxu0 0
    %811 = vmatpush2.bf16.msra.mxu0 0
    %812 = vmatprep.mubr.bf16.mxu0 0
    %813 = vmatmul.mubr.bf16.gmra.mxu0 %v563
    %v814 = vpop.f32.mrf.mxu0
    %v815 = vadd.f32 %v718, %v814
    %v816 = vpop.f32.mrf.mxu0
    %v817 = vpop.f32.mrf.mxu0
    %v818 = vadd.f32 %v721, %v817
    %v819 = vpop.f32.mrf.mxu0
    %820 = vmatprep.mubr.bf16.mxu0 0
    %821 = vmatmul.mubr.bf16.gmra.mxu0 %v566
    %v822 = vpop.f32.mrf.mxu0
    %v823 = vadd.f32 %v726, %v822
    %v824 = vpop.f32.mrf.mxu0
    %v825 = vpop.f32.mrf.mxu0
    %v826 = vadd.f32 %v729, %v825
    %v827 = vpop.f32.mrf.mxu0
    %828 = vmatprep.mubr.bf16.mxu0 0
    %829 = vmatmul.mubr.bf16.gmra.mxu0 %v569
    %v830 = vpop.f32.mrf.mxu0
    %v831 = vadd.f32 %v734, %v830
    %v832 = vpop.f32.mrf.mxu0
    %v833 = vpop.f32.mrf.mxu0
    %v834 = vadd.f32 %v737, %v833
    %v835 = vpop.f32.mrf.mxu0
    %836 = vmatprep.mubr.bf16.mxu0 0
    %837 = vmatmul.mubr.bf16.gmra.mxu0 %v572
    %v838 = vpop.f32.mrf.mxu0
    %v839 = vadd.f32 %v742, %v838
    %v840 = vpop.f32.mrf.mxu0
    %v841 = vpop.f32.mrf.mxu0
    %v842 = vadd.f32 %v745, %v841
    %v843 = vpop.f32.mrf.mxu0
    %844 = vmatprep.mubr.bf16.mxu0 0
    %845 = vmatmul.mubr.bf16.gmra.mxu0 %v575
    %v846 = vpop.f32.mrf.mxu0
    %v847 = vadd.f32 %v750, %v846
    %v848 = vpop.f32.mrf.mxu0
    %v849 = vpop.f32.mrf.mxu0
    %v850 = vadd.f32 %v753, %v849
    %v851 = vpop.f32.mrf.mxu0
    %852 = vmatprep.mubr.bf16.mxu0 0
    %853 = vmatmul.mubr.bf16.gmra.mxu0 %v578
    %v854 = vpop.f32.mrf.mxu0
    %v855 = vadd.f32 %v758, %v854
    %v856 = vpop.f32.mrf.mxu0
    %v857 = vpop.f32.mrf.mxu0
    %v858 = vadd.f32 %v761, %v857
    %v859 = vpop.f32.mrf.mxu0
    %860 = vmatprep.mubr.bf16.mxu0 0
    %861 = vmatmul.mubr.bf16.gmra.mxu0 %v581
    %v862 = vpop.f32.mrf.mxu0
    %v863 = vadd.f32 %v766, %v862
    %v864 = vpop.f32.mrf.mxu0
    %v865 = vpop.f32.mrf.mxu0
    %v866 = vadd.f32 %v769, %v865
    %v867 = vpop.f32.mrf.mxu0
    %868 = vmatprep.mubr.bf16.mxu0 0
    %869 = vmatmul.mubr.bf16.gmra.mxu0 %v584
    %v870 = vpop.f32.mrf.mxu0
    %v871 = vadd.f32 %v774, %v870
    %v872 = vpop.f32.mrf.mxu0
    %v873 = vpop.f32.mrf.mxu0
    %v874 = vadd.f32 %v777, %v873
    %v875 = vpop.f32.mrf.mxu0
    %876 = vdwg.mxu0
    %v877 = vld [vmem:[%s2] sm:$0x1]
    %v879 = vlaneseq
    %v880 = vshrl.u32 %v879, 7
    %v881 = vsub.s32 0, %v880
    %v882 = vrot.slane %v877, %v881
    %v884 = vmul.f32 %v815, %v882
    %v885 = vmul.f32 %v818, %v882
    %v886 = vmul.f32 %v823, %v882
    %v887 = vmul.f32 %v826, %v882
    %v888 = vmul.f32 %v831, %v882
    %v889 = vmul.f32 %v834, %v882
    %v890 = vmul.f32 %v839, %v882
    %v891 = vmul.f32 %v842, %v882
    %v892 = vmul.f32 %v847, %v882
    %v893 = vmul.f32 %v850, %v882
    %v894 = vmul.f32 %v855, %v882
    %v895 = vmul.f32 %v858, %v882
    %v896 = vmul.f32 %v863, %v882
    %v897 = vmul.f32 %v866, %v882
    %v898 = vmul.f32 %v871, %v882
    %v899 = vmul.f32 %v874, %v882
    %v900 = vld [vmem:[%s3] sm:$0x1]
    %v902 = vlaneseq
    %v903 = vshrl.u32 %v902, 7
    %v904 = vsub.s32 0, %v903
    %v905 = vrot.slane %v900, %v904
    %v907 = vadd.f32 %v884, %v905
    %v908 = vadd.f32 %v885, %v905
    %v909 = vadd.f32 %v886, %v905
    %v910 = vadd.f32 %v887, %v905
    %v911 = vadd.f32 %v888, %v905
    %v912 = vadd.f32 %v889, %v905
    %v913 = vadd.f32 %v890, %v905
    %v914 = vadd.f32 %v891, %v905
    %v915 = vadd.f32 %v892, %v905
    %v916 = vadd.f32 %v893, %v905
    %v917 = vadd.f32 %v894, %v905
    %v918 = vadd.f32 %v895, %v905
    %v919 = vadd.f32 %v896, %v905
    %v920 = vadd.f32 %v897, %v905
    %v921 = vadd.f32 %v898, %v905
    %v922 = vadd.f32 %v899, %v905
    %v923 = vld [vmem:[%s5] sm:$0xff]
    %v924 = vld [vmem:[%s5 + $0x8] sm:$0xff]
    %v925 = vld [vmem:[%s5 + $0x10] sm:$0xff]
    %v926 = vld [vmem:[%s5 + $0x18] sm:$0xff]
    %v927 = vld [vmem:[%s5 + $0x20] sm:$0xff]
    %v928 = vld [vmem:[%s5 + $0x28] sm:$0xff]
    %v929 = vld [vmem:[%s5 + $0x30] sm:$0xff]
    %v930 = vld [vmem:[%s5 + $0x38] sm:$0xff]
    %v931 = vld [vmem:[%s5 + $0x40] sm:$0xff]
    %v932 = vld [vmem:[%s5 + $0x48] sm:$0xff]
    %v933 = vld [vmem:[%s5 + $0x50] sm:$0xff]
    %v934 = vld [vmem:[%s5 + $0x58] sm:$0xff]
    %v935 = vld [vmem:[%s5 + $0x60] sm:$0xff]
    %v936 = vld [vmem:[%s5 + $0x68] sm:$0xff]
    %v937 = vld [vmem:[%s5 + $0x70] sm:$0xff]
    %v938 = vld [vmem:[%s5 + $0x78] sm:$0xff]
    %v939 = vadd.f32 %v907, %v923
    %v940 = vadd.f32 %v908, %v924
    %v941 = vadd.f32 %v909, %v925
    %v942 = vadd.f32 %v910, %v926
    %v943 = vadd.f32 %v911, %v927
    %v944 = vadd.f32 %v912, %v928
    %v945 = vadd.f32 %v913, %v929
    %v946 = vadd.f32 %v914, %v930
    %v947 = vadd.f32 %v915, %v931
    %v948 = vadd.f32 %v916, %v932
    %v949 = vadd.f32 %v917, %v933
    %v950 = vadd.f32 %v918, %v934
    %v951 = vadd.f32 %v919, %v935
    %v952 = vadd.f32 %v920, %v936
    %v953 = vadd.f32 %v921, %v937
    %v954 = vadd.f32 %v922, %v938
    %v955 = vld [vmem:[%s4] sm:$0x1]
    %v956 = vmax.f32 %v939, 0.0
    %v957 = vmax.f32 %v940, 0.0
    %v958 = vmax.f32 %v941, 0.0
    %v959 = vmax.f32 %v942, 0.0
    %v960 = vmax.f32 %v943, 0.0
    %v961 = vmax.f32 %v944, 0.0
    %v962 = vmax.f32 %v945, 0.0
    %v963 = vmax.f32 %v946, 0.0
    %v964 = vmax.f32 %v947, 0.0
    %v965 = vmax.f32 %v948, 0.0
    %v966 = vmax.f32 %v949, 0.0
    %v967 = vmax.f32 %v950, 0.0
    %v968 = vmax.f32 %v951, 0.0
    %v969 = vmax.f32 %v952, 0.0
    %v970 = vmax.f32 %v953, 0.0
    %v971 = vmax.f32 %v954, 0.0
    %v973 = vlaneseq
    %v974 = vshrl.u32 %v973, 7
    %v975 = vsub.s32 0, %v974
    %v976 = vrot.slane %v955, %v975
    %v978 = vmul.f32 %v976, %v956
    %v979 = vmul.f32 %v976, %v957
    %v980 = vmul.f32 %v976, %v958
    %v981 = vmul.f32 %v976, %v959
    %v982 = vmul.f32 %v976, %v960
    %v983 = vmul.f32 %v976, %v961
    %v984 = vmul.f32 %v976, %v962
    %v985 = vmul.f32 %v976, %v963
    %v986 = vmul.f32 %v976, %v964
    %v987 = vmul.f32 %v976, %v965
    %v988 = vmul.f32 %v976, %v966
    %v989 = vmul.f32 %v976, %v967
    %v990 = vmul.f32 %v976, %v968
    %v991 = vmul.f32 %v976, %v969
    %v992 = vmul.f32 %v976, %v970
    %v993 = vmul.f32 %v976, %v971
    %v994 = vsub.f32 1.0, %v955
    %v996 = vlaneseq
    %v997 = vshrl.u32 %v996, 7
    %v998 = vsub.s32 0, %v997
    %v999 = vrot.slane %v994, %v998
    %v1001 = vmul.f32 %v999, %v939
    %v1002 = vmul.f32 %v999, %v940
    %v1003 = vmul.f32 %v999, %v941
    %v1004 = vmul.f32 %v999, %v942
    %v1005 = vmul.f32 %v999, %v943
    %v1006 = vmul.f32 %v999, %v944
    %v1007 = vmul.f32 %v999, %v945
    %v1008 = vmul.f32 %v999, %v946
    %v1009 = vmul.f32 %v999, %v947
    %v1010 = vmul.f32 %v999, %v948
    %v1011 = vmul.f32 %v999, %v949
    %v1012 = vmul.f32 %v999, %v950
    %v1013 = vmul.f32 %v999, %v951
    %v1014 = vmul.f32 %v999, %v952
    %v1015 = vmul.f32 %v999, %v953
    %v1016 = vmul.f32 %v999, %v954
    %v1017 = vadd.f32 %v978, %v1001
    %v1018 = vadd.f32 %v979, %v1002
    %v1019 = vadd.f32 %v980, %v1003
    %v1020 = vadd.f32 %v981, %v1004
    %v1021 = vadd.f32 %v982, %v1005
    %v1022 = vadd.f32 %v983, %v1006
    %v1023 = vadd.f32 %v984, %v1007
    %v1024 = vadd.f32 %v985, %v1008
    %v1025 = vadd.f32 %v986, %v1009
    %v1026 = vadd.f32 %v987, %v1010
    %v1027 = vadd.f32 %v988, %v1011
    %v1028 = vadd.f32 %v989, %v1012
    %v1029 = vadd.f32 %v990, %v1013
    %v1030 = vadd.f32 %v991, %v1014
    %v1031 = vadd.f32 %v992, %v1015
    %v1032 = vadd.f32 %v993, %v1016
    %1033 = vst.msk [vmem:[#allocation2] sm:$0xff] %vm561, %v1017
    %1034 = vst.msk [vmem:[#allocation2 + $0x8] sm:$0xff] %vm561, %v1018
    %1035 = vst.msk [vmem:[#allocation2 + $0x10] sm:$0xff] %vm561, %v1019
    %1036 = vst.msk [vmem:[#allocation2 + $0x18] sm:$0xff] %vm561, %v1020
    %1037 = vst.msk [vmem:[#allocation2 + $0x20] sm:$0xff] %vm561, %v1021
    %1038 = vst.msk [vmem:[#allocation2 + $0x28] sm:$0xff] %vm561, %v1022
    %1039 = vst.msk [vmem:[#allocation2 + $0x30] sm:$0xff] %vm561, %v1023
    %1040 = vst.msk [vmem:[#allocation2 + $0x38] sm:$0xff] %vm561, %v1024
    %1041 = vst.msk [vmem:[#allocation2 + $0x40] sm:$0xff] %vm561, %v1025
    %1042 = vst.msk [vmem:[#allocation2 + $0x48] sm:$0xff] %vm561, %v1026
    %1043 = vst.msk [vmem:[#allocation2 + $0x50] sm:$0xff] %vm561, %v1027
    %1044 = vst.msk [vmem:[#allocation2 + $0x58] sm:$0xff] %vm561, %v1028
    %1045 = vst.msk [vmem:[#allocation2 + $0x60] sm:$0xff] %vm561, %v1029
    %1046 = vst.msk [vmem:[#allocation2 + $0x68] sm:$0xff] %vm561, %v1030
    %1047 = vst.msk [vmem:[#allocation2 + $0x70] sm:$0xff] %vm561, %v1031
    %1048 = vst.msk [vmem:[#allocation2 + $0x78] sm:$0xff] %vm561, %v1032
    // Predicated region
    $region26: #{forward.7} parent=1 // pred_check
      _
    $region27: #{forward.7} parent=1 // pred_check_branch
      %1050 = sbr.rel (0) target = $region29
    $region28: #{forward.7} parent=1 // pred_region
      %s1052 = ssub.s32 2048, 2048
      %1053 = vsyncadd [#allocation3], %s1052
      %s1054 = sshll.u32 [#allocation2], 4
      %s1055 = int_to_ptr.vmem [resolvable:$true] %s1054
      %1060 = dma.vmem_to_hbm [thread:$0]  %s1055, 2048, %s6, [#allocation3], 128, 128, 8
    $region29: #{forward.7} parent=1 // pred_fallthru
      _
    // Predicated region
    $region30: #{forward.7} parent=1 // pred_check
      _
    $region31: #{forward.7} parent=1 // pred_check_branch
      %1062 = sbr.rel (0) target = $region33
    $region32: #{forward.7} parent=1 // pred_region
      %1063 = dma.done [#allocation3], 2048
    $region33: #{forward.7} parent=1 // pred_fallthru
      _
    %1064 = vsyncpa [#allocation3], 1

</llo_original>
